<compile_context>
chip_gen: v7x
topology: tpu7x:2x2x1
jax: 0.10.0
libtpu: 0.0.40
codegen_flags: <defaults>
</compile_context>

<pallas_src>
import functools

import jax
import jax.numpy as jnp
from jax import lax
from jax.experimental import pallas as pl
from jax.experimental.pallas import tpu as pltpu


def _round_up(x, m):
    return (x + m - 1) // m * m


# Output pixel (2i+ph, 2j+pw) of Unpool->Conv5x5(pad=2) only receives taps with
# kh%2==ph and kw%2==pw; the contributing input pixel is (i+dh, j+dw) with
# dh=(ph+kh-2)//2, dw=(pw+kw-2)//2 (dh,dw in {-1,0,1}).
def _parity_taps(ph, pw):
    taps = []
    for kh in range(5):
        if (kh + ph) % 2:
            continue
        for kw in range(5):
            if (kw + pw) % 2:
                continue
            dh = (ph + kh - 2) // 2
            dw = (pw + kw - 2) // 2
            taps.append((kh, kw, dh, dw))
    return taps


_PARITIES = [(0, 0), (0, 1), (1, 0), (1, 1)]          # parity index p = 2*ph + pw


def _vmem_capacity_bytes():
    try:
        info = pltpu.get_tpu_info()
        cap = getattr(info, "vmem_capacity_bytes", None)
        if cap:
            return int(cap)
    except Exception:
        pass
    return 64 * 1024 * 1024   # conservative fallback (v7x per-TC physical VMEM)


# ---------------- Pallas kernel ----------------

def _conv_stats_kernel(x_ref, w_ref, mask_ref, y_ref, st_ref,
                       *, taps_per_parity, wp, l_pad):
    """One (image n, cout-tile c, parity p) grid step.

    x_ref    : (1, Cin, P_pad)       bf16  padded input, (Hp*Wp) spatial flattened on lanes
    w_ref    : (1, 9, TCout, Cin)    bf16  this parity's tap weights (zero-padded tap slots)
    mask_ref : (1, L_pad)            f32   1.0 on valid output positions, 0.0 elsewhere
    y_ref    : (1, 1, TCout, L_pad)  bf16  conv output block (channels on sublanes)
    st_ref   : (1, 1, TCout, 2)      f32   [:,0]=partial sum, [:,1]=partial sum of squares
    """
    p_id = pl.program_id(2)
    mask = mask_ref[...]                                   # (1, L_pad)

    for par in range(4):
        @pl.when(p_id == par)
        def _(par=par):
            acc = None
            # TODO(synk): when Cin underfills the MXU contraction width, stack the
            # taps along K into a VMEM slab and do one matmul per parity.
            for t, (kh, kw, dh, dw) in enumerate(taps_per_parity[par]):
                base = (dh + 1) * wp + (dw + 1)            # static element offset
                w_t = w_ref[0, t]                          # (TCout, Cin) bf16
                x_t = x_ref[0, :, pl.ds(base, l_pad)]      # (Cin, L_pad) bf16
                d = jnp.dot(w_t, x_t, preferred_element_type=jnp.float32)
                acc = d if acc is None else acc + d
            # Conv output stored unmasked in bf16: garbage columns are sliced away
            # by the epilogue; only the BN stats need the valid-position mask.
            y_ref[0, 0] = acc.astype(y_ref.dtype)
            m = acc * mask
            st_ref[0, 0, :, 0:1] = jnp.sum(m, axis=-1, keepdims=True)
            st_ref[0, 0, :, 1:2] = jnp.sum(m * acc, axis=-1, keepdims=True)


# ---------------- wrapper ----------------

@jax.jit
def upconv_forward(x_nchw, w_oihw, gamma, beta, eps=1e-5):
    N, Cin, H, W = x_nchw.shape
    Cout = w_oihw.shape[0]
    assert w_oihw.shape == (Cout, Cin, 5, 5)
    H2, W2 = 2 * H, 2 * W

    Hp, Wp = H + 2, W + 2                 # original input padded by 1 (per-parity halo)
    l_valid = H * Wp                      # flattened per-parity output rows (incl. pad cols)
    L_pad = _round_up(l_valid, 128)       # lane-dense output last dim (unmasked vst)
    P_pad = _round_up(2 * Wp + 2 + L_pad, 128)   # covers the largest static slice end

    # ---- generation-aware tiling / VMEM budget ----
    vmem_cap = _vmem_capacity_bytes()
    vmem_limit = max(32 * 1024 * 1024, min(vmem_cap * 3 // 4, 100 * 1024 * 1024))
    block_budget = vmem_limit * 3 // 4    # headroom for compiler-internal scratch

    def _fits(ct):
        need = (2 * Cin * P_pad * 2            # x slab (bf16, double-buffered)
                + 2 * 9 * ct * Cin * 2         # per-parity weight block
                + 2 * L_pad * 4                # mask
                + 2 * ct * L_pad * 2           # y block (bf16)
                + 2 * ct * 2 * 4               # stats block
                + 2 * ct * L_pad * 4           # in-kernel f32 acc / masked temporaries
                + (1 << 20))
        return need <= block_budget

    # Prefer 256-wide cout tiles (fills the v6e/v7x 256-wide MXU); 128 is v5e-native.
    c_tile = Cout
    for ct in (256, 128, 64, 32, 16, 8):
        if Cout % ct == 0 and _fits(ct):
            c_tile = ct
            break
    n_c = Cout // c_tile

    # ---- tiny XLA-side prep (no im2col, no zero-inserted tensor) ----
    x_pad = jnp.pad(x_nchw, ((0, 0), (0, 0), (1, 1), (1, 1)))
    x_flat = x_pad.reshape(N, Cin, Hp * Wp)
    x_flat = jnp.pad(x_flat, ((0, 0), (0, 0), (0, P_pad - Hp * Wp)))
    x_flat = x_flat.astype(jnp.bfloat16)                       # bf16 MXU operands

    # weight (Cout, Cin, 5, 5) -> per-parity tap slices (4, 9, Cout, Cin) bf16
    taps_per_parity = [_parity_taps(ph, pw) for (ph, pw) in _PARITIES]
    w_hw = jnp.transpose(w_oihw, (2, 3, 0, 1))                  # (5, 5, Cout, Cin)
    w_par = []
    for taps in taps_per_parity:
        sl = jnp.stack([w_hw[kh, kw] for (kh, kw, _, _) in taps], axis=0)
        sl = jnp.pad(sl, ((0, 9 - len(taps)), (0, 0), (0, 0)))  # unused zero tap slots
        w_par.append(sl)
    w_par = jnp.stack(w_par, axis=0).astype(jnp.bfloat16)       # (4, 9, Cout, Cin)

    # valid-position mask over the flattened per-parity output (stats only)
    pos = jnp.arange(L_pad, dtype=jnp.int32)
    mask = (((pos % Wp) < W) & (pos < l_valid)).astype(jnp.float32).reshape(1, L_pad)

    kernel = functools.partial(_conv_stats_kernel,
                               taps_per_parity=taps_per_parity, wp=Wp, l_pad=L_pad)

    grid = (N, n_c, 4)                   # parity innermost: x slab resident across parities
    cparams = pltpu.CompilerParams(
        dimension_semantics=("parallel", "parallel", "parallel"),
        vmem_limit_bytes=vmem_limit,
    )
    cost = pl.CostEstimate(
        flops=2 * 25 * N * Cout * Cin * H * W,
        transcendentals=0,
        bytes_accessed=(N * Cin * P_pad * 2 + 4 * 9 * Cout * Cin * 2 + L_pad * 4
                        + N * 4 * Cout * L_pad * 2 + N * 4 * Cout * 2 * 4),
    )

    # ---- kernel: parity-decomposed conv GEMMs + per-block partial BN stats ----
    y, stats = pl.pallas_call(
        kernel,
        grid=grid,
        in_specs=[
            # TODO(synk): pipeline_mode=pl.Buffered(1) on x (its block only changes
            # with n) would free Cin*P_pad*2 bytes on v7x; kept default for robustness.
            pl.BlockSpec((1, Cin, P_pad), lambda n, c, p: (n, 0, 0)),
            pl.BlockSpec((1, 9, c_tile, Cin), lambda n, c, p: (p, 0, c, 0)),
            pl.BlockSpec((1, L_pad), lambda n, c, p: (0, 0)),
        ],
        out_specs=(
            pl.BlockSpec((1, 1, c_tile, L_pad), lambda n, c, p: (n, p, c, 0)),
            pl.BlockSpec((1, 1, c_tile, 2), lambda n, c, p: (n, p, c, 0)),
        ),
        out_shape=(
            jax.ShapeDtypeStruct((N, 4, Cout, L_pad), jnp.bfloat16),
            jax.ShapeDtypeStruct((N, 4, Cout, 2), jnp.float32),
        ),
        compiler_params=cparams,
        cost_estimate=cost,
    )(x_flat, w_par, mask)

    # ---- BatchNorm batch statistics (training mode, biased var) -- tiny glue ----
    cnt = jnp.float32(N * H2 * W2)
    total = jnp.sum(stats[..., 0], axis=(0, 1))        # (Cout,)
    total_sq = jnp.sum(stats[..., 1], axis=(0, 1))     # (Cout,)
    mean = total / cnt
    var = jnp.maximum(total_sq / cnt - mean * mean, 0.0)
    # TODO(synk): E[y^2]-mean^2 cancels when |mean| >> std; switch to a shifted /
    # Welford accumulation if that regime matters for real activations.
    scale = gamma.astype(jnp.float32) * lax.rsqrt(var + eps)
    shift = beta.astype(jnp.float32) - mean * scale

    # ---- fused BN affine + ReLU + parity->NCHW interleave: one XLA fusion, one pass ----
    yv = y[..., :l_valid].reshape(N, 2, 2, Cout, H, Wp)[..., :W].astype(jnp.float32)
    o = jnp.maximum(yv * scale.reshape(1, 1, 1, Cout, 1, 1)
                    + shift.reshape(1, 1, 1, Cout, 1, 1), 0.0)
    o = jnp.transpose(o, (0, 3, 4, 1, 5, 2)).reshape(N, Cout, H2, W2)
    return o


# ---------------- pure-JAX reference (sanity check) ----------------

def ref_forward(x_nchw, w_oihw, gamma, beta, eps=1e-5):
    """Reference mirroring the kernel's bf16-operand / f32-accumulate MXU precision."""
    N, Cin, H, W = x_nchw.shape
    Cout = w_oihw.shape[0]
    x_up = jnp.zeros((N, Cin, 2 * H, 2 * W), jnp.bfloat16)
    x_up = x_up.at[:, :, ::2, ::2].set(x_nchw.astype(jnp.bfloat16))
    y = lax.conv_general_dilated(
        x_up, w_oihw.astype(jnp.bfloat16),
        window_strides=(1, 1), padding=((2, 2), (2, 2)),
        dimension_numbers=("NCHW", "OIHW", "NCHW"),
        preferred_element_type=jnp.float32)
    mean = y.mean(axis=(0, 2, 3), keepdims=True)
    var = y.var(axis=(0, 2, 3), keepdims=True)          # biased, training-mode BN
    yhat = (y - mean) * lax.rsqrt(var + eps)
    yhat = yhat * gamma.reshape(1, Cout, 1, 1) + beta.reshape(1, Cout, 1, 1)
    return jnp.maximum(yhat, 0.0)


if __name__ == "__main__":
    key = jax.random.PRNGKey(0)
    kx, kw = jax.random.split(key)

    N, Cin, H, W = 2, 4, 16, 16
    Cout = Cin // 2

    x = jax.random.normal(kx, (N, Cin, H, W), dtype=jnp.float32)
    # nn.Conv2d(in, in//2, 5, bias=False)-shaped weight
    wgt = 0.1 * jax.random.normal(kw, (Cout, Cin, 5, 5), dtype=jnp.float32)
    # BatchNorm2d default init: weight=1, bias=0
    gamma = jnp.ones((Cout,), jnp.float32)
    beta = jnp.zeros((Cout,), jnp.float32)

    out = upconv_forward(x, wgt, gamma, beta)
    out = jax.block_until_ready(out)

    ref = ref_forward(x, wgt, gamma, beta)
    assert out.shape == (N, Cout, 2 * H, 2 * W), out.shape
    assert bool(jnp.allclose(out, ref, rtol=2e-2, atol=2e-2)), \
        float(jnp.max(jnp.abs(out - ref)))

    print("KERNEL_OK")
</pallas_src>

<mosaic_0001>
module attributes {stable_mosaic.version = 11 : i64} {
  func.func @_conv_stats_kernel(%arg0: i32, %arg1: i32, %arg2: i32, %arg3: memref<1x4x512xbf16, #tpu.memory_space<vmem>>, %arg4: memref<1x9x2x4xbf16, #tpu.memory_space<vmem>>, %arg5: memref<1x384xf32, #tpu.memory_space<vmem>>, %arg6: memref<1x1x2x384xbf16, #tpu.memory_space<vmem>>, %arg7: memref<1x1x2x2xf32, #tpu.memory_space<vmem>>) attributes {dimension_semantics = [#tpu.dimension_semantics<parallel>, #tpu.dimension_semantics<parallel>, #tpu.dimension_semantics<parallel>], iteration_bounds = array<i64: 2, 1, 4>, scalar_prefetch = 0 : i64, scratch_operands = 0 : i64, tpu.core_type = #tpu.core_type<tc>, window_params = [{transform_indices = @transform_0, window_bounds = array<i64: 1, 4, 512>}, {transform_indices = @transform_1, window_bounds = array<i64: 1, 9, 2, 4>}, {pipeline_mode = #tpu.pipeline_mode<synchronous>, transform_indices = @transform_2, window_bounds = array<i64: 1, 384>}, {transform_indices = @transform_3, window_bounds = array<i64: 1, 1, 2, 384>}, {transform_indices = @transform_4, window_bounds = array<i64: 1, 1, 2, 2>}]} {
    %c0 = arith.constant 0 : index
    %c0_0 = arith.constant 0 : index
    %0 = vector.load %arg5[%c0, %c0_0] : memref<1x384xf32, #tpu.memory_space<vmem>>, vector<1x384xf32>
    %c0_i32 = arith.constant 0 : i32
    %1 = arith.cmpi eq, %arg2, %c0_i32 : i32
    %2 = arith.extui %1 : i1 to i32
    %c0_i32_1 = arith.constant 0 : i32
    %3 = arith.cmpi ne, %2, %c0_i32_1 : i32
    scf.if %3 {
      %c0_5 = arith.constant 0 : index
      %c0_6 = arith.constant 0 : index
      %c0_7 = arith.constant 0 : index
      %c0_8 = arith.constant 0 : index
      %13 = vector.load %arg4[%c0_5, %c0_6, %c0_7, %c0_8] : memref<1x9x2x4xbf16, #tpu.memory_space<vmem>>, vector<1x1x2x4xbf16>
      %14 = vector.shape_cast %13 : vector<1x1x2x4xbf16> to vector<2x4xbf16>
      %c0_9 = arith.constant 0 : index
      %c0_10 = arith.constant 0 : index
      %c0_11 = arith.constant 0 : index
      %15 = vector.load %arg3[%c0_9, %c0_10, %c0_11] : memref<1x4x512xbf16, #tpu.memory_space<vmem>>, vector<1x4x384xbf16>
      %16 = vector.shape_cast %15 : vector<1x4x384xbf16> to vector<4x384xbf16>
      %cst = arith.constant dense<0.000000e+00> : vector<2x384xf32>
      %17 = tpu.matmul %14, %16, %cst {dimension_numbers = #tpu.dot_dimension_numbers<[1], [0], [0], [1], [0, 0, 1, 1], [], []>} : vector<2x4xbf16>, vector<4x384xbf16>, vector<2x384xf32> -> vector<2x384xf32>
      %c0_12 = arith.constant 0 : index
      %c1 = arith.constant 1 : index
      %c0_13 = arith.constant 0 : index
      %c0_14 = arith.constant 0 : index
      %18 = vector.load %arg4[%c0_12, %c1, %c0_13, %c0_14] : memref<1x9x2x4xbf16, #tpu.memory_space<vmem>>, vector<1x1x2x4xbf16>
      %19 = vector.shape_cast %18 : vector<1x1x2x4xbf16> to vector<2x4xbf16>
      %c0_15 = arith.constant 0 : index
      %c0_16 = arith.constant 0 : index
      %c1_17 = arith.constant 1 : index
      %20 = vector.load %arg3[%c0_15, %c0_16, %c1_17] : memref<1x4x512xbf16, #tpu.memory_space<vmem>>, vector<1x4x384xbf16>
      %21 = vector.shape_cast %20 : vector<1x4x384xbf16> to vector<4x384xbf16>
      %cst_18 = arith.constant dense<0.000000e+00> : vector<2x384xf32>
      %22 = tpu.matmul %19, %21, %cst_18 {dimension_numbers = #tpu.dot_dimension_numbers<[1], [0], [0], [1], [0, 0, 1, 1], [], []>} : vector<2x4xbf16>, vector<4x384xbf16>, vector<2x384xf32> -> vector<2x384xf32>
      %23 = arith.addf %17, %22 : vector<2x384xf32>
      %c0_19 = arith.constant 0 : index
      %c2 = arith.constant 2 : index
      %c0_20 = arith.constant 0 : index
      %c0_21 = arith.constant 0 : index
      %24 = vector.load %arg4[%c0_19, %c2, %c0_20, %c0_21] : memref<1x9x2x4xbf16, #tpu.memory_space<vmem>>, vector<1x1x2x4xbf16>
      %25 = vector.shape_cast %24 : vector<1x1x2x4xbf16> to vector<2x4xbf16>
      %c0_22 = arith.constant 0 : index
      %c0_23 = arith.constant 0 : index
      %c2_24 = arith.constant 2 : index
      %26 = vector.load %arg3[%c0_22, %c0_23, %c2_24] : memref<1x4x512xbf16, #tpu.memory_space<vmem>>, vector<1x4x384xbf16>
      %27 = vector.shape_cast %26 : vector<1x4x384xbf16> to vector<4x384xbf16>
      %cst_25 = arith.constant dense<0.000000e+00> : vector<2x384xf32>
      %28 = tpu.matmul %25, %27, %cst_25 {dimension_numbers = #tpu.dot_dimension_numbers<[1], [0], [0], [1], [0, 0, 1, 1], [], []>} : vector<2x4xbf16>, vector<4x384xbf16>, vector<2x384xf32> -> vector<2x384xf32>
      %29 = arith.addf %23, %28 : vector<2x384xf32>
      %c0_26 = arith.constant 0 : index
      %c3 = arith.constant 3 : index
      %c0_27 = arith.constant 0 : index
      %c0_28 = arith.constant 0 : index
      %30 = vector.load %arg4[%c0_26, %c3, %c0_27, %c0_28] : memref<1x9x2x4xbf16, #tpu.memory_space<vmem>>, vector<1x1x2x4xbf16>
      %31 = vector.shape_cast %30 : vector<1x1x2x4xbf16> to vector<2x4xbf16>
      %c0_29 = arith.constant 0 : index
      %c0_30 = arith.constant 0 : index
      %c18 = arith.constant 18 : index
      %32 = vector.load %arg3[%c0_29, %c0_30, %c18] : memref<1x4x512xbf16, #tpu.memory_space<vmem>>, vector<1x4x384xbf16>
      %33 = vector.shape_cast %32 : vector<1x4x384xbf16> to vector<4x384xbf16>
      %cst_31 = arith.constant dense<0.000000e+00> : vector<2x384xf32>
      %34 = tpu.matmul %31, %33, %cst_31 {dimension_numbers = #tpu.dot_dimension_numbers<[1], [0], [0], [1], [0, 0, 1, 1], [], []>} : vector<2x4xbf16>, vector<4x384xbf16>, vector<2x384xf32> -> vector<2x384xf32>
      %35 = arith.addf %29, %34 : vector<2x384xf32>
      %c0_32 = arith.constant 0 : index
      %c4 = arith.constant 4 : index
      %c0_33 = arith.constant 0 : index
      %c0_34 = arith.constant 0 : index
      %36 = vector.load %arg4[%c0_32, %c4, %c0_33, %c0_34] : memref<1x9x2x4xbf16, #tpu.memory_space<vmem>>, vector<1x1x2x4xbf16>
      %37 = vector.shape_cast %36 : vector<1x1x2x4xbf16> to vector<2x4xbf16>
      %c0_35 = arith.constant 0 : index
      %c0_36 = arith.constant 0 : index
      %c19 = arith.constant 19 : index
      %38 = vector.load %arg3[%c0_35, %c0_36, %c19] : memref<1x4x512xbf16, #tpu.memory_space<vmem>>, vector<1x4x384xbf16>
      %39 = vector.shape_cast %38 : vector<1x4x384xbf16> to vector<4x384xbf16>
      %cst_37 = arith.constant dense<0.000000e+00> : vector<2x384xf32>
      %40 = tpu.matmul %37, %39, %cst_37 {dimension_numbers = #tpu.dot_dimension_numbers<[1], [0], [0], [1], [0, 0, 1, 1], [], []>} : vector<2x4xbf16>, vector<4x384xbf16>, vector<2x384xf32> -> vector<2x384xf32>
      %41 = arith.addf %35, %40 : vector<2x384xf32>
      %c0_38 = arith.constant 0 : index
      %c5 = arith.constant 5 : index
      %c0_39 = arith.constant 0 : index
      %c0_40 = arith.constant 0 : index
      %42 = vector.load %arg4[%c0_38, %c5, %c0_39, %c0_40] : memref<1x9x2x4xbf16, #tpu.memory_space<vmem>>, vector<1x1x2x4xbf16>
      %43 = vector.shape_cast %42 : vector<1x1x2x4xbf16> to vector<2x4xbf16>
      %c0_41 = arith.constant 0 : index
      %c0_42 = arith.constant 0 : index
      %c20 = arith.constant 20 : index
      %44 = vector.load %arg3[%c0_41, %c0_42, %c20] : memref<1x4x512xbf16, #tpu.memory_space<vmem>>, vector<1x4x384xbf16>
      %45 = vector.shape_cast %44 : vector<1x4x384xbf16> to vector<4x384xbf16>
      %cst_43 = arith.constant dense<0.000000e+00> : vector<2x384xf32>
      %46 = tpu.matmul %43, %45, %cst_43 {dimension_numbers = #tpu.dot_dimension_numbers<[1], [0], [0], [1], [0, 0, 1, 1], [], []>} : vector<2x4xbf16>, vector<4x384xbf16>, vector<2x384xf32> -> vector<2x384xf32>
      %47 = arith.addf %41, %46 : vector<2x384xf32>
      %c0_44 = arith.constant 0 : index
      %c6 = arith.constant 6 : index
      %c0_45 = arith.constant 0 : index
      %c0_46 = arith.constant 0 : index
      %48 = vector.load %arg4[%c0_44, %c6, %c0_45, %c0_46] : memref<1x9x2x4xbf16, #tpu.memory_space<vmem>>, vector<1x1x2x4xbf16>
      %49 = vector.shape_cast %48 : vector<1x1x2x4xbf16> to vector<2x4xbf16>
      %c0_47 = arith.constant 0 : index
      %c0_48 = arith.constant 0 : index
      %c36 = arith.constant 36 : index
      %50 = vector.load %arg3[%c0_47, %c0_48, %c36] : memref<1x4x512xbf16, #tpu.memory_space<vmem>>, vector<1x4x384xbf16>
      %51 = vector.shape_cast %50 : vector<1x4x384xbf16> to vector<4x384xbf16>
      %cst_49 = arith.constant dense<0.000000e+00> : vector<2x384xf32>
      %52 = tpu.matmul %49, %51, %cst_49 {dimension_numbers = #tpu.dot_dimension_numbers<[1], [0], [0], [1], [0, 0, 1, 1], [], []>} : vector<2x4xbf16>, vector<4x384xbf16>, vector<2x384xf32> -> vector<2x384xf32>
      %53 = arith.addf %47, %52 : vector<2x384xf32>
      %c0_50 = arith.constant 0 : index
      %c7 = arith.constant 7 : index
      %c0_51 = arith.constant 0 : index
      %c0_52 = arith.constant 0 : index
      %54 = vector.load %arg4[%c0_50, %c7, %c0_51, %c0_52] : memref<1x9x2x4xbf16, #tpu.memory_space<vmem>>, vector<1x1x2x4xbf16>
      %55 = vector.shape_cast %54 : vector<1x1x2x4xbf16> to vector<2x4xbf16>
      %c0_53 = arith.constant 0 : index
      %c0_54 = arith.constant 0 : index
      %c37 = arith.constant 37 : index
      %56 = vector.load %arg3[%c0_53, %c0_54, %c37] : memref<1x4x512xbf16, #tpu.memory_space<vmem>>, vector<1x4x384xbf16>
      %57 = vector.shape_cast %56 : vector<1x4x384xbf16> to vector<4x384xbf16>
      %cst_55 = arith.constant dense<0.000000e+00> : vector<2x384xf32>
      %58 = tpu.matmul %55, %57, %cst_55 {dimension_numbers = #tpu.dot_dimension_numbers<[1], [0], [0], [1], [0, 0, 1, 1], [], []>} : vector<2x4xbf16>, vector<4x384xbf16>, vector<2x384xf32> -> vector<2x384xf32>
      %59 = arith.addf %53, %58 : vector<2x384xf32>
      %c0_56 = arith.constant 0 : index
      %c8 = arith.constant 8 : index
      %c0_57 = arith.constant 0 : index
      %c0_58 = arith.constant 0 : index
      %60 = vector.load %arg4[%c0_56, %c8, %c0_57, %c0_58] : memref<1x9x2x4xbf16, #tpu.memory_space<vmem>>, vector<1x1x2x4xbf16>
      %61 = vector.shape_cast %60 : vector<1x1x2x4xbf16> to vector<2x4xbf16>
      %c0_59 = arith.constant 0 : index
      %c0_60 = arith.constant 0 : index
      %c38 = arith.constant 38 : index
      %62 = vector.load %arg3[%c0_59, %c0_60, %c38] : memref<1x4x512xbf16, #tpu.memory_space<vmem>>, vector<1x4x384xbf16>
      %63 = vector.shape_cast %62 : vector<1x4x384xbf16> to vector<4x384xbf16>
      %cst_61 = arith.constant dense<0.000000e+00> : vector<2x384xf32>
      %64 = tpu.matmul %61, %63, %cst_61 {dimension_numbers = #tpu.dot_dimension_numbers<[1], [0], [0], [1], [0, 0, 1, 1], [], []>} : vector<2x4xbf16>, vector<4x384xbf16>, vector<2x384xf32> -> vector<2x384xf32>
      %65 = arith.addf %59, %64 : vector<2x384xf32>
      %66 = arith.truncf %65 : vector<2x384xf32> to vector<2x384xbf16>
      %c0_62 = arith.constant 0 : index
      %c0_63 = arith.constant 0 : index
      %c0_64 = arith.constant 0 : index
      %c0_65 = arith.constant 0 : index
      %67 = vector.load %arg6[%c0_62, %c0_63, %c0_64, %c0_65] : memref<1x1x2x384xbf16, #tpu.memory_space<vmem>>, vector<1x1x2x384xbf16>
      %68 = vector.shape_cast %67 : vector<1x1x2x384xbf16> to vector<2x384xbf16>
      %69 = vector.shape_cast %66 : vector<2x384xbf16> to vector<1x1x2x384xbf16>
      tpu.vector_store %arg6[%c0_62, %c0_63, %c0_64, %c0_65], %69 {strides = array<i32>} : memref<1x1x2x384xbf16, #tpu.memory_space<vmem>>, vector<1x1x2x384xbf16>,
      %70 = vector.broadcast %0 : vector<1x384xf32> to vector<2x384xf32>
      %71 = arith.mulf %65, %70 : vector<2x384xf32>
      %cst_66 = arith.constant dense<0.000000e+00> : vector<2xf32>
      %72 = vector.multi_reduction <add>, %71, %cst_66 [1] : vector<2x384xf32> to vector<2xf32>
      %73 = vector.shape_cast %72 : vector<2xf32> to vector<2x1xf32>
      %c0_67 = arith.constant 0 : index
      %c0_68 = arith.constant 0 : index
      %c0_69 = arith.constant 0 : index
      %c0_70 = arith.constant 0 : index
      %74 = vector.load %arg7[%c0_67, %c0_68, %c0_69, %c0_70] : memref<1x1x2x2xf32, #tpu.memory_space<vmem>>, vector<1x1x2x1xf32>
      %75 = vector.shape_cast %74 : vector<1x1x2x1xf32> to vector<2x1xf32>
      %76 = vector.shape_cast %73 : vector<2x1xf32> to vector<1x1x2x1xf32>
      tpu.vector_store %arg7[%c0_67, %c0_68, %c0_69, %c0_70], %76 {strides = array<i32>} : memref<1x1x2x2xf32, #tpu.memory_space<vmem>>, vector<1x1x2x1xf32>,
      %77 = arith.mulf %71, %65 : vector<2x384xf32>
      %cst_71 = arith.constant dense<0.000000e+00> : vector<2xf32>
      %78 = vector.multi_reduction <add>, %77, %cst_71 [1] : vector<2x384xf32> to vector<2xf32>
      %79 = vector.shape_cast %78 : vector<2xf32> to vector<2x1xf32>
      %c0_72 = arith.constant 0 : index
      %c0_73 = arith.constant 0 : index
      %c0_74 = arith.constant 0 : index
      %c1_75 = arith.constant 1 : index
      %80 = vector.load %arg7[%c0_72, %c0_73, %c0_74, %c1_75] : memref<1x1x2x2xf32, #tpu.memory_space<vmem>>, vector<1x1x2x1xf32>
      %81 = vector.shape_cast %80 : vector<1x1x2x1xf32> to vector<2x1xf32>
      %82 = vector.shape_cast %79 : vector<2x1xf32> to vector<1x1x2x1xf32>
      tpu.vector_store %arg7[%c0_72, %c0_73, %c0_74, %c1_75], %82 {strides = array<i32>} : memref<1x1x2x2xf32, #tpu.memory_space<vmem>>, vector<1x1x2x1xf32>,
    } else {
    }
    %c1_i32 = arith.constant 1 : i32
    %4 = arith.cmpi eq, %arg2, %c1_i32 : i32
    %5 = arith.extui %4 : i1 to i32
    %c0_i32_2 = arith.constant 0 : i32
    %6 = arith.cmpi ne, %5, %c0_i32_2 : i32
    scf.if %6 {
      %c0_5 = arith.constant 0 : index
      %c0_6 = arith.constant 0 : index
      %c0_7 = arith.constant 0 : index
      %c0_8 = arith.constant 0 : index
      %13 = vector.load %arg4[%c0_5, %c0_6, %c0_7, %c0_8] : memref<1x9x2x4xbf16, #tpu.memory_space<vmem>>, vector<1x1x2x4xbf16>
      %14 = vector.shape_cast %13 : vector<1x1x2x4xbf16> to vector<2x4xbf16>
      %c0_9 = arith.constant 0 : index
      %c0_10 = arith.constant 0 : index
      %c1 = arith.constant 1 : index
      %15 = vector.load %arg3[%c0_9, %c0_10, %c1] : memref<1x4x512xbf16, #tpu.memory_space<vmem>>, vector<1x4x384xbf16>
      %16 = vector.shape_cast %15 : vector<1x4x384xbf16> to vector<4x384xbf16>
      %cst = arith.constant dense<0.000000e+00> : vector<2x384xf32>
      %17 = tpu.matmul %14, %16, %cst {dimension_numbers = #tpu.dot_dimension_numbers<[1], [0], [0], [1], [0, 0, 1, 1], [], []>} : vector<2x4xbf16>, vector<4x384xbf16>, vector<2x384xf32> -> vector<2x384xf32>
      %c0_11 = arith.constant 0 : index
      %c1_12 = arith.constant 1 : index
      %c0_13 = arith.constant 0 : index
      %c0_14 = arith.constant 0 : index
      %18 = vector.load %arg4[%c0_11, %c1_12, %c0_13, %c0_14] : memref<1x9x2x4xbf16, #tpu.memory_space<vmem>>, vector<1x1x2x4xbf16>
      %19 = vector.shape_cast %18 : vector<1x1x2x4xbf16> to vector<2x4xbf16>
      %c0_15 = arith.constant 0 : index
      %c0_16 = arith.constant 0 : index
      %c2 = arith.constant 2 : index
      %20 = vector.load %arg3[%c0_15, %c0_16, %c2] : memref<1x4x512xbf16, #tpu.memory_space<vmem>>, vector<1x4x384xbf16>
      %21 = vector.shape_cast %20 : vector<1x4x384xbf16> to vector<4x384xbf16>
      %cst_17 = arith.constant dense<0.000000e+00> : vector<2x384xf32>
      %22 = tpu.matmul %19, %21, %cst_17 {dimension_numbers = #tpu.dot_dimension_numbers<[1], [0], [0], [1], [0, 0, 1, 1], [], []>} : vector<2x4xbf16>, vector<4x384xbf16>, vector<2x384xf32> -> vector<2x384xf32>
      %23 = arith.addf %17, %22 : vector<2x384xf32>
      %c0_18 = arith.constant 0 : index
      %c2_19 = arith.constant 2 : index
      %c0_20 = arith.constant 0 : index
      %c0_21 = arith.constant 0 : index
      %24 = vector.load %arg4[%c0_18, %c2_19, %c0_20, %c0_21] : memref<1x9x2x4xbf16, #tpu.memory_space<vmem>>, vector<1x1x2x4xbf16>
      %25 = vector.shape_cast %24 : vector<1x1x2x4xbf16> to vector<2x4xbf16>
      %c0_22 = arith.constant 0 : index
      %c0_23 = arith.constant 0 : index
      %c19 = arith.constant 19 : index
      %26 = vector.load %arg3[%c0_22, %c0_23, %c19] : memref<1x4x512xbf16, #tpu.memory_space<vmem>>, vector<1x4x384xbf16>
      %27 = vector.shape_cast %26 : vector<1x4x384xbf16> to vector<4x384xbf16>
      %cst_24 = arith.constant dense<0.000000e+00> : vector<2x384xf32>
      %28 = tpu.matmul %25, %27, %cst_24 {dimension_numbers = #tpu.dot_dimension_numbers<[1], [0], [0], [1], [0, 0, 1, 1], [], []>} : vector<2x4xbf16>, vector<4x384xbf16>, vector<2x384xf32> -> vector<2x384xf32>
      %29 = arith.addf %23, %28 : vector<2x384xf32>
      %c0_25 = arith.constant 0 : index
      %c3 = arith.constant 3 : index
      %c0_26 = arith.constant 0 : index
      %c0_27 = arith.constant 0 : index
      %30 = vector.load %arg4[%c0_25, %c3, %c0_26, %c0_27] : memref<1x9x2x4xbf16, #tpu.memory_space<vmem>>, vector<1x1x2x4xbf16>
      %31 = vector.shape_cast %30 : vector<1x1x2x4xbf16> to vector<2x4xbf16>
      %c0_28 = arith.constant 0 : index
      %c0_29 = arith.constant 0 : index
      %c20 = arith.constant 20 : index
      %32 = vector.load %arg3[%c0_28, %c0_29, %c20] : memref<1x4x512xbf16, #tpu.memory_space<vmem>>, vector<1x4x384xbf16>
      %33 = vector.shape_cast %32 : vector<1x4x384xbf16> to vector<4x384xbf16>
      %cst_30 = arith.constant dense<0.000000e+00> : vector<2x384xf32>
      %34 = tpu.matmul %31, %33, %cst_30 {dimension_numbers = #tpu.dot_dimension_numbers<[1], [0], [0], [1], [0, 0, 1, 1], [], []>} : vector<2x4xbf16>, vector<4x384xbf16>, vector<2x384xf32> -> vector<2x384xf32>
      %35 = arith.addf %29, %34 : vector<2x384xf32>
      %c0_31 = arith.constant 0 : index
      %c4 = arith.constant 4 : index
      %c0_32 = arith.constant 0 : index
      %c0_33 = arith.constant 0 : index
      %36 = vector.load %arg4[%c0_31, %c4, %c0_32, %c0_33] : memref<1x9x2x4xbf16, #tpu.memory_space<vmem>>, vector<1x1x2x4xbf16>
      %37 = vector.shape_cast %36 : vector<1x1x2x4xbf16> to vector<2x4xbf16>
      %c0_34 = arith.constant 0 : index
      %c0_35 = arith.constant 0 : index
      %c37 = arith.constant 37 : index
      %38 = vector.load %arg3[%c0_34, %c0_35, %c37] : memref<1x4x512xbf16, #tpu.memory_space<vmem>>, vector<1x4x384xbf16>
      %39 = vector.shape_cast %38 : vector<1x4x384xbf16> to vector<4x384xbf16>
      %cst_36 = arith.constant dense<0.000000e+00> : vector<2x384xf32>
      %40 = tpu.matmul %37, %39, %cst_36 {dimension_numbers = #tpu.dot_dimension_numbers<[1], [0], [0], [1], [0, 0, 1, 1], [], []>} : vector<2x4xbf16>, vector<4x384xbf16>, vector<2x384xf32> -> vector<2x384xf32>
      %41 = arith.addf %35, %40 : vector<2x384xf32>
      %c0_37 = arith.constant 0 : index
      %c5 = arith.constant 5 : index
      %c0_38 = arith.constant 0 : index
      %c0_39 = arith.constant 0 : index
      %42 = vector.load %arg4[%c0_37, %c5, %c0_38, %c0_39] : memref<1x9x2x4xbf16, #tpu.memory_space<vmem>>, vector<1x1x2x4xbf16>
      %43 = vector.shape_cast %42 : vector<1x1x2x4xbf16> to vector<2x4xbf16>
      %c0_40 = arith.constant 0 : index
      %c0_41 = arith.constant 0 : index
      %c38 = arith.constant 38 : index
      %44 = vector.load %arg3[%c0_40, %c0_41, %c38] : memref<1x4x512xbf16, #tpu.memory_space<vmem>>, vector<1x4x384xbf16>
      %45 = vector.shape_cast %44 : vector<1x4x384xbf16> to vector<4x384xbf16>
      %cst_42 = arith.constant dense<0.000000e+00> : vector<2x384xf32>
      %46 = tpu.matmul %43, %45, %cst_42 {dimension_numbers = #tpu.dot_dimension_numbers<[1], [0], [0], [1], [0, 0, 1, 1], [], []>} : vector<2x4xbf16>, vector<4x384xbf16>, vector<2x384xf32> -> vector<2x384xf32>
      %47 = arith.addf %41, %46 : vector<2x384xf32>
      %48 = arith.truncf %47 : vector<2x384xf32> to vector<2x384xbf16>
      %c0_43 = arith.constant 0 : index
      %c0_44 = arith.constant 0 : index
      %c0_45 = arith.constant 0 : index
      %c0_46 = arith.constant 0 : index
      %49 = vector.load %arg6[%c0_43, %c0_44, %c0_45, %c0_46] : memref<1x1x2x384xbf16, #tpu.memory_space<vmem>>, vector<1x1x2x384xbf16>
      %50 = vector.shape_cast %49 : vector<1x1x2x384xbf16> to vector<2x384xbf16>
      %51 = vector.shape_cast %48 : vector<2x384xbf16> to vector<1x1x2x384xbf16>
      tpu.vector_store %arg6[%c0_43, %c0_44, %c0_45, %c0_46], %51 {strides = array<i32>} : memref<1x1x2x384xbf16, #tpu.memory_space<vmem>>, vector<1x1x2x384xbf16>,
      %52 = vector.broadcast %0 : vector<1x384xf32> to vector<2x384xf32>
      %53 = arith.mulf %47, %52 : vector<2x384xf32>
      %cst_47 = arith.constant dense<0.000000e+00> : vector<2xf32>
      %54 = vector.multi_reduction <add>, %53, %cst_47 [1] : vector<2x384xf32> to vector<2xf32>
      %55 = vector.shape_cast %54 : vector<2xf32> to vector<2x1xf32>
      %c0_48 = arith.constant 0 : index
      %c0_49 = arith.constant 0 : index
      %c0_50 = arith.constant 0 : index
      %c0_51 = arith.constant 0 : index
      %56 = vector.load %arg7[%c0_48, %c0_49, %c0_50, %c0_51] : memref<1x1x2x2xf32, #tpu.memory_space<vmem>>, vector<1x1x2x1xf32>
      %57 = vector.shape_cast %56 : vector<1x1x2x1xf32> to vector<2x1xf32>
      %58 = vector.shape_cast %55 : vector<2x1xf32> to vector<1x1x2x1xf32>
      tpu.vector_store %arg7[%c0_48, %c0_49, %c0_50, %c0_51], %58 {strides = array<i32>} : memref<1x1x2x2xf32, #tpu.memory_space<vmem>>, vector<1x1x2x1xf32>,
      %59 = arith.mulf %53, %47 : vector<2x384xf32>
      %cst_52 = arith.constant dense<0.000000e+00> : vector<2xf32>
      %60 = vector.multi_reduction <add>, %59, %cst_52 [1] : vector<2x384xf32> to vector<2xf32>
      %61 = vector.shape_cast %60 : vector<2xf32> to vector<2x1xf32>
      %c0_53 = arith.constant 0 : index
      %c0_54 = arith.constant 0 : index
      %c0_55 = arith.constant 0 : index
      %c1_56 = arith.constant 1 : index
      %62 = vector.load %arg7[%c0_53, %c0_54, %c0_55, %c1_56] : memref<1x1x2x2xf32, #tpu.memory_space<vmem>>, vector<1x1x2x1xf32>
      %63 = vector.shape_cast %62 : vector<1x1x2x1xf32> to vector<2x1xf32>
      %64 = vector.shape_cast %61 : vector<2x1xf32> to vector<1x1x2x1xf32>
      tpu.vector_store %arg7[%c0_53, %c0_54, %c0_55, %c1_56], %64 {strides = array<i32>} : memref<1x1x2x2xf32, #tpu.memory_space<vmem>>, vector<1x1x2x1xf32>,
    } else {
    }
    %c2_i32 = arith.constant 2 : i32
    %7 = arith.cmpi eq, %arg2, %c2_i32 : i32
    %8 = arith.extui %7 : i1 to i32
    %c0_i32_3 = arith.constant 0 : i32
    %9 = arith.cmpi ne, %8, %c0_i32_3 : i32
    scf.if %9 {
      %c0_5 = arith.constant 0 : index
      %c0_6 = arith.constant 0 : index
      %c0_7 = arith.constant 0 : index
      %c0_8 = arith.constant 0 : index
      %13 = vector.load %arg4[%c0_5, %c0_6, %c0_7, %c0_8] : memref<1x9x2x4xbf16, #tpu.memory_space<vmem>>, vector<1x1x2x4xbf16>
      %14 = vector.shape_cast %13 : vector<1x1x2x4xbf16> to vector<2x4xbf16>
      %c0_9 = arith.constant 0 : index
      %c0_10 = arith.constant 0 : index
      %c18 = arith.constant 18 : index
      %15 = vector.load %arg3[%c0_9, %c0_10, %c18] : memref<1x4x512xbf16, #tpu.memory_space<vmem>>, vector<1x4x384xbf16>
      %16 = vector.shape_cast %15 : vector<1x4x384xbf16> to vector<4x384xbf16>
      %cst = arith.constant dense<0.000000e+00> : vector<2x384xf32>
      %17 = tpu.matmul %14, %16, %cst {dimension_numbers = #tpu.dot_dimension_numbers<[1], [0], [0], [1], [0, 0, 1, 1], [], []>} : vector<2x4xbf16>, vector<4x384xbf16>, vector<2x384xf32> -> vector<2x384xf32>
      %c0_11 = arith.constant 0 : index
      %c1 = arith.constant 1 : index
      %c0_12 = arith.constant 0 : index
      %c0_13 = arith.constant 0 : index
      %18 = vector.load %arg4[%c0_11, %c1, %c0_12, %c0_13] : memref<1x9x2x4xbf16, #tpu.memory_space<vmem>>, vector<1x1x2x4xbf16>
      %19 = vector.shape_cast %18 : vector<1x1x2x4xbf16> to vector<2x4xbf16>
      %c0_14 = arith.constant 0 : index
      %c0_15 = arith.constant 0 : index
      %c19 = arith.constant 19 : index
      %20 = vector.load %arg3[%c0_14, %c0_15, %c19] : memref<1x4x512xbf16, #tpu.memory_space<vmem>>, vector<1x4x384xbf16>
      %21 = vector.shape_cast %20 : vector<1x4x384xbf16> to vector<4x384xbf16>
      %cst_16 = arith.constant dense<0.000000e+00> : vector<2x384xf32>
      %22 = tpu.matmul %19, %21, %cst_16 {dimension_numbers = #tpu.dot_dimension_numbers<[1], [0], [0], [1], [0, 0, 1, 1], [], []>} : vector<2x4xbf16>, vector<4x384xbf16>, vector<2x384xf32> -> vector<2x384xf32>
      %23 = arith.addf %17, %22 : vector<2x384xf32>
      %c0_17 = arith.constant 0 : index
      %c2 = arith.constant 2 : index
      %c0_18 = arith.constant 0 : index
      %c0_19 = arith.constant 0 : index
      %24 = vector.load %arg4[%c0_17, %c2, %c0_18, %c0_19] : memref<1x9x2x4xbf16, #tpu.memory_space<vmem>>, vector<1x1x2x4xbf16>
      %25 = vector.shape_cast %24 : vector<1x1x2x4xbf16> to vector<2x4xbf16>
      %c0_20 = arith.constant 0 : index
      %c0_21 = arith.constant 0 : index
      %c20 = arith.constant 20 : index
      %26 = vector.load %arg3[%c0_20, %c0_21, %c20] : memref<1x4x512xbf16, #tpu.memory_space<vmem>>, vector<1x4x384xbf16>
      %27 = vector.shape_cast %26 : vector<1x4x384xbf16> to vector<4x384xbf16>
      %cst_22 = arith.constant dense<0.000000e+00> : vector<2x384xf32>
      %28 = tpu.matmul %25, %27, %cst_22 {dimension_numbers = #tpu.dot_dimension_numbers<[1], [0], [0], [1], [0, 0, 1, 1], [], []>} : vector<2x4xbf16>, vector<4x384xbf16>, vector<2x384xf32> -> vector<2x384xf32>
      %29 = arith.addf %23, %28 : vector<2x384xf32>
      %c0_23 = arith.constant 0 : index
      %c3 = arith.constant 3 : index
      %c0_24 = arith.constant 0 : index
      %c0_25 = arith.constant 0 : index
      %30 = vector.load %arg4[%c0_23, %c3, %c0_24, %c0_25] : memref<1x9x2x4xbf16, #tpu.memory_space<vmem>>, vector<1x1x2x4xbf16>
      %31 = vector.shape_cast %30 : vector<1x1x2x4xbf16> to vector<2x4xbf16>
      %c0_26 = arith.constant 0 : index
      %c0_27 = arith.constant 0 : index
      %c36 = arith.constant 36 : index
      %32 = vector.load %arg3[%c0_26, %c0_27, %c36] : memref<1x4x512xbf16, #tpu.memory_space<vmem>>, vector<1x4x384xbf16>
      %33 = vector.shape_cast %32 : vector<1x4x384xbf16> to vector<4x384xbf16>
      %cst_28 = arith.constant dense<0.000000e+00> : vector<2x384xf32>
      %34 = tpu.matmul %31, %33, %cst_28 {dimension_numbers = #tpu.dot_dimension_numbers<[1], [0], [0], [1], [0, 0, 1, 1], [], []>} : vector<2x4xbf16>, vector<4x384xbf16>, vector<2x384xf32> -> vector<2x384xf32>
      %35 = arith.addf %29, %34 : vector<2x384xf32>
      %c0_29 = arith.constant 0 : index
      %c4 = arith.constant 4 : index
      %c0_30 = arith.constant 0 : index
      %c0_31 = arith.constant 0 : index
      %36 = vector.load %arg4[%c0_29, %c4, %c0_30, %c0_31] : memref<1x9x2x4xbf16, #tpu.memory_space<vmem>>, vector<1x1x2x4xbf16>
      %37 = vector.shape_cast %36 : vector<1x1x2x4xbf16> to vector<2x4xbf16>
      %c0_32 = arith.constant 0 : index
      %c0_33 = arith.constant 0 : index
      %c37 = arith.constant 37 : index
      %38 = vector.load %arg3[%c0_32, %c0_33, %c37] : memref<1x4x512xbf16, #tpu.memory_space<vmem>>, vector<1x4x384xbf16>
      %39 = vector.shape_cast %38 : vector<1x4x384xbf16> to vector<4x384xbf16>
      %cst_34 = arith.constant dense<0.000000e+00> : vector<2x384xf32>
      %40 = tpu.matmul %37, %39, %cst_34 {dimension_numbers = #tpu.dot_dimension_numbers<[1], [0], [0], [1], [0, 0, 1, 1], [], []>} : vector<2x4xbf16>, vector<4x384xbf16>, vector<2x384xf32> -> vector<2x384xf32>
      %41 = arith.addf %35, %40 : vector<2x384xf32>
      %c0_35 = arith.constant 0 : index
      %c5 = arith.constant 5 : index
      %c0_36 = arith.constant 0 : index
      %c0_37 = arith.constant 0 : index
      %42 = vector.load %arg4[%c0_35, %c5, %c0_36, %c0_37] : memref<1x9x2x4xbf16, #tpu.memory_space<vmem>>, vector<1x1x2x4xbf16>
      %43 = vector.shape_cast %42 : vector<1x1x2x4xbf16> to vector<2x4xbf16>
      %c0_38 = arith.constant 0 : index
      %c0_39 = arith.constant 0 : index
      %c38 = arith.constant 38 : index
      %44 = vector.load %arg3[%c0_38, %c0_39, %c38] : memref<1x4x512xbf16, #tpu.memory_space<vmem>>, vector<1x4x384xbf16>
      %45 = vector.shape_cast %44 : vector<1x4x384xbf16> to vector<4x384xbf16>
      %cst_40 = arith.constant dense<0.000000e+00> : vector<2x384xf32>
      %46 = tpu.matmul %43, %45, %cst_40 {dimension_numbers = #tpu.dot_dimension_numbers<[1], [0], [0], [1], [0, 0, 1, 1], [], []>} : vector<2x4xbf16>, vector<4x384xbf16>, vector<2x384xf32> -> vector<2x384xf32>
      %47 = arith.addf %41, %46 : vector<2x384xf32>
      %48 = arith.truncf %47 : vector<2x384xf32> to vector<2x384xbf16>
      %c0_41 = arith.constant 0 : index
      %c0_42 = arith.constant 0 : index
      %c0_43 = arith.constant 0 : index
      %c0_44 = arith.constant 0 : index
      %49 = vector.load %arg6[%c0_41, %c0_42, %c0_43, %c0_44] : memref<1x1x2x384xbf16, #tpu.memory_space<vmem>>, vector<1x1x2x384xbf16>
      %50 = vector.shape_cast %49 : vector<1x1x2x384xbf16> to vector<2x384xbf16>
      %51 = vector.shape_cast %48 : vector<2x384xbf16> to vector<1x1x2x384xbf16>
      tpu.vector_store %arg6[%c0_41, %c0_42, %c0_43, %c0_44], %51 {strides = array<i32>} : memref<1x1x2x384xbf16, #tpu.memory_space<vmem>>, vector<1x1x2x384xbf16>,
      %52 = vector.broadcast %0 : vector<1x384xf32> to vector<2x384xf32>
      %53 = arith.mulf %47, %52 : vector<2x384xf32>
      %cst_45 = arith.constant dense<0.000000e+00> : vector<2xf32>
      %54 = vector.multi_reduction <add>, %53, %cst_45 [1] : vector<2x384xf32> to vector<2xf32>
      %55 = vector.shape_cast %54 : vector<2xf32> to vector<2x1xf32>
      %c0_46 = arith.constant 0 : index
      %c0_47 = arith.constant 0 : index
      %c0_48 = arith.constant 0 : index
      %c0_49 = arith.constant 0 : index
      %56 = vector.load %arg7[%c0_46, %c0_47, %c0_48, %c0_49] : memref<1x1x2x2xf32, #tpu.memory_space<vmem>>, vector<1x1x2x1xf32>
      %57 = vector.shape_cast %56 : vector<1x1x2x1xf32> to vector<2x1xf32>
      %58 = vector.shape_cast %55 : vector<2x1xf32> to vector<1x1x2x1xf32>
      tpu.vector_store %arg7[%c0_46, %c0_47, %c0_48, %c0_49], %58 {strides = array<i32>} : memref<1x1x2x2xf32, #tpu.memory_space<vmem>>, vector<1x1x2x1xf32>,
      %59 = arith.mulf %53, %47 : vector<2x384xf32>
      %cst_50 = arith.constant dense<0.000000e+00> : vector<2xf32>
      %60 = vector.multi_reduction <add>, %59, %cst_50 [1] : vector<2x384xf32> to vector<2xf32>
      %61 = vector.shape_cast %60 : vector<2xf32> to vector<2x1xf32>
      %c0_51 = arith.constant 0 : index
      %c0_52 = arith.constant 0 : index
      %c0_53 = arith.constant 0 : index
      %c1_54 = arith.constant 1 : index
      %62 = vector.load %arg7[%c0_51, %c0_52, %c0_53, %c1_54] : memref<1x1x2x2xf32, #tpu.memory_space<vmem>>, vector<1x1x2x1xf32>
      %63 = vector.shape_cast %62 : vector<1x1x2x1xf32> to vector<2x1xf32>
      %64 = vector.shape_cast %61 : vector<2x1xf32> to vector<1x1x2x1xf32>
      tpu.vector_store %arg7[%c0_51, %c0_52, %c0_53, %c1_54], %64 {strides = array<i32>} : memref<1x1x2x2xf32, #tpu.memory_space<vmem>>, vector<1x1x2x1xf32>,
    } else {
    }
    %c3_i32 = arith.constant 3 : i32
    %10 = arith.cmpi eq, %arg2, %c3_i32 : i32
    %11 = arith.extui %10 : i1 to i32
    %c0_i32_4 = arith.constant 0 : i32
    %12 = arith.cmpi ne, %11, %c0_i32_4 : i32
    scf.if %12 {
      %c0_5 = arith.constant 0 : index
      %c0_6 = arith.constant 0 : index
      %c0_7 = arith.constant 0 : index
      %c0_8 = arith.constant 0 : index
      %13 = vector.load %arg4[%c0_5, %c0_6, %c0_7, %c0_8] : memref<1x9x2x4xbf16, #tpu.memory_space<vmem>>, vector<1x1x2x4xbf16>
      %14 = vector.shape_cast %13 : vector<1x1x2x4xbf16> to vector<2x4xbf16>
      %c0_9 = arith.constant 0 : index
      %c0_10 = arith.constant 0 : index
      %c19 = arith.constant 19 : index
      %15 = vector.load %arg3[%c0_9, %c0_10, %c19] : memref<1x4x512xbf16, #tpu.memory_space<vmem>>, vector<1x4x384xbf16>
      %16 = vector.shape_cast %15 : vector<1x4x384xbf16> to vector<4x384xbf16>
      %cst = arith.constant dense<0.000000e+00> : vector<2x384xf32>
      %17 = tpu.matmul %14, %16, %cst {dimension_numbers = #tpu.dot_dimension_numbers<[1], [0], [0], [1], [0, 0, 1, 1], [], []>} : vector<2x4xbf16>, vector<4x384xbf16>, vector<2x384xf32> -> vector<2x384xf32>
      %c0_11 = arith.constant 0 : index
      %c1 = arith.constant 1 : index
      %c0_12 = arith.constant 0 : index
      %c0_13 = arith.constant 0 : index
      %18 = vector.load %arg4[%c0_11, %c1, %c0_12, %c0_13] : memref<1x9x2x4xbf16, #tpu.memory_space<vmem>>, vector<1x1x2x4xbf16>
      %19 = vector.shape_cast %18 : vector<1x1x2x4xbf16> to vector<2x4xbf16>
      %c0_14 = arith.constant 0 : index
      %c0_15 = arith.constant 0 : index
      %c20 = arith.constant 20 : index
      %20 = vector.load %arg3[%c0_14, %c0_15, %c20] : memref<1x4x512xbf16, #tpu.memory_space<vmem>>, vector<1x4x384xbf16>
      %21 = vector.shape_cast %20 : vector<1x4x384xbf16> to vector<4x384xbf16>
      %cst_16 = arith.constant dense<0.000000e+00> : vector<2x384xf32>
      %22 = tpu.matmul %19, %21, %cst_16 {dimension_numbers = #tpu.dot_dimension_numbers<[1], [0], [0], [1], [0, 0, 1, 1], [], []>} : vector<2x4xbf16>, vector<4x384xbf16>, vector<2x384xf32> -> vector<2x384xf32>
      %23 = arith.addf %17, %22 : vector<2x384xf32>
      %c0_17 = arith.constant 0 : index
      %c2 = arith.constant 2 : index
      %c0_18 = arith.constant 0 : index
      %c0_19 = arith.constant 0 : index
      %24 = vector.load %arg4[%c0_17, %c2, %c0_18, %c0_19] : memref<1x9x2x4xbf16, #tpu.memory_space<vmem>>, vector<1x1x2x4xbf16>
      %25 = vector.shape_cast %24 : vector<1x1x2x4xbf16> to vector<2x4xbf16>
      %c0_20 = arith.constant 0 : index
      %c0_21 = arith.constant 0 : index
      %c37 = arith.constant 37 : index
      %26 = vector.load %arg3[%c0_20, %c0_21, %c37] : memref<1x4x512xbf16, #tpu.memory_space<vmem>>, vector<1x4x384xbf16>
      %27 = vector.shape_cast %26 : vector<1x4x384xbf16> to vector<4x384xbf16>
      %cst_22 = arith.constant dense<0.000000e+00> : vector<2x384xf32>
      %28 = tpu.matmul %25, %27, %cst_22 {dimension_numbers = #tpu.dot_dimension_numbers<[1], [0], [0], [1], [0, 0, 1, 1], [], []>} : vector<2x4xbf16>, vector<4x384xbf16>, vector<2x384xf32> -> vector<2x384xf32>
      %29 = arith.addf %23, %28 : vector<2x384xf32>
      %c0_23 = arith.constant 0 : index
      %c3 = arith.constant 3 : index
      %c0_24 = arith.constant 0 : index
      %c0_25 = arith.constant 0 : index
      %30 = vector.load %arg4[%c0_23, %c3, %c0_24, %c0_25] : memref<1x9x2x4xbf16, #tpu.memory_space<vmem>>, vector<1x1x2x4xbf16>
      %31 = vector.shape_cast %30 : vector<1x1x2x4xbf16> to vector<2x4xbf16>
      %c0_26 = arith.constant 0 : index
      %c0_27 = arith.constant 0 : index
      %c38 = arith.constant 38 : index
      %32 = vector.load %arg3[%c0_26, %c0_27, %c38] : memref<1x4x512xbf16, #tpu.memory_space<vmem>>, vector<1x4x384xbf16>
      %33 = vector.shape_cast %32 : vector<1x4x384xbf16> to vector<4x384xbf16>
      %cst_28 = arith.constant dense<0.000000e+00> : vector<2x384xf32>
      %34 = tpu.matmul %31, %33, %cst_28 {dimension_numbers = #tpu.dot_dimension_numbers<[1], [0], [0], [1], [0, 0, 1, 1], [], []>} : vector<2x4xbf16>, vector<4x384xbf16>, vector<2x384xf32> -> vector<2x384xf32>
      %35 = arith.addf %29, %34 : vector<2x384xf32>
      %36 = arith.truncf %35 : vector<2x384xf32> to vector<2x384xbf16>
      %c0_29 = arith.constant 0 : index
      %c0_30 = arith.constant 0 : index
      %c0_31 = arith.constant 0 : index
      %c0_32 = arith.constant 0 : index
      %37 = vector.load %arg6[%c0_29, %c0_30, %c0_31, %c0_32] : memref<1x1x2x384xbf16, #tpu.memory_space<vmem>>, vector<1x1x2x384xbf16>
      %38 = vector.shape_cast %37 : vector<1x1x2x384xbf16> to vector<2x384xbf16>
      %39 = vector.shape_cast %36 : vector<2x384xbf16> to vector<1x1x2x384xbf16>
      tpu.vector_store %arg6[%c0_29, %c0_30, %c0_31, %c0_32], %39 {strides = array<i32>} : memref<1x1x2x384xbf16, #tpu.memory_space<vmem>>, vector<1x1x2x384xbf16>,
      %40 = vector.broadcast %0 : vector<1x384xf32> to vector<2x384xf32>
      %41 = arith.mulf %35, %40 : vector<2x384xf32>
      %cst_33 = arith.constant dense<0.000000e+00> : vector<2xf32>
      %42 = vector.multi_reduction <add>, %41, %cst_33 [1] : vector<2x384xf32> to vector<2xf32>
      %43 = vector.shape_cast %42 : vector<2xf32> to vector<2x1xf32>
      %c0_34 = arith.constant 0 : index
      %c0_35 = arith.constant 0 : index
      %c0_36 = arith.constant 0 : index
      %c0_37 = arith.constant 0 : index
      %44 = vector.load %arg7[%c0_34, %c0_35, %c0_36, %c0_37] : memref<1x1x2x2xf32, #tpu.memory_space<vmem>>, vector<1x1x2x1xf32>
      %45 = vector.shape_cast %44 : vector<1x1x2x1xf32> to vector<2x1xf32>
      %46 = vector.shape_cast %43 : vector<2x1xf32> to vector<1x1x2x1xf32>
      tpu.vector_store %arg7[%c0_34, %c0_35, %c0_36, %c0_37], %46 {strides = array<i32>} : memref<1x1x2x2xf32, #tpu.memory_space<vmem>>, vector<1x1x2x1xf32>,
      %47 = arith.mulf %41, %35 : vector<2x384xf32>
      %cst_38 = arith.constant dense<0.000000e+00> : vector<2xf32>
      %48 = vector.multi_reduction <add>, %47, %cst_38 [1] : vector<2x384xf32> to vector<2xf32>
      %49 = vector.shape_cast %48 : vector<2xf32> to vector<2x1xf32>
      %c0_39 = arith.constant 0 : index
      %c0_40 = arith.constant 0 : index
      %c0_41 = arith.constant 0 : index
      %c1_42 = arith.constant 1 : index
      %50 = vector.load %arg7[%c0_39, %c0_40, %c0_41, %c1_42] : memref<1x1x2x2xf32, #tpu.memory_space<vmem>>, vector<1x1x2x1xf32>
      %51 = vector.shape_cast %50 : vector<1x1x2x1xf32> to vector<2x1xf32>
      %52 = vector.shape_cast %49 : vector<2x1xf32> to vector<1x1x2x1xf32>
      tpu.vector_store %arg7[%c0_39, %c0_40, %c0_41, %c1_42], %52 {strides = array<i32>} : memref<1x1x2x2xf32, #tpu.memory_space<vmem>>, vector<1x1x2x1xf32>,
    } else {
    }
    return
  }
  func.func @transform_0(%arg0: i32, %arg1: i32, %arg2: i32) -> (i32, i32, i32) {
    %c0_i32 = arith.constant 0 : i32
    %c0_i32_0 = arith.constant 0 : i32
    %c0_i32_1 = arith.constant 0 : i32
    return %arg0, %c0_i32, %c0_i32_0 : i32, i32, i32
  }
  func.func @transform_1(%arg0: i32, %arg1: i32, %arg2: i32) -> (i32, i32, i32, i32) {
    %c0_i32 = arith.constant 0 : i32
    %c0_i32_0 = arith.constant 0 : i32
    %c0_i32_1 = arith.constant 0 : i32
    return %arg2, %c0_i32, %arg1, %c0_i32_0 : i32, i32, i32, i32
  }
  func.func @transform_2(%arg0: i32, %arg1: i32, %arg2: i32) -> (i32, i32) {
    %c0_i32 = arith.constant 0 : i32
    %c0_i32_0 = arith.constant 0 : i32
    %c0_i32_1 = arith.constant 0 : i32
    return %c0_i32, %c0_i32_0 : i32, i32
  }
  func.func @transform_3(%arg0: i32, %arg1: i32, %arg2: i32) -> (i32, i32, i32, i32) {
    %c0_i32 = arith.constant 0 : i32
    %c0_i32_0 = arith.constant 0 : i32
    return %arg0, %arg2, %arg1, %c0_i32 : i32, i32, i32, i32
  }
  func.func @transform_4(%arg0: i32, %arg1: i32, %arg2: i32) -> (i32, i32, i32, i32) {
    %c0_i32 = arith.constant 0 : i32
    %c0_i32_0 = arith.constant 0 : i32
    return %arg0, %arg2, %arg1, %c0_i32 : i32, i32, i32, i32
  }
}

</mosaic_0001>

<llo_original>
// kernel: upconv_forward.1
$region0: #{upconv_forward.1}
  #allocation0 [shape = 'u32[]', space=smem, size = 0x4, offset = 0x4, fixed_abs, tag = 'smem constant byte address 0x4 - core index']
  #allocation1 [shape = 'u32[144,128]{1,0:T(1,128)}', space=vmem, size = 0x12000, scoped, tag = 'internal scratch']
  %s0 = inlined_call_operand.vmem [shape: bf16[2,4,512], index: 0, kind: input, shape index: {}]
  %s1 = inlined_call_operand.vmem [shape: bf16[4,9,2,4], index: 1, kind: input, shape index: {}]
  %s2 = inlined_call_operand.vmem [shape: f32[1,384], index: 2, kind: input, shape index: {}]
  %s3 = inlined_call_operand.vmem [shape: bf16[2,4,2,384], index: 3, kind: output, shape index: {0}]
  %s4 = inlined_call_operand.vmem [shape: f32[2,4,2,2], index: 4, kind: output, shape index: {1}]
  %5 = xla_tuple %s3, %s4
  %s6 = sld [smem:[#allocation0]]
  $region69: #{upconv_forward.1} parent=0
    _
  %s8 = ssub.s32 1, %s6
  %s9 = scalar_select 0, %s8, %s6
  loop: start=0, step=1, limit=10
  $region2: #{upconv_forward.1} parent=0 // loop_pre_header
    _
  $region3: #{upconv_forward.1} parent=0 // loop_header
    %s11 = sphi 0, %s15
    %p12 = scmp.ge.s32.totalorder %s11, 10
    %s18 = sphi 0, %s37
    %s19 = sphi 0, %s33
    %s20 = sphi 0, %s29
    %s21 = sphi 0, %s18
    %s22 = sphi 0, %s19
    %s23 = sphi 0, %s20
    %s24 = sphi 0, %s21
    %s25 = sphi 0, %s22
    %s26 = sphi 0, %s23
    %s40 = sphi 0, %s42
    %s43 = sphi 0, %s40
    %s44 = sphi 0, %s43
    %s60 = sphi 0, %s44
    %s68 = sphi 0, %s70
    %s71 = sphi 0, %s68
    %s72 = sphi 0, %s71
    %s88 = sphi 0, %s72
    %s92 = sphi 0, %s92
    %s94 = sphi 0, %s92
    %s95 = sphi 0, %s94
    %s109 = sphi 0, %s95
    %s119 = sphi 0, %s121
    %s122 = sphi 0, %s119
    %s123 = sphi 0, %s122
    %s139 = sphi 0, %s123
    %s149 = sphi 0, %s151
    %s152 = sphi 0, %s149
    %s153 = sphi 0, %s152
    %s169 = sphi 0, %s153
  $region4: #{upconv_forward.1} parent=0 // loop_header_branch
    %14 = sbr.rel (%p12) target = $region8
  $region5: #{upconv_forward.1} parent=0 // loop_body
    %s16 = ssub.s32 %s11, 1
    %s17 = ssub.s32 %s11, 2
    %s27 = sadd.s32 1, %s20
    %p28 = scmp.ge.s32.totalorder %s27, 4
    %s29 = scalar_select %p28, 0, %s27
    %s30 = sadd.s32 1, %s19
    %s31 = scalar_select %p28, %s30, %s19
    %p32 = scmp.ge.s32.totalorder %s31, 1
    %s33 = scalar_select %p32, 0, %s31
    %s34 = sadd.s32 1, %s18
    %s35 = scalar_select %p32, %s34, %s18
    %p36 = scmp.ge.s32.totalorder %s35, 2
    %s37 = scalar_select %p36, 0, %s35
    %s38 = ssub.s32 %s18, %s37
    %p39 = scmp.eq.s32.totalorder %s38, 0
    %s41 = sadd.s32 %s40, 1
    %s42 = scalar_select %p39, %s40, %s41
    %p45 = pneg %p39
    %p46 = scmp.eq.s32.totalorder %s11, 7
    %p47 = por %p45, %p46
    %p48 = scmp.ne.s32.totalorder %s40, %s43
    %p49 = scmp.eq.s32.totalorder %s11, 0
    %p50 = por %p48, %p49
    %p51 = scmp.ne.s32.totalorder %s40, %s43
    %p52 = scmp.eq.s32.totalorder %s16, 7
    %p53 = por %p51, %p52
    %p54 = scmp.ne.s32.totalorder %s43, %s44
    %p55 = scmp.eq.s32.totalorder %s16, 0
    %p56 = por %p54, %p55
    %p57 = scmp.ne.s32.totalorder %s43, %s44
    %p58 = scmp.eq.s32.totalorder %s17, 7
    %p59 = por %p57, %p58
    %p61 = scmp.ne.s32.totalorder %s44, %s60
    %p62 = scmp.eq.s32.totalorder %s17, 0
    %p63 = por %p61, %p62
    %s64 = ssub.s32 %s20, %s29
    %s65 = ssub.s32 %s19, %s33
    %s66 = sor.u32 %s64, %s65
    %p67 = scmp.eq.s32.totalorder %s66, 0
    %s69 = sadd.s32 %s68, 1
    %s70 = scalar_select %p67, %s68, %s69
    %p73 = pneg %p67
    %p74 = scmp.eq.s32.totalorder %s11, 7
    %p75 = por %p73, %p74
    %p76 = scmp.ne.s32.totalorder %s68, %s71
    %p77 = scmp.eq.s32.totalorder %s11, 0
    %p78 = por %p76, %p77
    %p79 = scmp.ne.s32.totalorder %s68, %s71
    %p80 = scmp.eq.s32.totalorder %s16, 7
    %p81 = por %p79, %p80
    %p82 = scmp.ne.s32.totalorder %s71, %s72
    %p83 = scmp.eq.s32.totalorder %s16, 0
    %p84 = por %p82, %p83
    %p85 = scmp.ne.s32.totalorder %s71, %s72
    %p86 = scmp.eq.s32.totalorder %s17, 7
    %p87 = por %p85, %p86
    %p89 = scmp.ne.s32.totalorder %s72, %s88
    %p90 = scmp.eq.s32.totalorder %s17, 0
    %p91 = por %p89, %p90
    %s93 = sadd.s32 %s92, 1
    %p96 = scmp.eq.s32.totalorder %s11, 7
    %p97 = scmp.ne.s32.totalorder %s92, %s94
    %p98 = scmp.eq.s32.totalorder %s11, 0
    %p99 = por %p97, %p98
    %p100 = scmp.ne.s32.totalorder %s92, %s94
    %p101 = scmp.eq.s32.totalorder %s16, 7
    %p102 = por %p100, %p101
    %p103 = scmp.ne.s32.totalorder %s94, %s95
    %p104 = scmp.eq.s32.totalorder %s16, 0
    %p105 = por %p103, %p104
    %p106 = scmp.ne.s32.totalorder %s94, %s95
    %p107 = scmp.eq.s32.totalorder %s17, 7
    %p108 = por %p106, %p107
    %p110 = scmp.ne.s32.totalorder %s95, %s109
    %p111 = scmp.eq.s32.totalorder %s17, 0
    %p112 = por %p110, %p111
    %s113 = ssub.s32 %s18, %s37
    %s114 = ssub.s32 %s20, %s29
    %s115 = sor.u32 %s113, %s114
    %s116 = ssub.s32 %s19, %s33
    %s117 = sor.u32 %s115, %s116
    %p118 = scmp.eq.s32.totalorder %s117, 0
    %s120 = sadd.s32 %s119, 1
    %s121 = scalar_select %p118, %s119, %s120
    %p124 = pneg %p118
    %p125 = scmp.eq.s32.totalorder %s11, 7
    %p126 = por %p124, %p125
    %p127 = scmp.ne.s32.totalorder %s119, %s122
    %p128 = scmp.eq.s32.totalorder %s11, 0
    %p129 = por %p127, %p128
    %p130 = scmp.ne.s32.totalorder %s119, %s122
    %p131 = scmp.eq.s32.totalorder %s16, 7
    %p132 = por %p130, %p131
    %p133 = scmp.ne.s32.totalorder %s122, %s123
    %p134 = scmp.eq.s32.totalorder %s16, 0
    %p135 = por %p133, %p134
    %p136 = scmp.ne.s32.totalorder %s122, %s123
    %p137 = scmp.eq.s32.totalorder %s17, 7
    %p138 = por %p136, %p137
    %p140 = scmp.ne.s32.totalorder %s123, %s139
    %p141 = scmp.eq.s32.totalorder %s17, 0
    %p142 = por %p140, %p141
    %s143 = ssub.s32 %s18, %s37
    %s144 = ssub.s32 %s20, %s29
    %s145 = sor.u32 %s143, %s144
    %s146 = ssub.s32 %s19, %s33
    %s147 = sor.u32 %s145, %s146
    %p148 = scmp.eq.s32.totalorder %s147, 0
    %s150 = sadd.s32 %s149, 1
    %s151 = scalar_select %p148, %s149, %s150
    %p154 = pneg %p148
    %p155 = scmp.eq.s32.totalorder %s11, 7
    %p156 = por %p154, %p155
    %p157 = scmp.ne.s32.totalorder %s149, %s152
    %p158 = scmp.eq.s32.totalorder %s11, 0
    %p159 = por %p157, %p158
    %p160 = scmp.ne.s32.totalorder %s149, %s152
    %p161 = scmp.eq.s32.totalorder %s16, 7
    %p162 = por %p160, %p161
    %p163 = scmp.ne.s32.totalorder %s152, %s153
    %p164 = scmp.eq.s32.totalorder %s16, 0
    %p165 = por %p163, %p164
    %p166 = scmp.ne.s32.totalorder %s152, %s153
    %p167 = scmp.eq.s32.totalorder %s17, 7
    %p168 = por %p166, %p167
    %p170 = scmp.ne.s32.totalorder %s153, %s169
    %p171 = scmp.eq.s32.totalorder %s17, 0
    %p172 = por %p170, %p171
    %p173 = scmp.le.s32.totalorder 1, %s11
    %p174 = scmp.lt.s32.totalorder %s11, 9
    %p175 = pnand %p173, %p174
    %p176 = pneg %p175
    // Predicated region
    $region9: #{upconv_forward.1} parent=5 // pred_check
      _
    $region10: #{upconv_forward.1} parent=5 // pred_check_branch
      %178 = sbr.rel (%p175) target = $region12
    $region11: #{upconv_forward.1} parent=5 // pred_region
      %s179 = ssub.s32 %s11, 1
      // Predicated region
      $region13: #{upconv_forward.1} parent=11 // pred_check
        %p180 = pneg %p105
      $region14: #{upconv_forward.1} parent=11 // pred_check_branch
        %182 = sbr.rel (%p180) target = $region16
      $region15: #{upconv_forward.1} parent=11 // pred_region
        _
      $region16: #{upconv_forward.1} parent=11 // pred_fallthru
        _
    $region12: #{upconv_forward.1} parent=5 // pred_fallthru
      _
    %p183 = scmp.lt.s32.totalorder %s11, 8
    // Predicated region
    $region17: #{upconv_forward.1} parent=5 // pred_check
      %p184 = pneg %p183
    $region18: #{upconv_forward.1} parent=5 // pred_check_branch
      %186 = sbr.rel (%p184) target = $region20
    $region19: #{upconv_forward.1} parent=5 // pred_region
      // Predicated region
      $region21: #{upconv_forward.1} parent=19 // pred_check
        %p187 = pneg %p50
      $region22: #{upconv_forward.1} parent=19 // pred_check_branch
        %189 = sbr.rel (%p187) target = $region24
      $region23: #{upconv_forward.1} parent=19 // pred_region
        %p190 = scmp.lt.s32.totalorder %s18, 1
        %s191 = scalar_select %p190, %s18, 1
        %s192 = smul.addr %s191, 4
        %s193 = smul.addr %s192, 2
        %s194 = scalar_lea.vmem %s0, %s193
      $region24: #{upconv_forward.1} parent=19 // pred_fallthru
        _
      // Predicated region
      $region25: #{upconv_forward.1} parent=19 // pred_check
        %p195 = pneg %p78
      $region26: #{upconv_forward.1} parent=19 // pred_check_branch
        %197 = sbr.rel (%p195) target = $region28
      $region27: #{upconv_forward.1} parent=19 // pred_region
        %p198 = scmp.lt.s32.totalorder %s20, 3
        %s199 = scalar_select %p198, %s20, 3
        %p200 = scmp.lt.s32.totalorder %s19, 0
        %s201 = scalar_select %p200, %s19, 0
        %s202 = smul.addr %s199, 9
        %s203 = sadd.s32 %s201, %s202
        %s204 = scalar_lea.vmem %s1, %s203
      $region28: #{upconv_forward.1} parent=19 // pred_fallthru
        _
    $region20: #{upconv_forward.1} parent=5 // pred_fallthru
      _
    %p205 = scmp.le.s32.totalorder 1, %s11
    %p206 = scmp.lt.s32.totalorder %s11, 9
    %p207 = pnand %p205, %p206
    %p208 = pneg %p207
    // Predicated region
    $region29: #{upconv_forward.1} parent=5 // pred_check
      _
    $region30: #{upconv_forward.1} parent=5 // pred_check_branch
      %210 = sbr.rel (%p207) target = $region32
    $region31: #{upconv_forward.1} parent=5 // pred_region
      %s211 = ssub.s32 %s11, 1
      %p212 = scmp.lt.s32.totalorder %s21, 1
      %s213 = scalar_select %p212, %s21, 1
      %s214 = smul.addr %s213, 4
      %s215 = smul.addr %s214, 2
      %s216 = scalar_lea.vmem %s0, %s215
      %p217 = pneg %p56
      %p218 = pneg %p53
      %p219 = scmp.lt.s32.totalorder %s23, 3
      %s220 = scalar_select %p219, %s23, 3
      %p221 = scmp.lt.s32.totalorder %s22, 0
      %s222 = scalar_select %p221, %s22, 0
      %s223 = smul.addr %s220, 9
      %s224 = sadd.s32 %s222, %s223
      %s225 = scalar_lea.vmem %s1, %s224
      %p226 = pneg %p84
      %p227 = pneg %p81
      %p228 = pneg %p105
      %p229 = pneg %p102
      %p230 = pneg %p135
      %p231 = pneg %p132
      %p232 = scmp.lt.s32.totalorder %s21, 1
      %s233 = scalar_select %p232, %s21, 1
      %p234 = scmp.lt.s32.totalorder %s23, 3
      %s235 = scalar_select %p234, %s23, 3
      %p236 = scmp.lt.s32.totalorder %s22, 0
      %s237 = scalar_select %p236, %s22, 0
      %s238 = smul.addr %s237, 3
      %s239 = smul.addr %s235, 3
      %s240 = sadd.s32 %s238, %s239
      %s241 = smul.addr %s233, 12
      %s242 = sadd.s32 %s240, %s241
      %s243 = scalar_lea.vmem %s3, %s242
      %p244 = pneg %p165
      %p245 = pneg %p162
      %p246 = scmp.lt.s32.totalorder %s21, 1
      %s247 = scalar_select %p246, %s21, 1
      %p248 = scmp.lt.s32.totalorder %s23, 3
      %s249 = scalar_select %p248, %s23, 3
      %p250 = scmp.lt.s32.totalorder %s22, 0
      %s251 = scalar_select %p250, %s22, 0
      %s252 = sadd.s32 %s251, %s249
      %s253 = smul.addr %s247, 4
      %s254 = sadd.s32 %s252, %s253
      %s255 = smul.addr %s254, 2
      %s256 = scalar_lea.vmem %s4, %s255
      %p257 = scmp.lt.s32.totalorder %s21, 1
      %s258 = scalar_select %p257, %s21, 1
      %s259 = smul.addr %s258, 4
      %s260 = smul.addr %s259, 2
      %s261 = scalar_lea.vmem %s0, %s260
      %p262 = scmp.lt.s32.totalorder %s23, 3
      %s263 = scalar_select %p262, %s23, 3
      %p264 = scmp.lt.s32.totalorder %s22, 0
      %s265 = scalar_select %p264, %s22, 0
      %s266 = smul.addr %s263, 9
      %s267 = sadd.s32 %s265, %s266
      %s268 = scalar_lea.vmem %s1, %s267
      %p269 = scmp.lt.s32.totalorder %s21, 1
      %s270 = scalar_select %p269, %s21, 1
      %p271 = scmp.lt.s32.totalorder %s23, 3
      %s272 = scalar_select %p271, %s23, 3
      %p273 = scmp.lt.s32.totalorder %s22, 0
      %s274 = scalar_select %p273, %s22, 0
      %s275 = smul.addr %s274, 3
      %s276 = smul.addr %s272, 3
      %s277 = sadd.s32 %s275, %s276
      %s278 = smul.addr %s270, 12
      %s279 = sadd.s32 %s277, %s278
      %s280 = scalar_lea.vmem %s3, %s279
      %p281 = scmp.lt.s32.totalorder %s21, 1
      %s282 = scalar_select %p281, %s21, 1
      %p283 = scmp.lt.s32.totalorder %s23, 3
      %s284 = scalar_select %p283, %s23, 3
      %p285 = scmp.lt.s32.totalorder %s22, 0
      %s286 = scalar_select %p285, %s22, 0
      %s287 = sadd.s32 %s286, %s284
      %s288 = smul.addr %s282, 4
      %s289 = sadd.s32 %s287, %s288
      %s290 = smul.addr %s289, 2
      %s291 = scalar_lea.vmem %s4, %s290
      %v293 = vld [vmem:[%s2] sm:$0x7]
      %p294 = scmp.eq.s32.totalorder %s23, 0
      // Predicated region
      $region33: #{upconv_forward.1} parent=31 // pred_check
        %p295 = pneg %p294
      $region34: #{upconv_forward.1} parent=31 // pred_check_branch
        %297 = sbr.rel (%p295) target = $region36
      $region35: #{upconv_forward.1} parent=31 // pred_region
        %v298 = vld [vmem:[%s268] sm:$0x1]
        %v299 = vld [vmem:[%s261] sm:$0x3f]
        %s300 = scalar_lea.vmem %s268, 1
        %v301 = vld [vmem:[%s300] sm:$0x1]
        %v302 = vld [vmem:[%s261] sm:$0xff]
        %v304 = vcombine.high %v302, %v302
        %v306 = vunpack.c.l.s4 1983009808
        %v307 = vunpack.c.0.s8 %v306
        %v308 = vlaneseq
        %v309 = vshrl.u32 %v308, 7
        %v310 = vsub.s32 %v307, %v309
        %v311 = vrot.slane %v302, %v310
        %v313 = vunpack.c.l.s4 1983009808
        %v314 = vunpack.c.0.s8 %v313
        %v315 = vlaneseq
        %v316 = vshrl.u32 %v315, 7
        %v317 = vsub.s32 %v314, %v316
        %v318 = vrot.slane %v304, %v317
        %v319 = vcombine.high %v311, %v311
        %v320 = vcombine.high %v318, %v318
        %321 = vrot.lane.b32.xlu0 %v311, 127
        %v322 = vpop.permute.xlu0 %321
        %323 = vrot.lane.b32.xlu0 %v319, 127
        %v324 = vpop.permute.xlu0 %323
        %325 = vrot.lane.b32.xlu0 %v318, 127
        %v326 = vpop.permute.xlu0 %325
        %327 = vrot.lane.b32.xlu0 %v320, 127
        %v328 = vpop.permute.xlu0 %327
        %vm329 = vcmask 1039360
        %v330 = vsel %vm329, %v322, %v324
        %v331 = vsel %vm329, %v324, %v326
        %v332 = vsel %vm329, %v326, %v328
        %vm333 = vcmask 31744
        %v335 = vsel %vm333, %v301, 0
        %vm337 = vcmask 1041408
        %v339 = vsel %vm337, %v330, 0
        %v342 = vsel %vm337, %v331, 0
        %v345 = vsel %vm337, %v332, 0
        %347 = vmatprep.subr.bf16.mxu0 %v342
        %348 = vmatpush1.bf16.msra.mxu0 %v339
        %349 = vmatprep.subr.bf16.mxu0 0
        %350 = vmatpush1.bf16.msra.mxu0 0
        %351 = vmatprep.subr.bf16.mxu0 0
        %352 = vmatpush1.bf16.msra.mxu0 0
        %353 = vmatprep.subr.bf16.mxu0 0
        %354 = vmatpush1.bf16.msra.mxu0 0
        %355 = vmatprep.subr.bf16.mxu0 0
        %356 = vmatpush1.bf16.msra.mxu0 0
        %357 = vmatprep.subr.bf16.mxu0 0
        %358 = vmatpush1.bf16.msra.mxu0 0
        %359 = vmatprep.subr.bf16.mxu0 0
        %360 = vmatpush1.bf16.msra.mxu0 0
        %361 = vmatprep.subr.bf16.mxu0 0
        %362 = vmatpush1.bf16.msra.mxu0 0
        %363 = vmatprep.subr.bf16.mxu0 0
        %364 = vmatpush1.bf16.msra.mxu0 0
        %365 = vmatprep.subr.bf16.mxu0 0
        %366 = vmatpush1.bf16.msra.mxu0 0
        %367 = vmatprep.subr.bf16.mxu0 0
        %368 = vmatpush1.bf16.msra.mxu0 0
        %369 = vmatprep.subr.bf16.mxu0 0
        %370 = vmatpush1.bf16.msra.mxu0 0
        %371 = vmatprep.subr.bf16.mxu0 0
        %372 = vmatpush1.bf16.msra.mxu0 0
        %373 = vmatprep.subr.bf16.mxu0 0
        %374 = vmatpush1.bf16.msra.mxu0 0
        %375 = vmatprep.subr.bf16.mxu0 0
        %376 = vmatpush1.bf16.msra.mxu0 0
        %377 = vmatprep.subr.bf16.mxu0 0
        %378 = vmatpush1.bf16.msra.mxu0 0
        %379 = vmatprep.mubr.bf16.mxu0 0
        %380 = vmatmul.mubr.bf16.gmra.mrb[0].mxu0 %v335
        %v381 = vpop.f32.mrb[0].mxu0
        %v382 = vadd.f32 0.0, %v381
        %v383 = vpop.f32.mrb[0].mxu0
        %v384 = vadd.f32 0.0, %v383
        %v385 = vpop.f32.mrb[0].mxu0
        %v386 = vpop.f32.mrb[0].mxu0
        %387 = vdwg.mxu0
        %388 = vmatprep.subr.bf16.mxu0 0
        %389 = vmatpush1.bf16.msra.mxu0 %v345
        %390 = vmatprep.subr.bf16.mxu0 0
        %391 = vmatpush1.bf16.msra.mxu0 0
        %392 = vmatprep.subr.bf16.mxu0 0
        %393 = vmatpush1.bf16.msra.mxu0 0
        %394 = vmatprep.subr.bf16.mxu0 0
        %395 = vmatpush1.bf16.msra.mxu0 0
        %396 = vmatprep.subr.bf16.mxu0 0
        %397 = vmatpush1.bf16.msra.mxu0 0
        %398 = vmatprep.subr.bf16.mxu0 0
        %399 = vmatpush1.bf16.msra.mxu0 0
        %400 = vmatprep.subr.bf16.mxu0 0
        %401 = vmatpush1.bf16.msra.mxu0 0
        %402 = vmatprep.subr.bf16.mxu0 0
        %403 = vmatpush1.bf16.msra.mxu0 0
        %404 = vmatprep.subr.bf16.mxu0 0
        %405 = vmatpush1.bf16.msra.mxu0 0
        %406 = vmatprep.subr.bf16.mxu0 0
        %407 = vmatpush1.bf16.msra.mxu0 0
        %408 = vmatprep.subr.bf16.mxu0 0
        %409 = vmatpush1.bf16.msra.mxu0 0
        %410 = vmatprep.subr.bf16.mxu0 0
        %411 = vmatpush1.bf16.msra.mxu0 0
        %412 = vmatprep.subr.bf16.mxu0 0
        %413 = vmatpush1.bf16.msra.mxu0 0
        %414 = vmatprep.subr.bf16.mxu0 0
        %415 = vmatpush1.bf16.msra.mxu0 0
        %416 = vmatprep.subr.bf16.mxu0 0
        %417 = vmatpush1.bf16.msra.mxu0 0
        %418 = vmatprep.subr.bf16.mxu0 0
        %419 = vmatpush1.bf16.msra.mxu0 0
        %420 = vmatprep.mubr.bf16.mxu0 0
        %421 = vmatmul.mubr.bf16.gmra.mrb[0].mxu0 %v335
        %v422 = vpop.f32.mrb[0].mxu0
        %v423 = vadd.f32 0.0, %v422
        %v424 = vpop.f32.mrb[0].mxu0
        %v425 = vpop.f32.mrb[0].mxu0
        %v426 = vpop.f32.mrb[0].mxu0
        %427 = vdwg.mxu0
        %v429 = vcombine.high %v299, %v299
        %v431 = vunpack.c.l.s4 1983009808
        %v432 = vunpack.c.0.s8 %v431
        %v433 = vlaneseq
        %v434 = vshrl.u32 %v433, 7
        %v435 = vsub.s32 %v432, %v434
        %v436 = vrot.slane %v299, %v435
        %v438 = vunpack.c.l.s4 1983009808
        %v439 = vunpack.c.0.s8 %v438
        %v440 = vlaneseq
        %v441 = vshrl.u32 %v440, 7
        %v442 = vsub.s32 %v439, %v441
        %v443 = vrot.slane %v429, %v442
        %v444 = vcombine.high %v436, %v436
        %v446 = vsel %vm333, %v298, 0
        %v449 = vsel %vm337, %v436, 0
        %v452 = vsel %vm337, %v444, 0
        %v455 = vsel %vm337, %v443, 0
        %457 = vmatprep.subr.bf16.mxu0 %v452
        %458 = vmatpush1.bf16.msra.mxu0 %v449
        %459 = vmatprep.subr.bf16.mxu0 0
        %460 = vmatpush1.bf16.msra.mxu0 0
        %461 = vmatprep.subr.bf16.mxu0 0
        %462 = vmatpush1.bf16.msra.mxu0 0
        %463 = vmatprep.subr.bf16.mxu0 0
        %464 = vmatpush1.bf16.msra.mxu0 0
        %465 = vmatprep.subr.bf16.mxu0 0
        %466 = vmatpush1.bf16.msra.mxu0 0
        %467 = vmatprep.subr.bf16.mxu0 0
        %468 = vmatpush1.bf16.msra.mxu0 0
        %469 = vmatprep.subr.bf16.mxu0 0
        %470 = vmatpush1.bf16.msra.mxu0 0
        %471 = vmatprep.subr.bf16.mxu0 0
        %472 = vmatpush1.bf16.msra.mxu0 0
        %473 = vmatprep.subr.bf16.mxu0 0
        %474 = vmatpush1.bf16.msra.mxu0 0
        %475 = vmatprep.subr.bf16.mxu0 0
        %476 = vmatpush1.bf16.msra.mxu0 0
        %477 = vmatprep.subr.bf16.mxu0 0
        %478 = vmatpush1.bf16.msra.mxu0 0
        %479 = vmatprep.subr.bf16.mxu0 0
        %480 = vmatpush1.bf16.msra.mxu0 0
        %481 = vmatprep.subr.bf16.mxu0 0
        %482 = vmatpush1.bf16.msra.mxu0 0
        %483 = vmatprep.subr.bf16.mxu0 0
        %484 = vmatpush1.bf16.msra.mxu0 0
        %485 = vmatprep.subr.bf16.mxu0 0
        %486 = vmatpush1.bf16.msra.mxu0 0
        %487 = vmatprep.subr.bf16.mxu0 0
        %488 = vmatpush1.bf16.msra.mxu0 0
        %489 = vmatprep.mubr.bf16.mxu0 0
        %490 = vmatmul.mubr.bf16.gmra.mrb[0].mxu0 %v446
        %v491 = vpop.f32.mrb[0].mxu0
        %v492 = vadd.f32 %v382, %v491
        %v493 = vpop.f32.mrb[0].mxu0
        %v494 = vadd.f32 %v384, %v493
        %v495 = vpop.f32.mrb[0].mxu0
        %v496 = vpop.f32.mrb[0].mxu0
        %497 = vdwg.mxu0
        %498 = vmatprep.subr.bf16.mxu0 0
        %499 = vmatpush1.bf16.msra.mxu0 %v455
        %500 = vmatprep.subr.bf16.mxu0 0
        %501 = vmatpush1.bf16.msra.mxu0 0
        %502 = vmatprep.subr.bf16.mxu0 0
        %503 = vmatpush1.bf16.msra.mxu0 0
        %504 = vmatprep.subr.bf16.mxu0 0
        %505 = vmatpush1.bf16.msra.mxu0 0
        %506 = vmatprep.subr.bf16.mxu0 0
        %507 = vmatpush1.bf16.msra.mxu0 0
        %508 = vmatprep.subr.bf16.mxu0 0
        %509 = vmatpush1.bf16.msra.mxu0 0
        %510 = vmatprep.subr.bf16.mxu0 0
        %511 = vmatpush1.bf16.msra.mxu0 0
        %512 = vmatprep.subr.bf16.mxu0 0
        %513 = vmatpush1.bf16.msra.mxu0 0
        %514 = vmatprep.subr.bf16.mxu0 0
        %515 = vmatpush1.bf16.msra.mxu0 0
        %516 = vmatprep.subr.bf16.mxu0 0
        %517 = vmatpush1.bf16.msra.mxu0 0
        %518 = vmatprep.subr.bf16.mxu0 0
        %519 = vmatpush1.bf16.msra.mxu0 0
        %520 = vmatprep.subr.bf16.mxu0 0
        %521 = vmatpush1.bf16.msra.mxu0 0
        %522 = vmatprep.subr.bf16.mxu0 0
        %523 = vmatpush1.bf16.msra.mxu0 0
        %524 = vmatprep.subr.bf16.mxu0 0
        %525 = vmatpush1.bf16.msra.mxu0 0
        %526 = vmatprep.subr.bf16.mxu0 0
        %527 = vmatpush1.bf16.msra.mxu0 0
        %528 = vmatprep.subr.bf16.mxu0 0
        %529 = vmatpush1.bf16.msra.mxu0 0
        %530 = vmatprep.mubr.bf16.mxu0 0
        %531 = vmatmul.mubr.bf16.gmra.mrb[0].mxu0 %v446
        %v532 = vpop.f32.mrb[0].mxu0
        %v533 = vadd.f32 %v423, %v532
        %v534 = vpop.f32.mrb[0].mxu0
        %v535 = vpop.f32.mrb[0].mxu0
        %v536 = vpop.f32.mrb[0].mxu0
        %537 = vdwg.mxu0
        %s538 = scalar_lea.vmem %s268, 2
        %v539 = vld [vmem:[%s538] sm:$0x1]
        %v540 = vld [vmem:[%s261] sm:$0xff]
        %v542 = vcombine.high %v540, %v540
        %v544 = vunpack.c.l.s4 1983009808
        %v545 = vunpack.c.0.s8 %v544
        %v546 = vlaneseq
        %v547 = vshrl.u32 %v546, 7
        %v548 = vsub.s32 %v545, %v547
        %v549 = vrot.slane %v540, %v548
        %v551 = vunpack.c.l.s4 1983009808
        %v552 = vunpack.c.0.s8 %v551
        %v553 = vlaneseq
        %v554 = vshrl.u32 %v553, 7
        %v555 = vsub.s32 %v552, %v554
        %v556 = vrot.slane %v542, %v555
        %v557 = vcombine.high %v549, %v549
        %v558 = vcombine.high %v556, %v556
        %559 = vrot.lane.b32.xlu0 %v549, 126
        %v560 = vpop.permute.xlu0 %559
        %561 = vrot.lane.b32.xlu0 %v557, 126
        %v562 = vpop.permute.xlu0 %561
        %563 = vrot.lane.b32.xlu0 %v556, 126
        %v564 = vpop.permute.xlu0 %563
        %565 = vrot.lane.b32.xlu0 %v558, 126
        %v566 = vpop.permute.xlu0 %565
        %vm567 = vcmask 1031168
        %v568 = vsel %vm567, %v560, %v562
        %v569 = vsel %vm567, %v562, %v564
        %v570 = vsel %vm567, %v564, %v566
        %v572 = vsel %vm333, %v539, 0
        %v575 = vsel %vm337, %v568, 0
        %v578 = vsel %vm337, %v569, 0
        %v581 = vsel %vm337, %v570, 0
        %583 = vmatprep.subr.bf16.mxu0 %v578
        %584 = vmatpush1.bf16.msra.mxu0 %v575
        %585 = vmatprep.subr.bf16.mxu0 0
        %586 = vmatpush1.bf16.msra.mxu0 0
        %587 = vmatprep.subr.bf16.mxu0 0
        %588 = vmatpush1.bf16.msra.mxu0 0
        %589 = vmatprep.subr.bf16.mxu0 0
        %590 = vmatpush1.bf16.msra.mxu0 0
        %591 = vmatprep.subr.bf16.mxu0 0
        %592 = vmatpush1.bf16.msra.mxu0 0
        %593 = vmatprep.subr.bf16.mxu0 0
        %594 = vmatpush1.bf16.msra.mxu0 0
        %595 = vmatprep.subr.bf16.mxu0 0
        %596 = vmatpush1.bf16.msra.mxu0 0
        %597 = vmatprep.subr.bf16.mxu0 0
        %598 = vmatpush1.bf16.msra.mxu0 0
        %599 = vmatprep.subr.bf16.mxu0 0
        %600 = vmatpush1.bf16.msra.mxu0 0
        %601 = vmatprep.subr.bf16.mxu0 0
        %602 = vmatpush1.bf16.msra.mxu0 0
        %603 = vmatprep.subr.bf16.mxu0 0
        %604 = vmatpush1.bf16.msra.mxu0 0
        %605 = vmatprep.subr.bf16.mxu0 0
        %606 = vmatpush1.bf16.msra.mxu0 0
        %607 = vmatprep.subr.bf16.mxu0 0
        %608 = vmatpush1.bf16.msra.mxu0 0
        %609 = vmatprep.subr.bf16.mxu0 0
        %610 = vmatpush1.bf16.msra.mxu0 0
        %611 = vmatprep.subr.bf16.mxu0 0
        %612 = vmatpush1.bf16.msra.mxu0 0
        %613 = vmatprep.subr.bf16.mxu0 0
        %614 = vmatpush1.bf16.msra.mxu0 0
        %615 = vmatprep.mubr.bf16.mxu0 0
        %616 = vmatmul.mubr.bf16.gmra.mrb[0].mxu0 %v572
        %v617 = vpop.f32.mrb[0].mxu0
        %v618 = vadd.f32 0.0, %v617
        %v619 = vpop.f32.mrb[0].mxu0
        %v620 = vadd.f32 0.0, %v619
        %v621 = vpop.f32.mrb[0].mxu0
        %v622 = vpop.f32.mrb[0].mxu0
        %623 = vdwg.mxu0
        %624 = vmatprep.subr.bf16.mxu0 0
        %625 = vmatpush1.bf16.msra.mxu0 %v581
        %626 = vmatprep.subr.bf16.mxu0 0
        %627 = vmatpush1.bf16.msra.mxu0 0
        %628 = vmatprep.subr.bf16.mxu0 0
        %629 = vmatpush1.bf16.msra.mxu0 0
        %630 = vmatprep.subr.bf16.mxu0 0
        %631 = vmatpush1.bf16.msra.mxu0 0
        %632 = vmatprep.subr.bf16.mxu0 0
        %633 = vmatpush1.bf16.msra.mxu0 0
        %634 = vmatprep.subr.bf16.mxu0 0
        %635 = vmatpush1.bf16.msra.mxu0 0
        %636 = vmatprep.subr.bf16.mxu0 0
        %637 = vmatpush1.bf16.msra.mxu0 0
        %638 = vmatprep.subr.bf16.mxu0 0
        %639 = vmatpush1.bf16.msra.mxu0 0
        %640 = vmatprep.subr.bf16.mxu0 0
        %641 = vmatpush1.bf16.msra.mxu0 0
        %642 = vmatprep.subr.bf16.mxu0 0
        %643 = vmatpush1.bf16.msra.mxu0 0
        %644 = vmatprep.subr.bf16.mxu0 0
        %645 = vmatpush1.bf16.msra.mxu0 0
        %646 = vmatprep.subr.bf16.mxu0 0
        %647 = vmatpush1.bf16.msra.mxu0 0
        %648 = vmatprep.subr.bf16.mxu0 0
        %649 = vmatpush1.bf16.msra.mxu0 0
        %650 = vmatprep.subr.bf16.mxu0 0
        %651 = vmatpush1.bf16.msra.mxu0 0
        %652 = vmatprep.subr.bf16.mxu0 0
        %653 = vmatpush1.bf16.msra.mxu0 0
        %654 = vmatprep.subr.bf16.mxu0 0
        %655 = vmatpush1.bf16.msra.mxu0 0
        %656 = vmatprep.mubr.bf16.mxu0 0
        %657 = vmatmul.mubr.bf16.gmra.mrb[0].mxu0 %v572
        %v658 = vpop.f32.mrb[0].mxu0
        %v659 = vadd.f32 0.0, %v658
        %v660 = vpop.f32.mrb[0].mxu0
        %v661 = vpop.f32.mrb[0].mxu0
        %v662 = vpop.f32.mrb[0].mxu0
        %663 = vdwg.mxu0
        %v664 = vadd.f32 %v492, %v618
        %v665 = vadd.f32 %v494, %v620
        %v666 = vadd.f32 %v533, %v659
        %s667 = scalar_lea.vmem %s268, 3
        %v668 = vld [vmem:[%s667] sm:$0x1]
        %v669 = vld [vmem:[%s261] sm:$0xff]
        %v671 = vcombine.high %v669, %v669
        %v673 = vunpack.c.l.s4 1983009808
        %v674 = vunpack.c.0.s8 %v673
        %v675 = vlaneseq
        %v676 = vshrl.u32 %v675, 7
        %v677 = vsub.s32 %v674, %v676
        %v678 = vrot.slane %v669, %v677
        %v680 = vunpack.c.l.s4 1983009808
        %v681 = vunpack.c.0.s8 %v680
        %v682 = vlaneseq
        %v683 = vshrl.u32 %v682, 7
        %v684 = vsub.s32 %v681, %v683
        %v685 = vrot.slane %v671, %v684
        %v686 = vcombine.high %v678, %v678
        %v687 = vcombine.high %v685, %v685
        %688 = vrot.lane.b32.xlu0 %v678, 110
        %v689 = vpop.permute.xlu0 %688
        %690 = vrot.lane.b32.xlu0 %v686, 110
        %v691 = vpop.permute.xlu0 %690
        %692 = vrot.lane.b32.xlu0 %v685, 110
        %v693 = vpop.permute.xlu0 %692
        %694 = vrot.lane.b32.xlu0 %v687, 110
        %v695 = vpop.permute.xlu0 %694
        %vm696 = vcmask 900096
        %v697 = vsel %vm696, %v689, %v691
        %v698 = vsel %vm696, %v691, %v693
        %v699 = vsel %vm696, %v693, %v695
        %v701 = vsel %vm333, %v668, 0
        %v704 = vsel %vm337, %v697, 0
        %v707 = vsel %vm337, %v698, 0
        %v710 = vsel %vm337, %v699, 0
        %712 = vmatprep.subr.bf16.mxu0 %v707
        %713 = vmatpush1.bf16.msra.mxu0 %v704
        %714 = vmatprep.subr.bf16.mxu0 0
        %715 = vmatpush1.bf16.msra.mxu0 0
        %716 = vmatprep.subr.bf16.mxu0 0
        %717 = vmatpush1.bf16.msra.mxu0 0
        %718 = vmatprep.subr.bf16.mxu0 0
        %719 = vmatpush1.bf16.msra.mxu0 0
        %720 = vmatprep.subr.bf16.mxu0 0
        %721 = vmatpush1.bf16.msra.mxu0 0
        %722 = vmatprep.subr.bf16.mxu0 0
        %723 = vmatpush1.bf16.msra.mxu0 0
        %724 = vmatprep.subr.bf16.mxu0 0
        %725 = vmatpush1.bf16.msra.mxu0 0
        %726 = vmatprep.subr.bf16.mxu0 0
        %727 = vmatpush1.bf16.msra.mxu0 0
        %728 = vmatprep.subr.bf16.mxu0 0
        %729 = vmatpush1.bf16.msra.mxu0 0
        %730 = vmatprep.subr.bf16.mxu0 0
        %731 = vmatpush1.bf16.msra.mxu0 0
        %732 = vmatprep.subr.bf16.mxu0 0
        %733 = vmatpush1.bf16.msra.mxu0 0
        %734 = vmatprep.subr.bf16.mxu0 0
        %735 = vmatpush1.bf16.msra.mxu0 0
        %736 = vmatprep.subr.bf16.mxu0 0
        %737 = vmatpush1.bf16.msra.mxu0 0
        %738 = vmatprep.subr.bf16.mxu0 0
        %739 = vmatpush1.bf16.msra.mxu0 0
        %740 = vmatprep.subr.bf16.mxu0 0
        %741 = vmatpush1.bf16.msra.mxu0 0
        %742 = vmatprep.subr.bf16.mxu0 0
        %743 = vmatpush1.bf16.msra.mxu0 0
        %744 = vmatprep.mubr.bf16.mxu0 0
        %745 = vmatmul.mubr.bf16.gmra.mrb[0].mxu0 %v701
        %v746 = vpop.f32.mrb[0].mxu0
        %v747 = vadd.f32 0.0, %v746
        %v748 = vpop.f32.mrb[0].mxu0
        %v749 = vadd.f32 0.0, %v748
        %v750 = vpop.f32.mrb[0].mxu0
        %v751 = vpop.f32.mrb[0].mxu0
        %752 = vdwg.mxu0
        %753 = vmatprep.subr.bf16.mxu0 0
        %754 = vmatpush1.bf16.msra.mxu0 %v710
        %755 = vmatprep.subr.bf16.mxu0 0
        %756 = vmatpush1.bf16.msra.mxu0 0
        %757 = vmatprep.subr.bf16.mxu0 0
        %758 = vmatpush1.bf16.msra.mxu0 0
        %759 = vmatprep.subr.bf16.mxu0 0
        %760 = vmatpush1.bf16.msra.mxu0 0
        %761 = vmatprep.subr.bf16.mxu0 0
        %762 = vmatpush1.bf16.msra.mxu0 0
        %763 = vmatprep.subr.bf16.mxu0 0
        %764 = vmatpush1.bf16.msra.mxu0 0
        %765 = vmatprep.subr.bf16.mxu0 0
        %766 = vmatpush1.bf16.msra.mxu0 0
        %767 = vmatprep.subr.bf16.mxu0 0
        %768 = vmatpush1.bf16.msra.mxu0 0
        %769 = vmatprep.subr.bf16.mxu0 0
        %770 = vmatpush1.bf16.msra.mxu0 0
        %771 = vmatprep.subr.bf16.mxu0 0
        %772 = vmatpush1.bf16.msra.mxu0 0
        %773 = vmatprep.subr.bf16.mxu0 0
        %774 = vmatpush1.bf16.msra.mxu0 0
        %775 = vmatprep.subr.bf16.mxu0 0
        %776 = vmatpush1.bf16.msra.mxu0 0
        %777 = vmatprep.subr.bf16.mxu0 0
        %778 = vmatpush1.bf16.msra.mxu0 0
        %779 = vmatprep.subr.bf16.mxu0 0
        %780 = vmatpush1.bf16.msra.mxu0 0
        %781 = vmatprep.subr.bf16.mxu0 0
        %782 = vmatpush1.bf16.msra.mxu0 0
        %783 = vmatprep.subr.bf16.mxu0 0
        %784 = vmatpush1.bf16.msra.mxu0 0
        %785 = vmatprep.mubr.bf16.mxu0 0
        %786 = vmatmul.mubr.bf16.gmra.mrb[0].mxu0 %v701
        %v787 = vpop.f32.mrb[0].mxu0
        %v788 = vadd.f32 0.0, %v787
        %v789 = vpop.f32.mrb[0].mxu0
        %v790 = vpop.f32.mrb[0].mxu0
        %v791 = vpop.f32.mrb[0].mxu0
        %792 = vdwg.mxu0
        %v793 = vadd.f32 %v664, %v747
        %v794 = vadd.f32 %v665, %v749
        %v795 = vadd.f32 %v666, %v788
        %s796 = scalar_lea.vmem %s268, 4
        %v797 = vld [vmem:[%s796] sm:$0x1]
        %v798 = vld [vmem:[%s261] sm:$0xff]
        %v800 = vcombine.high %v798, %v798
        %v802 = vunpack.c.l.s4 1983009808
        %v803 = vunpack.c.0.s8 %v802
        %v804 = vlaneseq
        %v805 = vshrl.u32 %v804, 7
        %v806 = vsub.s32 %v803, %v805
        %v807 = vrot.slane %v798, %v806
        %v809 = vunpack.c.l.s4 1983009808
        %v810 = vunpack.c.0.s8 %v809
        %v811 = vlaneseq
        %v812 = vshrl.u32 %v811, 7
        %v813 = vsub.s32 %v810, %v812
        %v814 = vrot.slane %v800, %v813
        %v815 = vcombine.high %v807, %v807
        %v816 = vcombine.high %v814, %v814
        %817 = vrot.lane.b32.xlu0 %v807, 109
        %v818 = vpop.permute.xlu0 %817
        %819 = vrot.lane.b32.xlu0 %v815, 109
        %v820 = vpop.permute.xlu0 %819
        %821 = vrot.lane.b32.xlu0 %v814, 109
        %v822 = vpop.permute.xlu0 %821
        %823 = vrot.lane.b32.xlu0 %v816, 109
        %v824 = vpop.permute.xlu0 %823
        %vm825 = vcmask 891904
        %v826 = vsel %vm825, %v818, %v820
        %v827 = vsel %vm825, %v820, %v822
        %v828 = vsel %vm825, %v822, %v824
        %v830 = vsel %vm333, %v797, 0
        %v833 = vsel %vm337, %v826, 0
        %v836 = vsel %vm337, %v827, 0
        %v839 = vsel %vm337, %v828, 0
        %841 = vmatprep.subr.bf16.mxu0 %v836
        %842 = vmatpush1.bf16.msra.mxu0 %v833
        %843 = vmatprep.subr.bf16.mxu0 0
        %844 = vmatpush1.bf16.msra.mxu0 0
        %845 = vmatprep.subr.bf16.mxu0 0
        %846 = vmatpush1.bf16.msra.mxu0 0
        %847 = vmatprep.subr.bf16.mxu0 0
        %848 = vmatpush1.bf16.msra.mxu0 0
        %849 = vmatprep.subr.bf16.mxu0 0
        %850 = vmatpush1.bf16.msra.mxu0 0
        %851 = vmatprep.subr.bf16.mxu0 0
        %852 = vmatpush1.bf16.msra.mxu0 0
        %853 = vmatprep.subr.bf16.mxu0 0
        %854 = vmatpush1.bf16.msra.mxu0 0
        %855 = vmatprep.subr.bf16.mxu0 0
        %856 = vmatpush1.bf16.msra.mxu0 0
        %857 = vmatprep.subr.bf16.mxu0 0
        %858 = vmatpush1.bf16.msra.mxu0 0
        %859 = vmatprep.subr.bf16.mxu0 0
        %860 = vmatpush1.bf16.msra.mxu0 0
        %861 = vmatprep.subr.bf16.mxu0 0
        %862 = vmatpush1.bf16.msra.mxu0 0
        %863 = vmatprep.subr.bf16.mxu0 0
        %864 = vmatpush1.bf16.msra.mxu0 0
        %865 = vmatprep.subr.bf16.mxu0 0
        %866 = vmatpush1.bf16.msra.mxu0 0
        %867 = vmatprep.subr.bf16.mxu0 0
        %868 = vmatpush1.bf16.msra.mxu0 0
        %869 = vmatprep.subr.bf16.mxu0 0
        %870 = vmatpush1.bf16.msra.mxu0 0
        %871 = vmatprep.subr.bf16.mxu0 0
        %872 = vmatpush1.bf16.msra.mxu0 0
        %873 = vmatprep.mubr.bf16.mxu0 0
        %874 = vmatmul.mubr.bf16.gmra.mrb[0].mxu0 %v830
        %v875 = vpop.f32.mrb[0].mxu0
        %v876 = vadd.f32 0.0, %v875
        %v877 = vpop.f32.mrb[0].mxu0
        %v878 = vadd.f32 0.0, %v877
        %v879 = vpop.f32.mrb[0].mxu0
        %v880 = vpop.f32.mrb[0].mxu0
        %881 = vdwg.mxu0
        %882 = vmatprep.subr.bf16.mxu0 0
        %883 = vmatpush1.bf16.msra.mxu0 %v839
        %884 = vmatprep.subr.bf16.mxu0 0
        %885 = vmatpush1.bf16.msra.mxu0 0
        %886 = vmatprep.subr.bf16.mxu0 0
        %887 = vmatpush1.bf16.msra.mxu0 0
        %888 = vmatprep.subr.bf16.mxu0 0
        %889 = vmatpush1.bf16.msra.mxu0 0
        %890 = vmatprep.subr.bf16.mxu0 0
        %891 = vmatpush1.bf16.msra.mxu0 0
        %892 = vmatprep.subr.bf16.mxu0 0
        %893 = vmatpush1.bf16.msra.mxu0 0
        %894 = vmatprep.subr.bf16.mxu0 0
        %895 = vmatpush1.bf16.msra.mxu0 0
        %896 = vmatprep.subr.bf16.mxu0 0
        %897 = vmatpush1.bf16.msra.mxu0 0
        %898 = vmatprep.subr.bf16.mxu0 0
        %899 = vmatpush1.bf16.msra.mxu0 0
        %900 = vmatprep.subr.bf16.mxu0 0
        %901 = vmatpush1.bf16.msra.mxu0 0
        %902 = vmatprep.subr.bf16.mxu0 0
        %903 = vmatpush1.bf16.msra.mxu0 0
        %904 = vmatprep.subr.bf16.mxu0 0
        %905 = vmatpush1.bf16.msra.mxu0 0
        %906 = vmatprep.subr.bf16.mxu0 0
        %907 = vmatpush1.bf16.msra.mxu0 0
        %908 = vmatprep.subr.bf16.mxu0 0
        %909 = vmatpush1.bf16.msra.mxu0 0
        %910 = vmatprep.subr.bf16.mxu0 0
        %911 = vmatpush1.bf16.msra.mxu0 0
        %912 = vmatprep.subr.bf16.mxu0 0
        %913 = vmatpush1.bf16.msra.mxu0 0
        %914 = vmatprep.mubr.bf16.mxu0 0
        %915 = vmatmul.mubr.bf16.gmra.mrb[0].mxu0 %v830
        %v916 = vpop.f32.mrb[0].mxu0
        %v917 = vadd.f32 0.0, %v916
        %v918 = vpop.f32.mrb[0].mxu0
        %v919 = vpop.f32.mrb[0].mxu0
        %v920 = vpop.f32.mrb[0].mxu0
        %921 = vdwg.mxu0
        %v922 = vadd.f32 %v793, %v876
        %v923 = vadd.f32 %v794, %v878
        %v924 = vadd.f32 %v795, %v917
        %s925 = scalar_lea.vmem %s268, 5
        %v926 = vld [vmem:[%s925] sm:$0x1]
        %v927 = vld [vmem:[%s261] sm:$0xff]
        %v929 = vcombine.high %v927, %v927
        %v931 = vunpack.c.l.s4 1983009808
        %v932 = vunpack.c.0.s8 %v931
        %v933 = vlaneseq
        %v934 = vshrl.u32 %v933, 7
        %v935 = vsub.s32 %v932, %v934
        %v936 = vrot.slane %v927, %v935
        %v938 = vunpack.c.l.s4 1983009808
        %v939 = vunpack.c.0.s8 %v938
        %v940 = vlaneseq
        %v941 = vshrl.u32 %v940, 7
        %v942 = vsub.s32 %v939, %v941
        %v943 = vrot.slane %v929, %v942
        %v944 = vcombine.high %v936, %v936
        %v945 = vcombine.high %v943, %v943
        %946 = vrot.lane.b32.xlu0 %v936, 108
        %v947 = vpop.permute.xlu0 %946
        %948 = vrot.lane.b32.xlu0 %v944, 108
        %v949 = vpop.permute.xlu0 %948
        %950 = vrot.lane.b32.xlu0 %v943, 108
        %v951 = vpop.permute.xlu0 %950
        %952 = vrot.lane.b32.xlu0 %v945, 108
        %v953 = vpop.permute.xlu0 %952
        %vm954 = vcmask 883712
        %v955 = vsel %vm954, %v947, %v949
        %v956 = vsel %vm954, %v949, %v951
        %v957 = vsel %vm954, %v951, %v953
        %v959 = vsel %vm333, %v926, 0
        %v962 = vsel %vm337, %v955, 0
        %v965 = vsel %vm337, %v956, 0
        %v968 = vsel %vm337, %v957, 0
        %970 = vmatprep.subr.bf16.mxu0 %v965
        %971 = vmatpush1.bf16.msra.mxu0 %v962
        %972 = vmatprep.subr.bf16.mxu0 0
        %973 = vmatpush1.bf16.msra.mxu0 0
        %974 = vmatprep.subr.bf16.mxu0 0
        %975 = vmatpush1.bf16.msra.mxu0 0
        %976 = vmatprep.subr.bf16.mxu0 0
        %977 = vmatpush1.bf16.msra.mxu0 0
        %978 = vmatprep.subr.bf16.mxu0 0
        %979 = vmatpush1.bf16.msra.mxu0 0
        %980 = vmatprep.subr.bf16.mxu0 0
        %981 = vmatpush1.bf16.msra.mxu0 0
        %982 = vmatprep.subr.bf16.mxu0 0
        %983 = vmatpush1.bf16.msra.mxu0 0
        %984 = vmatprep.subr.bf16.mxu0 0
        %985 = vmatpush1.bf16.msra.mxu0 0
        %986 = vmatprep.subr.bf16.mxu0 0
        %987 = vmatpush1.bf16.msra.mxu0 0
        %988 = vmatprep.subr.bf16.mxu0 0
        %989 = vmatpush1.bf16.msra.mxu0 0
        %990 = vmatprep.subr.bf16.mxu0 0
        %991 = vmatpush1.bf16.msra.mxu0 0
        %992 = vmatprep.subr.bf16.mxu0 0
        %993 = vmatpush1.bf16.msra.mxu0 0
        %994 = vmatprep.subr.bf16.mxu0 0
        %995 = vmatpush1.bf16.msra.mxu0 0
        %996 = vmatprep.subr.bf16.mxu0 0
        %997 = vmatpush1.bf16.msra.mxu0 0
        %998 = vmatprep.subr.bf16.mxu0 0
        %999 = vmatpush1.bf16.msra.mxu0 0
        %1000 = vmatprep.subr.bf16.mxu0 0
        %1001 = vmatpush1.bf16.msra.mxu0 0
        %1002 = vmatprep.mubr.bf16.mxu0 0
        %1003 = vmatmul.mubr.bf16.gmra.mrb[0].mxu0 %v959
        %v1004 = vpop.f32.mrb[0].mxu0
        %v1005 = vadd.f32 0.0, %v1004
        %v1006 = vpop.f32.mrb[0].mxu0
        %v1007 = vadd.f32 0.0, %v1006
        %v1008 = vpop.f32.mrb[0].mxu0
        %v1009 = vpop.f32.mrb[0].mxu0
        %1010 = vdwg.mxu0
        %1011 = vmatprep.subr.bf16.mxu0 0
        %1012 = vmatpush1.bf16.msra.mxu0 %v968
        %1013 = vmatprep.subr.bf16.mxu0 0
        %1014 = vmatpush1.bf16.msra.mxu0 0
        %1015 = vmatprep.subr.bf16.mxu0 0
        %1016 = vmatpush1.bf16.msra.mxu0 0
        %1017 = vmatprep.subr.bf16.mxu0 0
        %1018 = vmatpush1.bf16.msra.mxu0 0
        %1019 = vmatprep.subr.bf16.mxu0 0
        %1020 = vmatpush1.bf16.msra.mxu0 0
        %1021 = vmatprep.subr.bf16.mxu0 0
        %1022 = vmatpush1.bf16.msra.mxu0 0
        %1023 = vmatprep.subr.bf16.mxu0 0
        %1024 = vmatpush1.bf16.msra.mxu0 0
        %1025 = vmatprep.subr.bf16.mxu0 0
        %1026 = vmatpush1.bf16.msra.mxu0 0
        %1027 = vmatprep.subr.bf16.mxu0 0
        %1028 = vmatpush1.bf16.msra.mxu0 0
        %1029 = vmatprep.subr.bf16.mxu0 0
        %1030 = vmatpush1.bf16.msra.mxu0 0
        %1031 = vmatprep.subr.bf16.mxu0 0
        %1032 = vmatpush1.bf16.msra.mxu0 0
        %1033 = vmatprep.subr.bf16.mxu0 0
        %1034 = vmatpush1.bf16.msra.mxu0 0
        %1035 = vmatprep.subr.bf16.mxu0 0
        %1036 = vmatpush1.bf16.msra.mxu0 0
        %1037 = vmatprep.subr.bf16.mxu0 0
        %1038 = vmatpush1.bf16.msra.mxu0 0
        %1039 = vmatprep.subr.bf16.mxu0 0
        %1040 = vmatpush1.bf16.msra.mxu0 0
        %1041 = vmatprep.subr.bf16.mxu0 0
        %1042 = vmatpush1.bf16.msra.mxu0 0
        %1043 = vmatprep.mubr.bf16.mxu0 0
        %1044 = vmatmul.mubr.bf16.gmra.mrb[0].mxu0 %v959
        %v1045 = vpop.f32.mrb[0].mxu0
        %v1046 = vadd.f32 0.0, %v1045
        %v1047 = vpop.f32.mrb[0].mxu0
        %v1048 = vpop.f32.mrb[0].mxu0
        %v1049 = vpop.f32.mrb[0].mxu0
        %1050 = vdwg.mxu0
        %v1051 = vadd.f32 %v922, %v1005
        %v1052 = vadd.f32 %v923, %v1007
        %v1053 = vadd.f32 %v924, %v1046
        %s1054 = scalar_lea.vmem %s268, 6
        %v1055 = vld [vmem:[%s1054] sm:$0x1]
        %v1056 = vld [vmem:[%s261] sm:$0xff]
        %v1058 = vcombine.high %v1056, %v1056
        %v1060 = vunpack.c.l.s4 1983009808
        %v1061 = vunpack.c.0.s8 %v1060
        %v1062 = vlaneseq
        %v1063 = vshrl.u32 %v1062, 7
        %v1064 = vsub.s32 %v1061, %v1063
        %v1065 = vrot.slane %v1056, %v1064
        %v1067 = vunpack.c.l.s4 1983009808
        %v1068 = vunpack.c.0.s8 %v1067
        %v1069 = vlaneseq
        %v1070 = vshrl.u32 %v1069, 7
        %v1071 = vsub.s32 %v1068, %v1070
        %v1072 = vrot.slane %v1058, %v1071
        %v1073 = vcombine.high %v1065, %v1065
        %v1074 = vcombine.high %v1072, %v1072
        %1075 = vrot.lane.b32.xlu0 %v1065, 92
        %v1076 = vpop.permute.xlu0 %1075
        %1077 = vrot.lane.b32.xlu0 %v1073, 92
        %v1078 = vpop.permute.xlu0 %1077
        %1079 = vrot.lane.b32.xlu0 %v1072, 92
        %v1080 = vpop.permute.xlu0 %1079
        %1081 = vrot.lane.b32.xlu0 %v1074, 92
        %v1082 = vpop.permute.xlu0 %1081
        %vm1083 = vcmask 752640
        %v1084 = vsel %vm1083, %v1076, %v1078
        %v1085 = vsel %vm1083, %v1078, %v1080
        %v1086 = vsel %vm1083, %v1080, %v1082
        %v1088 = vsel %vm333, %v1055, 0
        %v1091 = vsel %vm337, %v1084, 0
        %v1094 = vsel %vm337, %v1085, 0
        %v1097 = vsel %vm337, %v1086, 0
        %1099 = vmatprep.subr.bf16.mxu0 %v1094
        %1100 = vmatpush1.bf16.msra.mxu0 %v1091
        %1101 = vmatprep.subr.bf16.mxu0 0
        %1102 = vmatpush1.bf16.msra.mxu0 0
        %1103 = vmatprep.subr.bf16.mxu0 0
        %1104 = vmatpush1.bf16.msra.mxu0 0
        %1105 = vmatprep.subr.bf16.mxu0 0
        %1106 = vmatpush1.bf16.msra.mxu0 0
        %1107 = vmatprep.subr.bf16.mxu0 0
        %1108 = vmatpush1.bf16.msra.mxu0 0
        %1109 = vmatprep.subr.bf16.mxu0 0
        %1110 = vmatpush1.bf16.msra.mxu0 0
        %1111 = vmatprep.subr.bf16.mxu0 0
        %1112 = vmatpush1.bf16.msra.mxu0 0
        %1113 = vmatprep.subr.bf16.mxu0 0
        %1114 = vmatpush1.bf16.msra.mxu0 0
        %1115 = vmatprep.subr.bf16.mxu0 0
        %1116 = vmatpush1.bf16.msra.mxu0 0
        %1117 = vmatprep.subr.bf16.mxu0 0
        %1118 = vmatpush1.bf16.msra.mxu0 0
        %1119 = vmatprep.subr.bf16.mxu0 0
        %1120 = vmatpush1.bf16.msra.mxu0 0
        %1121 = vmatprep.subr.bf16.mxu0 0
        %1122 = vmatpush1.bf16.msra.mxu0 0
        %1123 = vmatprep.subr.bf16.mxu0 0
        %1124 = vmatpush1.bf16.msra.mxu0 0
        %1125 = vmatprep.subr.bf16.mxu0 0
        %1126 = vmatpush1.bf16.msra.mxu0 0
        %1127 = vmatprep.subr.bf16.mxu0 0
        %1128 = vmatpush1.bf16.msra.mxu0 0
        %1129 = vmatprep.subr.bf16.mxu0 0
        %1130 = vmatpush1.bf16.msra.mxu0 0
        %1131 = vmatprep.mubr.bf16.mxu0 0
        %1132 = vmatmul.mubr.bf16.gmra.mrb[0].mxu0 %v1088
        %v1133 = vpop.f32.mrb[0].mxu0
        %v1134 = vadd.f32 0.0, %v1133
        %v1135 = vpop.f32.mrb[0].mxu0
        %v1136 = vadd.f32 0.0, %v1135
        %v1137 = vpop.f32.mrb[0].mxu0
        %v1138 = vpop.f32.mrb[0].mxu0
        %1139 = vdwg.mxu0
        %1140 = vmatprep.subr.bf16.mxu0 0
        %1141 = vmatpush1.bf16.msra.mxu0 %v1097
        %1142 = vmatprep.subr.bf16.mxu0 0
        %1143 = vmatpush1.bf16.msra.mxu0 0
        %1144 = vmatprep.subr.bf16.mxu0 0
        %1145 = vmatpush1.bf16.msra.mxu0 0
        %1146 = vmatprep.subr.bf16.mxu0 0
        %1147 = vmatpush1.bf16.msra.mxu0 0
        %1148 = vmatprep.subr.bf16.mxu0 0
        %1149 = vmatpush1.bf16.msra.mxu0 0
        %1150 = vmatprep.subr.bf16.mxu0 0
        %1151 = vmatpush1.bf16.msra.mxu0 0
        %1152 = vmatprep.subr.bf16.mxu0 0
        %1153 = vmatpush1.bf16.msra.mxu0 0
        %1154 = vmatprep.subr.bf16.mxu0 0
        %1155 = vmatpush1.bf16.msra.mxu0 0
        %1156 = vmatprep.subr.bf16.mxu0 0
        %1157 = vmatpush1.bf16.msra.mxu0 0
        %1158 = vmatprep.subr.bf16.mxu0 0
        %1159 = vmatpush1.bf16.msra.mxu0 0
        %1160 = vmatprep.subr.bf16.mxu0 0
        %1161 = vmatpush1.bf16.msra.mxu0 0
        %1162 = vmatprep.subr.bf16.mxu0 0
        %1163 = vmatpush1.bf16.msra.mxu0 0
        %1164 = vmatprep.subr.bf16.mxu0 0
        %1165 = vmatpush1.bf16.msra.mxu0 0
        %1166 = vmatprep.subr.bf16.mxu0 0
        %1167 = vmatpush1.bf16.msra.mxu0 0
        %1168 = vmatprep.subr.bf16.mxu0 0
        %1169 = vmatpush1.bf16.msra.mxu0 0
        %1170 = vmatprep.subr.bf16.mxu0 0
        %1171 = vmatpush1.bf16.msra.mxu0 0
        %1172 = vmatprep.mubr.bf16.mxu0 0
        %1173 = vmatmul.mubr.bf16.gmra.mrb[0].mxu0 %v1088
        %v1174 = vpop.f32.mrb[0].mxu0
        %v1175 = vadd.f32 0.0, %v1174
        %v1176 = vpop.f32.mrb[0].mxu0
        %v1177 = vpop.f32.mrb[0].mxu0
        %v1178 = vpop.f32.mrb[0].mxu0
        %1179 = vdwg.mxu0
        %v1180 = vadd.f32 %v1051, %v1134
        %v1181 = vadd.f32 %v1052, %v1136
        %v1182 = vadd.f32 %v1053, %v1175
        %s1183 = scalar_lea.vmem %s268, 7
        %v1184 = vld [vmem:[%s1183] sm:$0x1]
        %v1185 = vld [vmem:[%s261] sm:$0xff]
        %v1187 = vcombine.high %v1185, %v1185
        %v1189 = vunpack.c.l.s4 1983009808
        %v1190 = vunpack.c.0.s8 %v1189
        %v1191 = vlaneseq
        %v1192 = vshrl.u32 %v1191, 7
        %v1193 = vsub.s32 %v1190, %v1192
        %v1194 = vrot.slane %v1185, %v1193
        %v1196 = vunpack.c.l.s4 1983009808
        %v1197 = vunpack.c.0.s8 %v1196
        %v1198 = vlaneseq
        %v1199 = vshrl.u32 %v1198, 7
        %v1200 = vsub.s32 %v1197, %v1199
        %v1201 = vrot.slane %v1187, %v1200
        %v1202 = vcombine.high %v1194, %v1194
        %v1203 = vcombine.high %v1201, %v1201
        %1204 = vrot.lane.b32.xlu0 %v1194, 91
        %v1205 = vpop.permute.xlu0 %1204
        %1206 = vrot.lane.b32.xlu0 %v1202, 91
        %v1207 = vpop.permute.xlu0 %1206
        %1208 = vrot.lane.b32.xlu0 %v1201, 91
        %v1209 = vpop.permute.xlu0 %1208
        %1210 = vrot.lane.b32.xlu0 %v1203, 91
        %v1211 = vpop.permute.xlu0 %1210
        %vm1212 = vcmask 744448
        %v1213 = vsel %vm1212, %v1205, %v1207
        %v1214 = vsel %vm1212, %v1207, %v1209
        %v1215 = vsel %vm1212, %v1209, %v1211
        %v1217 = vsel %vm333, %v1184, 0
        %v1220 = vsel %vm337, %v1213, 0
        %v1223 = vsel %vm337, %v1214, 0
        %v1226 = vsel %vm337, %v1215, 0
        %1228 = vmatprep.subr.bf16.mxu0 %v1223
        %1229 = vmatpush1.bf16.msra.mxu0 %v1220
        %1230 = vmatprep.subr.bf16.mxu0 0
        %1231 = vmatpush1.bf16.msra.mxu0 0
        %1232 = vmatprep.subr.bf16.mxu0 0
        %1233 = vmatpush1.bf16.msra.mxu0 0
        %1234 = vmatprep.subr.bf16.mxu0 0
        %1235 = vmatpush1.bf16.msra.mxu0 0
        %1236 = vmatprep.subr.bf16.mxu0 0
        %1237 = vmatpush1.bf16.msra.mxu0 0
        %1238 = vmatprep.subr.bf16.mxu0 0
        %1239 = vmatpush1.bf16.msra.mxu0 0
        %1240 = vmatprep.subr.bf16.mxu0 0
        %1241 = vmatpush1.bf16.msra.mxu0 0
        %1242 = vmatprep.subr.bf16.mxu0 0
        %1243 = vmatpush1.bf16.msra.mxu0 0
        %1244 = vmatprep.subr.bf16.mxu0 0
        %1245 = vmatpush1.bf16.msra.mxu0 0
        %1246 = vmatprep.subr.bf16.mxu0 0
        %1247 = vmatpush1.bf16.msra.mxu0 0
        %1248 = vmatprep.subr.bf16.mxu0 0
        %1249 = vmatpush1.bf16.msra.mxu0 0
        %1250 = vmatprep.subr.bf16.mxu0 0
        %1251 = vmatpush1.bf16.msra.mxu0 0
        %1252 = vmatprep.subr.bf16.mxu0 0
        %1253 = vmatpush1.bf16.msra.mxu0 0
        %1254 = vmatprep.subr.bf16.mxu0 0
        %1255 = vmatpush1.bf16.msra.mxu0 0
        %1256 = vmatprep.subr.bf16.mxu0 0
        %1257 = vmatpush1.bf16.msra.mxu0 0
        %1258 = vmatprep.subr.bf16.mxu0 0
        %1259 = vmatpush1.bf16.msra.mxu0 0
        %1260 = vmatprep.mubr.bf16.mxu0 0
        %1261 = vmatmul.mubr.bf16.gmra.mrb[0].mxu0 %v1217
        %v1262 = vpop.f32.mrb[0].mxu0
        %v1263 = vadd.f32 0.0, %v1262
        %v1264 = vpop.f32.mrb[0].mxu0
        %v1265 = vadd.f32 0.0, %v1264
        %v1266 = vpop.f32.mrb[0].mxu0
        %v1267 = vpop.f32.mrb[0].mxu0
        %1268 = vdwg.mxu0
        %1269 = vmatprep.subr.bf16.mxu0 0
        %1270 = vmatpush1.bf16.msra.mxu0 %v1226
        %1271 = vmatprep.subr.bf16.mxu0 0
        %1272 = vmatpush1.bf16.msra.mxu0 0
        %1273 = vmatprep.subr.bf16.mxu0 0
        %1274 = vmatpush1.bf16.msra.mxu0 0
        %1275 = vmatprep.subr.bf16.mxu0 0
        %1276 = vmatpush1.bf16.msra.mxu0 0
        %1277 = vmatprep.subr.bf16.mxu0 0
        %1278 = vmatpush1.bf16.msra.mxu0 0
        %1279 = vmatprep.subr.bf16.mxu0 0
        %1280 = vmatpush1.bf16.msra.mxu0 0
        %1281 = vmatprep.subr.bf16.mxu0 0
        %1282 = vmatpush1.bf16.msra.mxu0 0
        %1283 = vmatprep.subr.bf16.mxu0 0
        %1284 = vmatpush1.bf16.msra.mxu0 0
        %1285 = vmatprep.subr.bf16.mxu0 0
        %1286 = vmatpush1.bf16.msra.mxu0 0
        %1287 = vmatprep.subr.bf16.mxu0 0
        %1288 = vmatpush1.bf16.msra.mxu0 0
        %1289 = vmatprep.subr.bf16.mxu0 0
        %1290 = vmatpush1.bf16.msra.mxu0 0
        %1291 = vmatprep.subr.bf16.mxu0 0
        %1292 = vmatpush1.bf16.msra.mxu0 0
        %1293 = vmatprep.subr.bf16.mxu0 0
        %1294 = vmatpush1.bf16.msra.mxu0 0
        %1295 = vmatprep.subr.bf16.mxu0 0
        %1296 = vmatpush1.bf16.msra.mxu0 0
        %1297 = vmatprep.subr.bf16.mxu0 0
        %1298 = vmatpush1.bf16.msra.mxu0 0
        %1299 = vmatprep.subr.bf16.mxu0 0
        %1300 = vmatpush1.bf16.msra.mxu0 0
        %1301 = vmatprep.mubr.bf16.mxu0 0
        %1302 = vmatmul.mubr.bf16.gmra.mrb[0].mxu0 %v1217
        %v1303 = vpop.f32.mrb[0].mxu0
        %v1304 = vadd.f32 0.0, %v1303
        %v1305 = vpop.f32.mrb[0].mxu0
        %v1306 = vpop.f32.mrb[0].mxu0
        %v1307 = vpop.f32.mrb[0].mxu0
        %1308 = vdwg.mxu0
        %v1309 = vadd.f32 %v1180, %v1263
        %v1310 = vadd.f32 %v1181, %v1265
        %v1311 = vadd.f32 %v1182, %v1304
        %s1312 = scalar_lea.vmem %s268, 8
        %v1313 = vld [vmem:[%s1312] sm:$0x1]
        %v1314 = vld [vmem:[%s261] sm:$0xff]
        %v1316 = vcombine.high %v1314, %v1314
        %v1318 = vunpack.c.l.s4 1983009808
        %v1319 = vunpack.c.0.s8 %v1318
        %v1320 = vlaneseq
        %v1321 = vshrl.u32 %v1320, 7
        %v1322 = vsub.s32 %v1319, %v1321
        %v1323 = vrot.slane %v1314, %v1322
        %v1325 = vunpack.c.l.s4 1983009808
        %v1326 = vunpack.c.0.s8 %v1325
        %v1327 = vlaneseq
        %v1328 = vshrl.u32 %v1327, 7
        %v1329 = vsub.s32 %v1326, %v1328
        %v1330 = vrot.slane %v1316, %v1329
        %v1331 = vcombine.high %v1323, %v1323
        %v1332 = vcombine.high %v1330, %v1330
        %1333 = vrot.lane.b32.xlu0 %v1323, 90
        %v1334 = vpop.permute.xlu0 %1333
        %1335 = vrot.lane.b32.xlu0 %v1331, 90
        %v1336 = vpop.permute.xlu0 %1335
        %1337 = vrot.lane.b32.xlu0 %v1330, 90
        %v1338 = vpop.permute.xlu0 %1337
        %1339 = vrot.lane.b32.xlu0 %v1332, 90
        %v1340 = vpop.permute.xlu0 %1339
        %vm1341 = vcmask 736256
        %v1342 = vsel %vm1341, %v1334, %v1336
        %v1343 = vsel %vm1341, %v1336, %v1338
        %v1344 = vsel %vm1341, %v1338, %v1340
        %v1346 = vsel %vm333, %v1313, 0
        %v1349 = vsel %vm337, %v1342, 0
        %v1352 = vsel %vm337, %v1343, 0
        %v1355 = vsel %vm337, %v1344, 0
        %1357 = vmatprep.subr.bf16.mxu0 %v1352
        %1358 = vmatpush1.bf16.msra.mxu0 %v1349
        %1359 = vmatprep.subr.bf16.mxu0 0
        %1360 = vmatpush1.bf16.msra.mxu0 0
        %1361 = vmatprep.subr.bf16.mxu0 0
        %1362 = vmatpush1.bf16.msra.mxu0 0
        %1363 = vmatprep.subr.bf16.mxu0 0
        %1364 = vmatpush1.bf16.msra.mxu0 0
        %1365 = vmatprep.subr.bf16.mxu0 0
        %1366 = vmatpush1.bf16.msra.mxu0 0
        %1367 = vmatprep.subr.bf16.mxu0 0
        %1368 = vmatpush1.bf16.msra.mxu0 0
        %1369 = vmatprep.subr.bf16.mxu0 0
        %1370 = vmatpush1.bf16.msra.mxu0 0
        %1371 = vmatprep.subr.bf16.mxu0 0
        %1372 = vmatpush1.bf16.msra.mxu0 0
        %1373 = vmatprep.subr.bf16.mxu0 0
        %1374 = vmatpush1.bf16.msra.mxu0 0
        %1375 = vmatprep.subr.bf16.mxu0 0
        %1376 = vmatpush1.bf16.msra.mxu0 0
        %1377 = vmatprep.subr.bf16.mxu0 0
        %1378 = vmatpush1.bf16.msra.mxu0 0
        %1379 = vmatprep.subr.bf16.mxu0 0
        %1380 = vmatpush1.bf16.msra.mxu0 0
        %1381 = vmatprep.subr.bf16.mxu0 0
        %1382 = vmatpush1.bf16.msra.mxu0 0
        %1383 = vmatprep.subr.bf16.mxu0 0
        %1384 = vmatpush1.bf16.msra.mxu0 0
        %1385 = vmatprep.subr.bf16.mxu0 0
        %1386 = vmatpush1.bf16.msra.mxu0 0
        %1387 = vmatprep.subr.bf16.mxu0 0
        %1388 = vmatpush1.bf16.msra.mxu0 0
        %1389 = vmatprep.mubr.bf16.mxu0 0
        %1390 = vmatmul.mubr.bf16.gmra.mrb[0].mxu0 %v1346
        %v1391 = vpop.f32.mrb[0].mxu0
        %v1392 = vadd.f32 0.0, %v1391
        %v1393 = vpop.f32.mrb[0].mxu0
        %v1394 = vadd.f32 0.0, %v1393
        %v1395 = vpop.f32.mrb[0].mxu0
        %v1396 = vpop.f32.mrb[0].mxu0
        %1397 = vdwg.mxu0
        %1398 = vmatprep.subr.bf16.mxu0 0
        %1399 = vmatpush1.bf16.msra.mxu0 %v1355
        %1400 = vmatprep.subr.bf16.mxu0 0
        %1401 = vmatpush1.bf16.msra.mxu0 0
        %1402 = vmatprep.subr.bf16.mxu0 0
        %1403 = vmatpush1.bf16.msra.mxu0 0
        %1404 = vmatprep.subr.bf16.mxu0 0
        %1405 = vmatpush1.bf16.msra.mxu0 0
        %1406 = vmatprep.subr.bf16.mxu0 0
        %1407 = vmatpush1.bf16.msra.mxu0 0
        %1408 = vmatprep.subr.bf16.mxu0 0
        %1409 = vmatpush1.bf16.msra.mxu0 0
        %1410 = vmatprep.subr.bf16.mxu0 0
        %1411 = vmatpush1.bf16.msra.mxu0 0
        %1412 = vmatprep.subr.bf16.mxu0 0
        %1413 = vmatpush1.bf16.msra.mxu0 0
        %1414 = vmatprep.subr.bf16.mxu0 0
        %1415 = vmatpush1.bf16.msra.mxu0 0
        %1416 = vmatprep.subr.bf16.mxu0 0
        %1417 = vmatpush1.bf16.msra.mxu0 0
        %1418 = vmatprep.subr.bf16.mxu0 0
        %1419 = vmatpush1.bf16.msra.mxu0 0
        %1420 = vmatprep.subr.bf16.mxu0 0
        %1421 = vmatpush1.bf16.msra.mxu0 0
        %1422 = vmatprep.subr.bf16.mxu0 0
        %1423 = vmatpush1.bf16.msra.mxu0 0
        %1424 = vmatprep.subr.bf16.mxu0 0
        %1425 = vmatpush1.bf16.msra.mxu0 0
        %1426 = vmatprep.subr.bf16.mxu0 0
        %1427 = vmatpush1.bf16.msra.mxu0 0
        %1428 = vmatprep.subr.bf16.mxu0 0
        %1429 = vmatpush1.bf16.msra.mxu0 0
        %1430 = vmatprep.mubr.bf16.mxu0 0
        %1431 = vmatmul.mubr.bf16.gmra.mrb[0].mxu0 %v1346
        %v1432 = vpop.f32.mrb[0].mxu0
        %v1433 = vadd.f32 0.0, %v1432
        %v1434 = vpop.f32.mrb[0].mxu0
        %v1435 = vpop.f32.mrb[0].mxu0
        %v1436 = vpop.f32.mrb[0].mxu0
        %1437 = vdwg.mxu0
        %v1438 = vadd.f32 %v1309, %v1392
        %v1439 = vadd.f32 %v1310, %v1394
        %v1440 = vadd.f32 %v1311, %v1433
        %v1441 = vpack.c.bf16 %v1438, %v1438
        %v1442 = vpack.c.bf16 %v1439, %v1439
        %v1443 = vpack.c.bf16 %v1440, %v1440
        %v1447 = vcombine.low %v1441, %v1442
        %v1449 = vunpack.c.l.s4 1966171168
        %v1450 = vunpack.c.0.s8 %v1449
        %v1451 = vlaneseq
        %v1452 = vshrl.u32 %v1451, 7
        %v1453 = vsub.s32 %v1450, %v1452
        %v1454 = vrot.slane %v1447, %v1453
        %v1456 = vunpack.c.l.s4 1966171168
        %v1457 = vunpack.c.0.s8 %v1456
        %v1458 = vlaneseq
        %v1459 = vshrl.u32 %v1458, 7
        %v1460 = vsub.s32 %v1457, %v1459
        %v1461 = vrot.slane %v1443, %v1460
        %v1462 = vcombine.low %v1454, %v1461
        %v1464 = vunpack.c.l.s4 1966171168
        %v1465 = vunpack.c.0.s8 %v1464
        %v1466 = vlaneseq
        %v1467 = vshrl.u32 %v1466, 7
        %v1468 = vsub.s32 %v1465, %v1467
        %v1469 = vrot.slane %v1462, %v1468
        %1471 = vst [vmem:[%s280] sm:$0x7] %v1469
        %v1473 = vlaneseq
        %v1474 = vshrl.u32 %v1473, 7
        %v1475 = vsub.s32 0, %v1474
        %v1476 = vrot.slane %v293, %v1475
        %v1477 = vlaneseq
        %v1478 = vshrl.u32 %v1477, 7
        %v1479 = vsub.s32 1, %v1478
        %v1480 = vrot.slane %v293, %v1479
        %v1481 = vlaneseq
        %v1482 = vshrl.u32 %v1481, 7
        %v1483 = vsub.s32 2, %v1482
        %v1484 = vrot.slane %v293, %v1483
        %v1488 = vmul.f32 %v1438, %v1476
        %v1489 = vmul.f32 %v1439, %v1480
        %v1490 = vmul.f32 %v1440, %v1484
        %v1491 = vsel %vm337, %v1488, 0.0
        %v1492 = vsel %vm337, %v1489, 0.0
        %v1493 = vadd.f32 %v1491, %v1492
        %v1494 = vsel %vm337, %v1490, 0.0
        %v1495 = vadd.f32 %v1493, %v1494
        %1496 = vadd.xlane.f32.xlu0 %v1495
        %v1497 = vpop.xlane.xlu0 %1496
        %vm1498 = vcmask 1024
        %1499 = vst.msk [vmem:[%s291] sm:$0x3] %vm1498, %v1497
        %v1500 = vmul.f32 %v1488, %v1438
        %v1501 = vmul.f32 %v1489, %v1439
        %v1502 = vmul.f32 %v1490, %v1440
        %v1503 = vsel %vm337, %v1500, 0.0
        %v1504 = vsel %vm337, %v1501, 0.0
        %v1505 = vadd.f32 %v1503, %v1504
        %v1506 = vsel %vm337, %v1502, 0.0
        %v1507 = vadd.f32 %v1505, %v1506
        %1508 = vadd.xlane.f32.xlu0 %v1507
        %v1509 = vpop.xlane.xlu0 %1508
        %vm1510 = vcmask 9224
        %1511 = vst.msk [vmem:[%s291] sm:$0x3] %vm1510, %v1509
      $region36: #{upconv_forward.1} parent=31 // pred_fallthru
        _
      %p1512 = scmp.eq.s32.totalorder %s23, 1
      // Predicated region
      $region37: #{upconv_forward.1} parent=31 // pred_check
        %p1513 = pneg %p1512
      $region38: #{upconv_forward.1} parent=31 // pred_check_branch
        %1515 = sbr.rel (%p1513) target = $region40
      $region39: #{upconv_forward.1} parent=31 // pred_region
        %v1516 = vld [vmem:[%s268] sm:$0x1]
        %v1517 = vld [vmem:[%s261] sm:$0xff]
        %s1518 = scalar_lea.vmem %s268, 1
        %v1519 = vld [vmem:[%s1518] sm:$0x1]
        %v1521 = vcombine.high %v1517, %v1517
        %v1523 = vunpack.c.l.s4 1983009808
        %v1524 = vunpack.c.0.s8 %v1523
        %v1525 = vlaneseq
        %v1526 = vshrl.u32 %v1525, 7
        %v1527 = vsub.s32 %v1524, %v1526
        %v1528 = vrot.slane %v1517, %v1527
        %v1530 = vunpack.c.l.s4 1983009808
        %v1531 = vunpack.c.0.s8 %v1530
        %v1532 = vlaneseq
        %v1533 = vshrl.u32 %v1532, 7
        %v1534 = vsub.s32 %v1531, %v1533
        %v1535 = vrot.slane %v1521, %v1534
        %v1536 = vcombine.high %v1528, %v1528
        %v1537 = vcombine.high %v1535, %v1535
        %1538 = vrot.lane.b32.xlu0 %v1528, 126
        %v1539 = vpop.permute.xlu0 %1538
        %1540 = vrot.lane.b32.xlu0 %v1536, 126
        %v1541 = vpop.permute.xlu0 %1540
        %1542 = vrot.lane.b32.xlu0 %v1535, 126
        %v1543 = vpop.permute.xlu0 %1542
        %1544 = vrot.lane.b32.xlu0 %v1537, 126
        %v1545 = vpop.permute.xlu0 %1544
        %vm1546 = vcmask 1031168
        %v1547 = vsel %vm1546, %v1539, %v1541
        %v1548 = vsel %vm1546, %v1541, %v1543
        %v1549 = vsel %vm1546, %v1543, %v1545
        %vm1550 = vcmask 31744
        %v1552 = vsel %vm1550, %v1519, 0
        %vm1554 = vcmask 1041408
        %v1556 = vsel %vm1554, %v1547, 0
        %v1559 = vsel %vm1554, %v1548, 0
        %v1562 = vsel %vm1554, %v1549, 0
        %1564 = vmatprep.subr.bf16.mxu0 %v1559
        %1565 = vmatpush1.bf16.msra.mxu0 %v1556
        %1566 = vmatprep.subr.bf16.mxu0 0
        %1567 = vmatpush1.bf16.msra.mxu0 0
        %1568 = vmatprep.subr.bf16.mxu0 0
        %1569 = vmatpush1.bf16.msra.mxu0 0
        %1570 = vmatprep.subr.bf16.mxu0 0
        %1571 = vmatpush1.bf16.msra.mxu0 0
        %1572 = vmatprep.subr.bf16.mxu0 0
        %1573 = vmatpush1.bf16.msra.mxu0 0
        %1574 = vmatprep.subr.bf16.mxu0 0
        %1575 = vmatpush1.bf16.msra.mxu0 0
        %1576 = vmatprep.subr.bf16.mxu0 0
        %1577 = vmatpush1.bf16.msra.mxu0 0
        %1578 = vmatprep.subr.bf16.mxu0 0
        %1579 = vmatpush1.bf16.msra.mxu0 0
        %1580 = vmatprep.subr.bf16.mxu0 0
        %1581 = vmatpush1.bf16.msra.mxu0 0
        %1582 = vmatprep.subr.bf16.mxu0 0
        %1583 = vmatpush1.bf16.msra.mxu0 0
        %1584 = vmatprep.subr.bf16.mxu0 0
        %1585 = vmatpush1.bf16.msra.mxu0 0
        %1586 = vmatprep.subr.bf16.mxu0 0
        %1587 = vmatpush1.bf16.msra.mxu0 0
        %1588 = vmatprep.subr.bf16.mxu0 0
        %1589 = vmatpush1.bf16.msra.mxu0 0
        %1590 = vmatprep.subr.bf16.mxu0 0
        %1591 = vmatpush1.bf16.msra.mxu0 0
        %1592 = vmatprep.subr.bf16.mxu0 0
        %1593 = vmatpush1.bf16.msra.mxu0 0
        %1594 = vmatprep.subr.bf16.mxu0 0
        %1595 = vmatpush1.bf16.msra.mxu0 0
        %1596 = vmatprep.mubr.bf16.mxu0 0
        %1597 = vmatmul.mubr.bf16.gmra.mrb[0].mxu0 %v1552
        %v1598 = vpop.f32.mrb[0].mxu0
        %v1599 = vadd.f32 0.0, %v1598
        %v1600 = vpop.f32.mrb[0].mxu0
        %v1601 = vadd.f32 0.0, %v1600
        %v1602 = vpop.f32.mrb[0].mxu0
        %v1603 = vpop.f32.mrb[0].mxu0
        %1604 = vdwg.mxu0
        %1605 = vmatprep.subr.bf16.mxu0 0
        %1606 = vmatpush1.bf16.msra.mxu0 %v1562
        %1607 = vmatprep.subr.bf16.mxu0 0
        %1608 = vmatpush1.bf16.msra.mxu0 0
        %1609 = vmatprep.subr.bf16.mxu0 0
        %1610 = vmatpush1.bf16.msra.mxu0 0
        %1611 = vmatprep.subr.bf16.mxu0 0
        %1612 = vmatpush1.bf16.msra.mxu0 0
        %1613 = vmatprep.subr.bf16.mxu0 0
        %1614 = vmatpush1.bf16.msra.mxu0 0
        %1615 = vmatprep.subr.bf16.mxu0 0
        %1616 = vmatpush1.bf16.msra.mxu0 0
        %1617 = vmatprep.subr.bf16.mxu0 0
        %1618 = vmatpush1.bf16.msra.mxu0 0
        %1619 = vmatprep.subr.bf16.mxu0 0
        %1620 = vmatpush1.bf16.msra.mxu0 0
        %1621 = vmatprep.subr.bf16.mxu0 0
        %1622 = vmatpush1.bf16.msra.mxu0 0
        %1623 = vmatprep.subr.bf16.mxu0 0
        %1624 = vmatpush1.bf16.msra.mxu0 0
        %1625 = vmatprep.subr.bf16.mxu0 0
        %1626 = vmatpush1.bf16.msra.mxu0 0
        %1627 = vmatprep.subr.bf16.mxu0 0
        %1628 = vmatpush1.bf16.msra.mxu0 0
        %1629 = vmatprep.subr.bf16.mxu0 0
        %1630 = vmatpush1.bf16.msra.mxu0 0
        %1631 = vmatprep.subr.bf16.mxu0 0
        %1632 = vmatpush1.bf16.msra.mxu0 0
        %1633 = vmatprep.subr.bf16.mxu0 0
        %1634 = vmatpush1.bf16.msra.mxu0 0
        %1635 = vmatprep.subr.bf16.mxu0 0
        %1636 = vmatpush1.bf16.msra.mxu0 0
        %1637 = vmatprep.mubr.bf16.mxu0 0
        %1638 = vmatmul.mubr.bf16.gmra.mrb[0].mxu0 %v1552
        %v1639 = vpop.f32.mrb[0].mxu0
        %v1640 = vadd.f32 0.0, %v1639
        %v1641 = vpop.f32.mrb[0].mxu0
        %v1642 = vpop.f32.mrb[0].mxu0
        %v1643 = vpop.f32.mrb[0].mxu0
        %1644 = vdwg.mxu0
        %1645 = vrot.lane.b32.xlu0 %v1528, 127
        %v1646 = vpop.permute.xlu0 %1645
        %1647 = vrot.lane.b32.xlu0 %v1536, 127
        %v1648 = vpop.permute.xlu0 %1647
        %1649 = vrot.lane.b32.xlu0 %v1535, 127
        %v1650 = vpop.permute.xlu0 %1649
        %1651 = vrot.lane.b32.xlu0 %v1537, 127
        %v1652 = vpop.permute.xlu0 %1651
        %vm1653 = vcmask 1039360
        %v1654 = vsel %vm1653, %v1646, %v1648
        %v1655 = vsel %vm1653, %v1648, %v1650
        %v1656 = vsel %vm1653, %v1650, %v1652
        %v1658 = vsel %vm1550, %v1516, 0
        %v1661 = vsel %vm1554, %v1654, 0
        %v1664 = vsel %vm1554, %v1655, 0
        %v1667 = vsel %vm1554, %v1656, 0
        %1669 = vmatprep.subr.bf16.mxu0 %v1664
        %1670 = vmatpush1.bf16.msra.mxu0 %v1661
        %1671 = vmatprep.subr.bf16.mxu0 0
        %1672 = vmatpush1.bf16.msra.mxu0 0
        %1673 = vmatprep.subr.bf16.mxu0 0
        %1674 = vmatpush1.bf16.msra.mxu0 0
        %1675 = vmatprep.subr.bf16.mxu0 0
        %1676 = vmatpush1.bf16.msra.mxu0 0
        %1677 = vmatprep.subr.bf16.mxu0 0
        %1678 = vmatpush1.bf16.msra.mxu0 0
        %1679 = vmatprep.subr.bf16.mxu0 0
        %1680 = vmatpush1.bf16.msra.mxu0 0
        %1681 = vmatprep.subr.bf16.mxu0 0
        %1682 = vmatpush1.bf16.msra.mxu0 0
        %1683 = vmatprep.subr.bf16.mxu0 0
        %1684 = vmatpush1.bf16.msra.mxu0 0
        %1685 = vmatprep.subr.bf16.mxu0 0
        %1686 = vmatpush1.bf16.msra.mxu0 0
        %1687 = vmatprep.subr.bf16.mxu0 0
        %1688 = vmatpush1.bf16.msra.mxu0 0
        %1689 = vmatprep.subr.bf16.mxu0 0
        %1690 = vmatpush1.bf16.msra.mxu0 0
        %1691 = vmatprep.subr.bf16.mxu0 0
        %1692 = vmatpush1.bf16.msra.mxu0 0
        %1693 = vmatprep.subr.bf16.mxu0 0
        %1694 = vmatpush1.bf16.msra.mxu0 0
        %1695 = vmatprep.subr.bf16.mxu0 0
        %1696 = vmatpush1.bf16.msra.mxu0 0
        %1697 = vmatprep.subr.bf16.mxu0 0
        %1698 = vmatpush1.bf16.msra.mxu0 0
        %1699 = vmatprep.subr.bf16.mxu0 0
        %1700 = vmatpush1.bf16.msra.mxu0 0
        %1701 = vmatprep.mubr.bf16.mxu0 0
        %1702 = vmatmul.mubr.bf16.gmra.mrb[0].mxu0 %v1658
        %v1703 = vpop.f32.mrb[0].mxu0
        %v1704 = vadd.f32 %v1599, %v1703
        %v1705 = vpop.f32.mrb[0].mxu0
        %v1706 = vadd.f32 %v1601, %v1705
        %v1707 = vpop.f32.mrb[0].mxu0
        %v1708 = vpop.f32.mrb[0].mxu0
        %1709 = vdwg.mxu0
        %1710 = vmatprep.subr.bf16.mxu0 0
        %1711 = vmatpush1.bf16.msra.mxu0 %v1667
        %1712 = vmatprep.subr.bf16.mxu0 0
        %1713 = vmatpush1.bf16.msra.mxu0 0
        %1714 = vmatprep.subr.bf16.mxu0 0
        %1715 = vmatpush1.bf16.msra.mxu0 0
        %1716 = vmatprep.subr.bf16.mxu0 0
        %1717 = vmatpush1.bf16.msra.mxu0 0
        %1718 = vmatprep.subr.bf16.mxu0 0
        %1719 = vmatpush1.bf16.msra.mxu0 0
        %1720 = vmatprep.subr.bf16.mxu0 0
        %1721 = vmatpush1.bf16.msra.mxu0 0
        %1722 = vmatprep.subr.bf16.mxu0 0
        %1723 = vmatpush1.bf16.msra.mxu0 0
        %1724 = vmatprep.subr.bf16.mxu0 0
        %1725 = vmatpush1.bf16.msra.mxu0 0
        %1726 = vmatprep.subr.bf16.mxu0 0
        %1727 = vmatpush1.bf16.msra.mxu0 0
        %1728 = vmatprep.subr.bf16.mxu0 0
        %1729 = vmatpush1.bf16.msra.mxu0 0
        %1730 = vmatprep.subr.bf16.mxu0 0
        %1731 = vmatpush1.bf16.msra.mxu0 0
        %1732 = vmatprep.subr.bf16.mxu0 0
        %1733 = vmatpush1.bf16.msra.mxu0 0
        %1734 = vmatprep.subr.bf16.mxu0 0
        %1735 = vmatpush1.bf16.msra.mxu0 0
        %1736 = vmatprep.subr.bf16.mxu0 0
        %1737 = vmatpush1.bf16.msra.mxu0 0
        %1738 = vmatprep.subr.bf16.mxu0 0
        %1739 = vmatpush1.bf16.msra.mxu0 0
        %1740 = vmatprep.subr.bf16.mxu0 0
        %1741 = vmatpush1.bf16.msra.mxu0 0
        %1742 = vmatprep.mubr.bf16.mxu0 0
        %1743 = vmatmul.mubr.bf16.gmra.mrb[0].mxu0 %v1658
        %v1744 = vpop.f32.mrb[0].mxu0
        %v1745 = vadd.f32 %v1640, %v1744
        %v1746 = vpop.f32.mrb[0].mxu0
        %v1747 = vpop.f32.mrb[0].mxu0
        %v1748 = vpop.f32.mrb[0].mxu0
        %1749 = vdwg.mxu0
        %s1750 = scalar_lea.vmem %s268, 2
        %v1751 = vld [vmem:[%s1750] sm:$0x1]
        %v1752 = vld [vmem:[%s261] sm:$0xff]
        %v1754 = vcombine.high %v1752, %v1752
        %v1756 = vunpack.c.l.s4 1983009808
        %v1757 = vunpack.c.0.s8 %v1756
        %v1758 = vlaneseq
        %v1759 = vshrl.u32 %v1758, 7
        %v1760 = vsub.s32 %v1757, %v1759
        %v1761 = vrot.slane %v1752, %v1760
        %v1763 = vunpack.c.l.s4 1983009808
        %v1764 = vunpack.c.0.s8 %v1763
        %v1765 = vlaneseq
        %v1766 = vshrl.u32 %v1765, 7
        %v1767 = vsub.s32 %v1764, %v1766
        %v1768 = vrot.slane %v1754, %v1767
        %v1769 = vcombine.high %v1761, %v1761
        %v1770 = vcombine.high %v1768, %v1768
        %1771 = vrot.lane.b32.xlu0 %v1761, 109
        %v1772 = vpop.permute.xlu0 %1771
        %1773 = vrot.lane.b32.xlu0 %v1769, 109
        %v1774 = vpop.permute.xlu0 %1773
        %1775 = vrot.lane.b32.xlu0 %v1768, 109
        %v1776 = vpop.permute.xlu0 %1775
        %1777 = vrot.lane.b32.xlu0 %v1770, 109
        %v1778 = vpop.permute.xlu0 %1777
        %vm1779 = vcmask 891904
        %v1780 = vsel %vm1779, %v1772, %v1774
        %v1781 = vsel %vm1779, %v1774, %v1776
        %v1782 = vsel %vm1779, %v1776, %v1778
        %v1784 = vsel %vm1550, %v1751, 0
        %v1787 = vsel %vm1554, %v1780, 0
        %v1790 = vsel %vm1554, %v1781, 0
        %v1793 = vsel %vm1554, %v1782, 0
        %1795 = vmatprep.subr.bf16.mxu0 %v1790
        %1796 = vmatpush1.bf16.msra.mxu0 %v1787
        %1797 = vmatprep.subr.bf16.mxu0 0
        %1798 = vmatpush1.bf16.msra.mxu0 0
        %1799 = vmatprep.subr.bf16.mxu0 0
        %1800 = vmatpush1.bf16.msra.mxu0 0
        %1801 = vmatprep.subr.bf16.mxu0 0
        %1802 = vmatpush1.bf16.msra.mxu0 0
        %1803 = vmatprep.subr.bf16.mxu0 0
        %1804 = vmatpush1.bf16.msra.mxu0 0
        %1805 = vmatprep.subr.bf16.mxu0 0
        %1806 = vmatpush1.bf16.msra.mxu0 0
        %1807 = vmatprep.subr.bf16.mxu0 0
        %1808 = vmatpush1.bf16.msra.mxu0 0
        %1809 = vmatprep.subr.bf16.mxu0 0
        %1810 = vmatpush1.bf16.msra.mxu0 0
        %1811 = vmatprep.subr.bf16.mxu0 0
        %1812 = vmatpush1.bf16.msra.mxu0 0
        %1813 = vmatprep.subr.bf16.mxu0 0
        %1814 = vmatpush1.bf16.msra.mxu0 0
        %1815 = vmatprep.subr.bf16.mxu0 0
        %1816 = vmatpush1.bf16.msra.mxu0 0
        %1817 = vmatprep.subr.bf16.mxu0 0
        %1818 = vmatpush1.bf16.msra.mxu0 0
        %1819 = vmatprep.subr.bf16.mxu0 0
        %1820 = vmatpush1.bf16.msra.mxu0 0
        %1821 = vmatprep.subr.bf16.mxu0 0
        %1822 = vmatpush1.bf16.msra.mxu0 0
        %1823 = vmatprep.subr.bf16.mxu0 0
        %1824 = vmatpush1.bf16.msra.mxu0 0
        %1825 = vmatprep.subr.bf16.mxu0 0
        %1826 = vmatpush1.bf16.msra.mxu0 0
        %1827 = vmatprep.mubr.bf16.mxu0 0
        %1828 = vmatmul.mubr.bf16.gmra.mrb[0].mxu0 %v1784
        %v1829 = vpop.f32.mrb[0].mxu0
        %v1830 = vadd.f32 0.0, %v1829
        %v1831 = vpop.f32.mrb[0].mxu0
        %v1832 = vadd.f32 0.0, %v1831
        %v1833 = vpop.f32.mrb[0].mxu0
        %v1834 = vpop.f32.mrb[0].mxu0
        %1835 = vdwg.mxu0
        %1836 = vmatprep.subr.bf16.mxu0 0
        %1837 = vmatpush1.bf16.msra.mxu0 %v1793
        %1838 = vmatprep.subr.bf16.mxu0 0
        %1839 = vmatpush1.bf16.msra.mxu0 0
        %1840 = vmatprep.subr.bf16.mxu0 0
        %1841 = vmatpush1.bf16.msra.mxu0 0
        %1842 = vmatprep.subr.bf16.mxu0 0
        %1843 = vmatpush1.bf16.msra.mxu0 0
        %1844 = vmatprep.subr.bf16.mxu0 0
        %1845 = vmatpush1.bf16.msra.mxu0 0
        %1846 = vmatprep.subr.bf16.mxu0 0
        %1847 = vmatpush1.bf16.msra.mxu0 0
        %1848 = vmatprep.subr.bf16.mxu0 0
        %1849 = vmatpush1.bf16.msra.mxu0 0
        %1850 = vmatprep.subr.bf16.mxu0 0
        %1851 = vmatpush1.bf16.msra.mxu0 0
        %1852 = vmatprep.subr.bf16.mxu0 0
        %1853 = vmatpush1.bf16.msra.mxu0 0
        %1854 = vmatprep.subr.bf16.mxu0 0
        %1855 = vmatpush1.bf16.msra.mxu0 0
        %1856 = vmatprep.subr.bf16.mxu0 0
        %1857 = vmatpush1.bf16.msra.mxu0 0
        %1858 = vmatprep.subr.bf16.mxu0 0
        %1859 = vmatpush1.bf16.msra.mxu0 0
        %1860 = vmatprep.subr.bf16.mxu0 0
        %1861 = vmatpush1.bf16.msra.mxu0 0
        %1862 = vmatprep.subr.bf16.mxu0 0
        %1863 = vmatpush1.bf16.msra.mxu0 0
        %1864 = vmatprep.subr.bf16.mxu0 0
        %1865 = vmatpush1.bf16.msra.mxu0 0
        %1866 = vmatprep.subr.bf16.mxu0 0
        %1867 = vmatpush1.bf16.msra.mxu0 0
        %1868 = vmatprep.mubr.bf16.mxu0 0
        %1869 = vmatmul.mubr.bf16.gmra.mrb[0].mxu0 %v1784
        %v1870 = vpop.f32.mrb[0].mxu0
        %v1871 = vadd.f32 0.0, %v1870
        %v1872 = vpop.f32.mrb[0].mxu0
        %v1873 = vpop.f32.mrb[0].mxu0
        %v1874 = vpop.f32.mrb[0].mxu0
        %1875 = vdwg.mxu0
        %v1876 = vadd.f32 %v1704, %v1830
        %v1877 = vadd.f32 %v1706, %v1832
        %v1878 = vadd.f32 %v1745, %v1871
        %s1879 = scalar_lea.vmem %s268, 3
        %v1880 = vld [vmem:[%s1879] sm:$0x1]
        %v1881 = vld [vmem:[%s261] sm:$0xff]
        %v1883 = vcombine.high %v1881, %v1881
        %v1885 = vunpack.c.l.s4 1983009808
        %v1886 = vunpack.c.0.s8 %v1885
        %v1887 = vlaneseq
        %v1888 = vshrl.u32 %v1887, 7
        %v1889 = vsub.s32 %v1886, %v1888
        %v1890 = vrot.slane %v1881, %v1889
        %v1892 = vunpack.c.l.s4 1983009808
        %v1893 = vunpack.c.0.s8 %v1892
        %v1894 = vlaneseq
        %v1895 = vshrl.u32 %v1894, 7
        %v1896 = vsub.s32 %v1893, %v1895
        %v1897 = vrot.slane %v1883, %v1896
        %v1898 = vcombine.high %v1890, %v1890
        %v1899 = vcombine.high %v1897, %v1897
        %1900 = vrot.lane.b32.xlu0 %v1890, 108
        %v1901 = vpop.permute.xlu0 %1900
        %1902 = vrot.lane.b32.xlu0 %v1898, 108
        %v1903 = vpop.permute.xlu0 %1902
        %1904 = vrot.lane.b32.xlu0 %v1897, 108
        %v1905 = vpop.permute.xlu0 %1904
        %1906 = vrot.lane.b32.xlu0 %v1899, 108
        %v1907 = vpop.permute.xlu0 %1906
        %vm1908 = vcmask 883712
        %v1909 = vsel %vm1908, %v1901, %v1903
        %v1910 = vsel %vm1908, %v1903, %v1905
        %v1911 = vsel %vm1908, %v1905, %v1907
        %v1913 = vsel %vm1550, %v1880, 0
        %v1916 = vsel %vm1554, %v1909, 0
        %v1919 = vsel %vm1554, %v1910, 0
        %v1922 = vsel %vm1554, %v1911, 0
        %1924 = vmatprep.subr.bf16.mxu0 %v1919
        %1925 = vmatpush1.bf16.msra.mxu0 %v1916
        %1926 = vmatprep.subr.bf16.mxu0 0
        %1927 = vmatpush1.bf16.msra.mxu0 0
        %1928 = vmatprep.subr.bf16.mxu0 0
        %1929 = vmatpush1.bf16.msra.mxu0 0
        %1930 = vmatprep.subr.bf16.mxu0 0
        %1931 = vmatpush1.bf16.msra.mxu0 0
        %1932 = vmatprep.subr.bf16.mxu0 0
        %1933 = vmatpush1.bf16.msra.mxu0 0
        %1934 = vmatprep.subr.bf16.mxu0 0
        %1935 = vmatpush1.bf16.msra.mxu0 0
        %1936 = vmatprep.subr.bf16.mxu0 0
        %1937 = vmatpush1.bf16.msra.mxu0 0
        %1938 = vmatprep.subr.bf16.mxu0 0
        %1939 = vmatpush1.bf16.msra.mxu0 0
        %1940 = vmatprep.subr.bf16.mxu0 0
        %1941 = vmatpush1.bf16.msra.mxu0 0
        %1942 = vmatprep.subr.bf16.mxu0 0
        %1943 = vmatpush1.bf16.msra.mxu0 0
        %1944 = vmatprep.subr.bf16.mxu0 0
        %1945 = vmatpush1.bf16.msra.mxu0 0
        %1946 = vmatprep.subr.bf16.mxu0 0
        %1947 = vmatpush1.bf16.msra.mxu0 0
        %1948 = vmatprep.subr.bf16.mxu0 0
        %1949 = vmatpush1.bf16.msra.mxu0 0
        %1950 = vmatprep.subr.bf16.mxu0 0
        %1951 = vmatpush1.bf16.msra.mxu0 0
        %1952 = vmatprep.subr.bf16.mxu0 0
        %1953 = vmatpush1.bf16.msra.mxu0 0
        %1954 = vmatprep.subr.bf16.mxu0 0
        %1955 = vmatpush1.bf16.msra.mxu0 0
        %1956 = vmatprep.mubr.bf16.mxu0 0
        %1957 = vmatmul.mubr.bf16.gmra.mrb[0].mxu0 %v1913
        %v1958 = vpop.f32.mrb[0].mxu0
        %v1959 = vadd.f32 0.0, %v1958
        %v1960 = vpop.f32.mrb[0].mxu0
        %v1961 = vadd.f32 0.0, %v1960
        %v1962 = vpop.f32.mrb[0].mxu0
        %v1963 = vpop.f32.mrb[0].mxu0
        %1964 = vdwg.mxu0
        %1965 = vmatprep.subr.bf16.mxu0 0
        %1966 = vmatpush1.bf16.msra.mxu0 %v1922
        %1967 = vmatprep.subr.bf16.mxu0 0
        %1968 = vmatpush1.bf16.msra.mxu0 0
        %1969 = vmatprep.subr.bf16.mxu0 0
        %1970 = vmatpush1.bf16.msra.mxu0 0
        %1971 = vmatprep.subr.bf16.mxu0 0
        %1972 = vmatpush1.bf16.msra.mxu0 0
        %1973 = vmatprep.subr.bf16.mxu0 0
        %1974 = vmatpush1.bf16.msra.mxu0 0
        %1975 = vmatprep.subr.bf16.mxu0 0
        %1976 = vmatpush1.bf16.msra.mxu0 0
        %1977 = vmatprep.subr.bf16.mxu0 0
        %1978 = vmatpush1.bf16.msra.mxu0 0
        %1979 = vmatprep.subr.bf16.mxu0 0
        %1980 = vmatpush1.bf16.msra.mxu0 0
        %1981 = vmatprep.subr.bf16.mxu0 0
        %1982 = vmatpush1.bf16.msra.mxu0 0
        %1983 = vmatprep.subr.bf16.mxu0 0
        %1984 = vmatpush1.bf16.msra.mxu0 0
        %1985 = vmatprep.subr.bf16.mxu0 0
        %1986 = vmatpush1.bf16.msra.mxu0 0
        %1987 = vmatprep.subr.bf16.mxu0 0
        %1988 = vmatpush1.bf16.msra.mxu0 0
        %1989 = vmatprep.subr.bf16.mxu0 0
        %1990 = vmatpush1.bf16.msra.mxu0 0
        %1991 = vmatprep.subr.bf16.mxu0 0
        %1992 = vmatpush1.bf16.msra.mxu0 0
        %1993 = vmatprep.subr.bf16.mxu0 0
        %1994 = vmatpush1.bf16.msra.mxu0 0
        %1995 = vmatprep.subr.bf16.mxu0 0
        %1996 = vmatpush1.bf16.msra.mxu0 0
        %1997 = vmatprep.mubr.bf16.mxu0 0
        %1998 = vmatmul.mubr.bf16.gmra.mrb[0].mxu0 %v1913
        %v1999 = vpop.f32.mrb[0].mxu0
        %v2000 = vadd.f32 0.0, %v1999
        %v2001 = vpop.f32.mrb[0].mxu0
        %v2002 = vpop.f32.mrb[0].mxu0
        %v2003 = vpop.f32.mrb[0].mxu0
        %2004 = vdwg.mxu0
        %v2005 = vadd.f32 %v1876, %v1959
        %v2006 = vadd.f32 %v1877, %v1961
        %v2007 = vadd.f32 %v1878, %v2000
        %s2008 = scalar_lea.vmem %s268, 4
        %v2009 = vld [vmem:[%s2008] sm:$0x1]
        %v2010 = vld [vmem:[%s261] sm:$0xff]
        %v2012 = vcombine.high %v2010, %v2010
        %v2014 = vunpack.c.l.s4 1983009808
        %v2015 = vunpack.c.0.s8 %v2014
        %v2016 = vlaneseq
        %v2017 = vshrl.u32 %v2016, 7
        %v2018 = vsub.s32 %v2015, %v2017
        %v2019 = vrot.slane %v2010, %v2018
        %v2021 = vunpack.c.l.s4 1983009808
        %v2022 = vunpack.c.0.s8 %v2021
        %v2023 = vlaneseq
        %v2024 = vshrl.u32 %v2023, 7
        %v2025 = vsub.s32 %v2022, %v2024
        %v2026 = vrot.slane %v2012, %v2025
        %v2027 = vcombine.high %v2019, %v2019
        %v2028 = vcombine.high %v2026, %v2026
        %2029 = vrot.lane.b32.xlu0 %v2019, 91
        %v2030 = vpop.permute.xlu0 %2029
        %2031 = vrot.lane.b32.xlu0 %v2027, 91
        %v2032 = vpop.permute.xlu0 %2031
        %2033 = vrot.lane.b32.xlu0 %v2026, 91
        %v2034 = vpop.permute.xlu0 %2033
        %2035 = vrot.lane.b32.xlu0 %v2028, 91
        %v2036 = vpop.permute.xlu0 %2035
        %vm2037 = vcmask 744448
        %v2038 = vsel %vm2037, %v2030, %v2032
        %v2039 = vsel %vm2037, %v2032, %v2034
        %v2040 = vsel %vm2037, %v2034, %v2036
        %v2042 = vsel %vm1550, %v2009, 0
        %v2045 = vsel %vm1554, %v2038, 0
        %v2048 = vsel %vm1554, %v2039, 0
        %v2051 = vsel %vm1554, %v2040, 0
        %2053 = vmatprep.subr.bf16.mxu0 %v2048
        %2054 = vmatpush1.bf16.msra.mxu0 %v2045
        %2055 = vmatprep.subr.bf16.mxu0 0
        %2056 = vmatpush1.bf16.msra.mxu0 0
        %2057 = vmatprep.subr.bf16.mxu0 0
        %2058 = vmatpush1.bf16.msra.mxu0 0
        %2059 = vmatprep.subr.bf16.mxu0 0
        %2060 = vmatpush1.bf16.msra.mxu0 0
        %2061 = vmatprep.subr.bf16.mxu0 0
        %2062 = vmatpush1.bf16.msra.mxu0 0
        %2063 = vmatprep.subr.bf16.mxu0 0
        %2064 = vmatpush1.bf16.msra.mxu0 0
        %2065 = vmatprep.subr.bf16.mxu0 0
        %2066 = vmatpush1.bf16.msra.mxu0 0
        %2067 = vmatprep.subr.bf16.mxu0 0
        %2068 = vmatpush1.bf16.msra.mxu0 0
        %2069 = vmatprep.subr.bf16.mxu0 0
        %2070 = vmatpush1.bf16.msra.mxu0 0
        %2071 = vmatprep.subr.bf16.mxu0 0
        %2072 = vmatpush1.bf16.msra.mxu0 0
        %2073 = vmatprep.subr.bf16.mxu0 0
        %2074 = vmatpush1.bf16.msra.mxu0 0
        %2075 = vmatprep.subr.bf16.mxu0 0
        %2076 = vmatpush1.bf16.msra.mxu0 0
        %2077 = vmatprep.subr.bf16.mxu0 0
        %2078 = vmatpush1.bf16.msra.mxu0 0
        %2079 = vmatprep.subr.bf16.mxu0 0
        %2080 = vmatpush1.bf16.msra.mxu0 0
        %2081 = vmatprep.subr.bf16.mxu0 0
        %2082 = vmatpush1.bf16.msra.mxu0 0
        %2083 = vmatprep.subr.bf16.mxu0 0
        %2084 = vmatpush1.bf16.msra.mxu0 0
        %2085 = vmatprep.mubr.bf16.mxu0 0
        %2086 = vmatmul.mubr.bf16.gmra.mrb[0].mxu0 %v2042
        %v2087 = vpop.f32.mrb[0].mxu0
        %v2088 = vadd.f32 0.0, %v2087
        %v2089 = vpop.f32.mrb[0].mxu0
        %v2090 = vadd.f32 0.0, %v2089
        %v2091 = vpop.f32.mrb[0].mxu0
        %v2092 = vpop.f32.mrb[0].mxu0
        %2093 = vdwg.mxu0
        %2094 = vmatprep.subr.bf16.mxu0 0
        %2095 = vmatpush1.bf16.msra.mxu0 %v2051
        %2096 = vmatprep.subr.bf16.mxu0 0
        %2097 = vmatpush1.bf16.msra.mxu0 0
        %2098 = vmatprep.subr.bf16.mxu0 0
        %2099 = vmatpush1.bf16.msra.mxu0 0
        %2100 = vmatprep.subr.bf16.mxu0 0
        %2101 = vmatpush1.bf16.msra.mxu0 0
        %2102 = vmatprep.subr.bf16.mxu0 0
        %2103 = vmatpush1.bf16.msra.mxu0 0
        %2104 = vmatprep.subr.bf16.mxu0 0
        %2105 = vmatpush1.bf16.msra.mxu0 0
        %2106 = vmatprep.subr.bf16.mxu0 0
        %2107 = vmatpush1.bf16.msra.mxu0 0
        %2108 = vmatprep.subr.bf16.mxu0 0
        %2109 = vmatpush1.bf16.msra.mxu0 0
        %2110 = vmatprep.subr.bf16.mxu0 0
        %2111 = vmatpush1.bf16.msra.mxu0 0
        %2112 = vmatprep.subr.bf16.mxu0 0
        %2113 = vmatpush1.bf16.msra.mxu0 0
        %2114 = vmatprep.subr.bf16.mxu0 0
        %2115 = vmatpush1.bf16.msra.mxu0 0
        %2116 = vmatprep.subr.bf16.mxu0 0
        %2117 = vmatpush1.bf16.msra.mxu0 0
        %2118 = vmatprep.subr.bf16.mxu0 0
        %2119 = vmatpush1.bf16.msra.mxu0 0
        %2120 = vmatprep.subr.bf16.mxu0 0
        %2121 = vmatpush1.bf16.msra.mxu0 0
        %2122 = vmatprep.subr.bf16.mxu0 0
        %2123 = vmatpush1.bf16.msra.mxu0 0
        %2124 = vmatprep.subr.bf16.mxu0 0
        %2125 = vmatpush1.bf16.msra.mxu0 0
        %2126 = vmatprep.mubr.bf16.mxu0 0
        %2127 = vmatmul.mubr.bf16.gmra.mrb[0].mxu0 %v2042
        %v2128 = vpop.f32.mrb[0].mxu0
        %v2129 = vadd.f32 0.0, %v2128
        %v2130 = vpop.f32.mrb[0].mxu0
        %v2131 = vpop.f32.mrb[0].mxu0
        %v2132 = vpop.f32.mrb[0].mxu0
        %2133 = vdwg.mxu0
        %v2134 = vadd.f32 %v2005, %v2088
        %v2135 = vadd.f32 %v2006, %v2090
        %v2136 = vadd.f32 %v2007, %v2129
        %s2137 = scalar_lea.vmem %s268, 5
        %v2138 = vld [vmem:[%s2137] sm:$0x1]
        %v2139 = vld [vmem:[%s261] sm:$0xff]
        %v2141 = vcombine.high %v2139, %v2139
        %v2143 = vunpack.c.l.s4 1983009808
        %v2144 = vunpack.c.0.s8 %v2143
        %v2145 = vlaneseq
        %v2146 = vshrl.u32 %v2145, 7
        %v2147 = vsub.s32 %v2144, %v2146
        %v2148 = vrot.slane %v2139, %v2147
        %v2150 = vunpack.c.l.s4 1983009808
        %v2151 = vunpack.c.0.s8 %v2150
        %v2152 = vlaneseq
        %v2153 = vshrl.u32 %v2152, 7
        %v2154 = vsub.s32 %v2151, %v2153
        %v2155 = vrot.slane %v2141, %v2154
        %v2156 = vcombine.high %v2148, %v2148
        %v2157 = vcombine.high %v2155, %v2155
        %2158 = vrot.lane.b32.xlu0 %v2148, 90
        %v2159 = vpop.permute.xlu0 %2158
        %2160 = vrot.lane.b32.xlu0 %v2156, 90
        %v2161 = vpop.permute.xlu0 %2160
        %2162 = vrot.lane.b32.xlu0 %v2155, 90
        %v2163 = vpop.permute.xlu0 %2162
        %2164 = vrot.lane.b32.xlu0 %v2157, 90
        %v2165 = vpop.permute.xlu0 %2164
        %vm2166 = vcmask 736256
        %v2167 = vsel %vm2166, %v2159, %v2161
        %v2168 = vsel %vm2166, %v2161, %v2163
        %v2169 = vsel %vm2166, %v2163, %v2165
        %v2171 = vsel %vm1550, %v2138, 0
        %v2174 = vsel %vm1554, %v2167, 0
        %v2177 = vsel %vm1554, %v2168, 0
        %v2180 = vsel %vm1554, %v2169, 0
        %2182 = vmatprep.subr.bf16.mxu0 %v2177
        %2183 = vmatpush1.bf16.msra.mxu0 %v2174
        %2184 = vmatprep.subr.bf16.mxu0 0
        %2185 = vmatpush1.bf16.msra.mxu0 0
        %2186 = vmatprep.subr.bf16.mxu0 0
        %2187 = vmatpush1.bf16.msra.mxu0 0
        %2188 = vmatprep.subr.bf16.mxu0 0
        %2189 = vmatpush1.bf16.msra.mxu0 0
        %2190 = vmatprep.subr.bf16.mxu0 0
        %2191 = vmatpush1.bf16.msra.mxu0 0
        %2192 = vmatprep.subr.bf16.mxu0 0
        %2193 = vmatpush1.bf16.msra.mxu0 0
        %2194 = vmatprep.subr.bf16.mxu0 0
        %2195 = vmatpush1.bf16.msra.mxu0 0
        %2196 = vmatprep.subr.bf16.mxu0 0
        %2197 = vmatpush1.bf16.msra.mxu0 0
        %2198 = vmatprep.subr.bf16.mxu0 0
        %2199 = vmatpush1.bf16.msra.mxu0 0
        %2200 = vmatprep.subr.bf16.mxu0 0
        %2201 = vmatpush1.bf16.msra.mxu0 0
        %2202 = vmatprep.subr.bf16.mxu0 0
        %2203 = vmatpush1.bf16.msra.mxu0 0
        %2204 = vmatprep.subr.bf16.mxu0 0
        %2205 = vmatpush1.bf16.msra.mxu0 0
        %2206 = vmatprep.subr.bf16.mxu0 0
        %2207 = vmatpush1.bf16.msra.mxu0 0
        %2208 = vmatprep.subr.bf16.mxu0 0
        %2209 = vmatpush1.bf16.msra.mxu0 0
        %2210 = vmatprep.subr.bf16.mxu0 0
        %2211 = vmatpush1.bf16.msra.mxu0 0
        %2212 = vmatprep.subr.bf16.mxu0 0
        %2213 = vmatpush1.bf16.msra.mxu0 0
        %2214 = vmatprep.mubr.bf16.mxu0 0
        %2215 = vmatmul.mubr.bf16.gmra.mrb[0].mxu0 %v2171
        %v2216 = vpop.f32.mrb[0].mxu0
        %v2217 = vadd.f32 0.0, %v2216
        %v2218 = vpop.f32.mrb[0].mxu0
        %v2219 = vadd.f32 0.0, %v2218
        %v2220 = vpop.f32.mrb[0].mxu0
        %v2221 = vpop.f32.mrb[0].mxu0
        %2222 = vdwg.mxu0
        %2223 = vmatprep.subr.bf16.mxu0 0
        %2224 = vmatpush1.bf16.msra.mxu0 %v2180
        %2225 = vmatprep.subr.bf16.mxu0 0
        %2226 = vmatpush1.bf16.msra.mxu0 0
        %2227 = vmatprep.subr.bf16.mxu0 0
        %2228 = vmatpush1.bf16.msra.mxu0 0
        %2229 = vmatprep.subr.bf16.mxu0 0
        %2230 = vmatpush1.bf16.msra.mxu0 0
        %2231 = vmatprep.subr.bf16.mxu0 0
        %2232 = vmatpush1.bf16.msra.mxu0 0
        %2233 = vmatprep.subr.bf16.mxu0 0
        %2234 = vmatpush1.bf16.msra.mxu0 0
        %2235 = vmatprep.subr.bf16.mxu0 0
        %2236 = vmatpush1.bf16.msra.mxu0 0
        %2237 = vmatprep.subr.bf16.mxu0 0
        %2238 = vmatpush1.bf16.msra.mxu0 0
        %2239 = vmatprep.subr.bf16.mxu0 0
        %2240 = vmatpush1.bf16.msra.mxu0 0
        %2241 = vmatprep.subr.bf16.mxu0 0
        %2242 = vmatpush1.bf16.msra.mxu0 0
        %2243 = vmatprep.subr.bf16.mxu0 0
        %2244 = vmatpush1.bf16.msra.mxu0 0
        %2245 = vmatprep.subr.bf16.mxu0 0
        %2246 = vmatpush1.bf16.msra.mxu0 0
        %2247 = vmatprep.subr.bf16.mxu0 0
        %2248 = vmatpush1.bf16.msra.mxu0 0
        %2249 = vmatprep.subr.bf16.mxu0 0
        %2250 = vmatpush1.bf16.msra.mxu0 0
        %2251 = vmatprep.subr.bf16.mxu0 0
        %2252 = vmatpush1.bf16.msra.mxu0 0
        %2253 = vmatprep.subr.bf16.mxu0 0
        %2254 = vmatpush1.bf16.msra.mxu0 0
        %2255 = vmatprep.mubr.bf16.mxu0 0
        %2256 = vmatmul.mubr.bf16.gmra.mrb[0].mxu0 %v2171
        %v2257 = vpop.f32.mrb[0].mxu0
        %v2258 = vadd.f32 0.0, %v2257
        %v2259 = vpop.f32.mrb[0].mxu0
        %v2260 = vpop.f32.mrb[0].mxu0
        %v2261 = vpop.f32.mrb[0].mxu0
        %2262 = vdwg.mxu0
        %v2263 = vadd.f32 %v2134, %v2217
        %v2264 = vadd.f32 %v2135, %v2219
        %v2265 = vadd.f32 %v2136, %v2258
        %v2266 = vpack.c.bf16 %v2263, %v2263
        %v2267 = vpack.c.bf16 %v2264, %v2264
        %v2268 = vpack.c.bf16 %v2265, %v2265
        %v2272 = vcombine.low %v2266, %v2267
        %v2274 = vunpack.c.l.s4 1966171168
        %v2275 = vunpack.c.0.s8 %v2274
        %v2276 = vlaneseq
        %v2277 = vshrl.u32 %v2276, 7
        %v2278 = vsub.s32 %v2275, %v2277
        %v2279 = vrot.slane %v2272, %v2278
        %v2281 = vunpack.c.l.s4 1966171168
        %v2282 = vunpack.c.0.s8 %v2281
        %v2283 = vlaneseq
        %v2284 = vshrl.u32 %v2283, 7
        %v2285 = vsub.s32 %v2282, %v2284
        %v2286 = vrot.slane %v2268, %v2285
        %v2287 = vcombine.low %v2279, %v2286
        %v2289 = vunpack.c.l.s4 1966171168
        %v2290 = vunpack.c.0.s8 %v2289
        %v2291 = vlaneseq
        %v2292 = vshrl.u32 %v2291, 7
        %v2293 = vsub.s32 %v2290, %v2292
        %v2294 = vrot.slane %v2287, %v2293
        %2296 = vst [vmem:[%s280] sm:$0x7] %v2294
        %v2298 = vlaneseq
        %v2299 = vshrl.u32 %v2298, 7
        %v2300 = vsub.s32 0, %v2299
        %v2301 = vrot.slane %v293, %v2300
        %v2302 = vlaneseq
        %v2303 = vshrl.u32 %v2302, 7
        %v2304 = vsub.s32 1, %v2303
        %v2305 = vrot.slane %v293, %v2304
        %v2306 = vlaneseq
        %v2307 = vshrl.u32 %v2306, 7
        %v2308 = vsub.s32 2, %v2307
        %v2309 = vrot.slane %v293, %v2308
        %v2313 = vmul.f32 %v2263, %v2301
        %v2314 = vmul.f32 %v2264, %v2305
        %v2315 = vmul.f32 %v2265, %v2309
        %v2316 = vsel %vm1554, %v2313, 0.0
        %v2317 = vsel %vm1554, %v2314, 0.0
        %v2318 = vadd.f32 %v2316, %v2317
        %v2319 = vsel %vm1554, %v2315, 0.0
        %v2320 = vadd.f32 %v2318, %v2319
        %2321 = vadd.xlane.f32.xlu0 %v2320
        %v2322 = vpop.xlane.xlu0 %2321
        %vm2323 = vcmask 1024
        %2324 = vst.msk [vmem:[%s291] sm:$0x3] %vm2323, %v2322
        %v2325 = vmul.f32 %v2313, %v2263
        %v2326 = vmul.f32 %v2314, %v2264
        %v2327 = vmul.f32 %v2315, %v2265
        %v2328 = vsel %vm1554, %v2325, 0.0
        %v2329 = vsel %vm1554, %v2326, 0.0
        %v2330 = vadd.f32 %v2328, %v2329
        %v2331 = vsel %vm1554, %v2327, 0.0
        %v2332 = vadd.f32 %v2330, %v2331
        %2333 = vadd.xlane.f32.xlu0 %v2332
        %v2334 = vpop.xlane.xlu0 %2333
        %vm2335 = vcmask 9224
        %2336 = vst.msk [vmem:[%s291] sm:$0x3] %vm2335, %v2334
      $region40: #{upconv_forward.1} parent=31 // pred_fallthru
        _
      %p2337 = scmp.eq.s32.totalorder %s23, 2
      // Predicated region
      $region41: #{upconv_forward.1} parent=31 // pred_check
        %p2338 = pneg %p2337
      $region42: #{upconv_forward.1} parent=31 // pred_check_branch
        %2340 = sbr.rel (%p2338) target = $region44
      $region43: #{upconv_forward.1} parent=31 // pred_region
        %v2341 = vld [vmem:[%s268] sm:$0x1]
        %v2342 = vld [vmem:[%s261] sm:$0xff]
        %s2343 = scalar_lea.vmem %s268, 1
        %v2344 = vld [vmem:[%s2343] sm:$0x1]
        %v2346 = vcombine.high %v2342, %v2342
        %v2348 = vunpack.c.l.s4 1983009808
        %v2349 = vunpack.c.0.s8 %v2348
        %v2350 = vlaneseq
        %v2351 = vshrl.u32 %v2350, 7
        %v2352 = vsub.s32 %v2349, %v2351
        %v2353 = vrot.slane %v2342, %v2352
        %v2355 = vunpack.c.l.s4 1983009808
        %v2356 = vunpack.c.0.s8 %v2355
        %v2357 = vlaneseq
        %v2358 = vshrl.u32 %v2357, 7
        %v2359 = vsub.s32 %v2356, %v2358
        %v2360 = vrot.slane %v2346, %v2359
        %v2361 = vcombine.high %v2353, %v2353
        %v2362 = vcombine.high %v2360, %v2360
        %2363 = vrot.lane.b32.xlu0 %v2353, 109
        %v2364 = vpop.permute.xlu0 %2363
        %2365 = vrot.lane.b32.xlu0 %v2361, 109
        %v2366 = vpop.permute.xlu0 %2365
        %2367 = vrot.lane.b32.xlu0 %v2360, 109
        %v2368 = vpop.permute.xlu0 %2367
        %2369 = vrot.lane.b32.xlu0 %v2362, 109
        %v2370 = vpop.permute.xlu0 %2369
        %vm2371 = vcmask 891904
        %v2372 = vsel %vm2371, %v2364, %v2366
        %v2373 = vsel %vm2371, %v2366, %v2368
        %v2374 = vsel %vm2371, %v2368, %v2370
        %vm2375 = vcmask 31744
        %v2377 = vsel %vm2375, %v2344, 0
        %vm2379 = vcmask 1041408
        %v2381 = vsel %vm2379, %v2372, 0
        %v2384 = vsel %vm2379, %v2373, 0
        %v2387 = vsel %vm2379, %v2374, 0
        %2389 = vmatprep.subr.bf16.mxu0 %v2384
        %2390 = vmatpush1.bf16.msra.mxu0 %v2381
        %2391 = vmatprep.subr.bf16.mxu0 0
        %2392 = vmatpush1.bf16.msra.mxu0 0
        %2393 = vmatprep.subr.bf16.mxu0 0
        %2394 = vmatpush1.bf16.msra.mxu0 0
        %2395 = vmatprep.subr.bf16.mxu0 0
        %2396 = vmatpush1.bf16.msra.mxu0 0
        %2397 = vmatprep.subr.bf16.mxu0 0
        %2398 = vmatpush1.bf16.msra.mxu0 0
        %2399 = vmatprep.subr.bf16.mxu0 0
        %2400 = vmatpush1.bf16.msra.mxu0 0
        %2401 = vmatprep.subr.bf16.mxu0 0
        %2402 = vmatpush1.bf16.msra.mxu0 0
        %2403 = vmatprep.subr.bf16.mxu0 0
        %2404 = vmatpush1.bf16.msra.mxu0 0
        %2405 = vmatprep.subr.bf16.mxu0 0
        %2406 = vmatpush1.bf16.msra.mxu0 0
        %2407 = vmatprep.subr.bf16.mxu0 0
        %2408 = vmatpush1.bf16.msra.mxu0 0
        %2409 = vmatprep.subr.bf16.mxu0 0
        %2410 = vmatpush1.bf16.msra.mxu0 0
        %2411 = vmatprep.subr.bf16.mxu0 0
        %2412 = vmatpush1.bf16.msra.mxu0 0
        %2413 = vmatprep.subr.bf16.mxu0 0
        %2414 = vmatpush1.bf16.msra.mxu0 0
        %2415 = vmatprep.subr.bf16.mxu0 0
        %2416 = vmatpush1.bf16.msra.mxu0 0
        %2417 = vmatprep.subr.bf16.mxu0 0
        %2418 = vmatpush1.bf16.msra.mxu0 0
        %2419 = vmatprep.subr.bf16.mxu0 0
        %2420 = vmatpush1.bf16.msra.mxu0 0
        %2421 = vmatprep.mubr.bf16.mxu0 0
        %2422 = vmatmul.mubr.bf16.gmra.mrb[0].mxu0 %v2377
        %v2423 = vpop.f32.mrb[0].mxu0
        %v2424 = vadd.f32 0.0, %v2423
        %v2425 = vpop.f32.mrb[0].mxu0
        %v2426 = vadd.f32 0.0, %v2425
        %v2427 = vpop.f32.mrb[0].mxu0
        %v2428 = vpop.f32.mrb[0].mxu0
        %2429 = vdwg.mxu0
        %2430 = vmatprep.subr.bf16.mxu0 0
        %2431 = vmatpush1.bf16.msra.mxu0 %v2387
        %2432 = vmatprep.subr.bf16.mxu0 0
        %2433 = vmatpush1.bf16.msra.mxu0 0
        %2434 = vmatprep.subr.bf16.mxu0 0
        %2435 = vmatpush1.bf16.msra.mxu0 0
        %2436 = vmatprep.subr.bf16.mxu0 0
        %2437 = vmatpush1.bf16.msra.mxu0 0
        %2438 = vmatprep.subr.bf16.mxu0 0
        %2439 = vmatpush1.bf16.msra.mxu0 0
        %2440 = vmatprep.subr.bf16.mxu0 0
        %2441 = vmatpush1.bf16.msra.mxu0 0
        %2442 = vmatprep.subr.bf16.mxu0 0
        %2443 = vmatpush1.bf16.msra.mxu0 0
        %2444 = vmatprep.subr.bf16.mxu0 0
        %2445 = vmatpush1.bf16.msra.mxu0 0
        %2446 = vmatprep.subr.bf16.mxu0 0
        %2447 = vmatpush1.bf16.msra.mxu0 0
        %2448 = vmatprep.subr.bf16.mxu0 0
        %2449 = vmatpush1.bf16.msra.mxu0 0
        %2450 = vmatprep.subr.bf16.mxu0 0
        %2451 = vmatpush1.bf16.msra.mxu0 0
        %2452 = vmatprep.subr.bf16.mxu0 0
        %2453 = vmatpush1.bf16.msra.mxu0 0
        %2454 = vmatprep.subr.bf16.mxu0 0
        %2455 = vmatpush1.bf16.msra.mxu0 0
        %2456 = vmatprep.subr.bf16.mxu0 0
        %2457 = vmatpush1.bf16.msra.mxu0 0
        %2458 = vmatprep.subr.bf16.mxu0 0
        %2459 = vmatpush1.bf16.msra.mxu0 0
        %2460 = vmatprep.subr.bf16.mxu0 0
        %2461 = vmatpush1.bf16.msra.mxu0 0
        %2462 = vmatprep.mubr.bf16.mxu0 0
        %2463 = vmatmul.mubr.bf16.gmra.mrb[0].mxu0 %v2377
        %v2464 = vpop.f32.mrb[0].mxu0
        %v2465 = vadd.f32 0.0, %v2464
        %v2466 = vpop.f32.mrb[0].mxu0
        %v2467 = vpop.f32.mrb[0].mxu0
        %v2468 = vpop.f32.mrb[0].mxu0
        %2469 = vdwg.mxu0
        %2470 = vrot.lane.b32.xlu0 %v2353, 110
        %v2471 = vpop.permute.xlu0 %2470
        %2472 = vrot.lane.b32.xlu0 %v2361, 110
        %v2473 = vpop.permute.xlu0 %2472
        %2474 = vrot.lane.b32.xlu0 %v2360, 110
        %v2475 = vpop.permute.xlu0 %2474
        %2476 = vrot.lane.b32.xlu0 %v2362, 110
        %v2477 = vpop.permute.xlu0 %2476
        %vm2478 = vcmask 900096
        %v2479 = vsel %vm2478, %v2471, %v2473
        %v2480 = vsel %vm2478, %v2473, %v2475
        %v2481 = vsel %vm2478, %v2475, %v2477
        %v2483 = vsel %vm2375, %v2341, 0
        %v2486 = vsel %vm2379, %v2479, 0
        %v2489 = vsel %vm2379, %v2480, 0
        %v2492 = vsel %vm2379, %v2481, 0
        %2494 = vmatprep.subr.bf16.mxu0 %v2489
        %2495 = vmatpush1.bf16.msra.mxu0 %v2486
        %2496 = vmatprep.subr.bf16.mxu0 0
        %2497 = vmatpush1.bf16.msra.mxu0 0
        %2498 = vmatprep.subr.bf16.mxu0 0
        %2499 = vmatpush1.bf16.msra.mxu0 0
        %2500 = vmatprep.subr.bf16.mxu0 0
        %2501 = vmatpush1.bf16.msra.mxu0 0
        %2502 = vmatprep.subr.bf16.mxu0 0
        %2503 = vmatpush1.bf16.msra.mxu0 0
        %2504 = vmatprep.subr.bf16.mxu0 0
        %2505 = vmatpush1.bf16.msra.mxu0 0
        %2506 = vmatprep.subr.bf16.mxu0 0
        %2507 = vmatpush1.bf16.msra.mxu0 0
        %2508 = vmatprep.subr.bf16.mxu0 0
        %2509 = vmatpush1.bf16.msra.mxu0 0
        %2510 = vmatprep.subr.bf16.mxu0 0
        %2511 = vmatpush1.bf16.msra.mxu0 0
        %2512 = vmatprep.subr.bf16.mxu0 0
        %2513 = vmatpush1.bf16.msra.mxu0 0
        %2514 = vmatprep.subr.bf16.mxu0 0
        %2515 = vmatpush1.bf16.msra.mxu0 0
        %2516 = vmatprep.subr.bf16.mxu0 0
        %2517 = vmatpush1.bf16.msra.mxu0 0
        %2518 = vmatprep.subr.bf16.mxu0 0
        %2519 = vmatpush1.bf16.msra.mxu0 0
        %2520 = vmatprep.subr.bf16.mxu0 0
        %2521 = vmatpush1.bf16.msra.mxu0 0
        %2522 = vmatprep.subr.bf16.mxu0 0
        %2523 = vmatpush1.bf16.msra.mxu0 0
        %2524 = vmatprep.subr.bf16.mxu0 0
        %2525 = vmatpush1.bf16.msra.mxu0 0
        %2526 = vmatprep.mubr.bf16.mxu0 0
        %2527 = vmatmul.mubr.bf16.gmra.mrb[0].mxu0 %v2483
        %v2528 = vpop.f32.mrb[0].mxu0
        %v2529 = vadd.f32 %v2424, %v2528
        %v2530 = vpop.f32.mrb[0].mxu0
        %v2531 = vadd.f32 %v2426, %v2530
        %v2532 = vpop.f32.mrb[0].mxu0
        %v2533 = vpop.f32.mrb[0].mxu0
        %2534 = vdwg.mxu0
        %2535 = vmatprep.subr.bf16.mxu0 0
        %2536 = vmatpush1.bf16.msra.mxu0 %v2492
        %2537 = vmatprep.subr.bf16.mxu0 0
        %2538 = vmatpush1.bf16.msra.mxu0 0
        %2539 = vmatprep.subr.bf16.mxu0 0
        %2540 = vmatpush1.bf16.msra.mxu0 0
        %2541 = vmatprep.subr.bf16.mxu0 0
        %2542 = vmatpush1.bf16.msra.mxu0 0
        %2543 = vmatprep.subr.bf16.mxu0 0
        %2544 = vmatpush1.bf16.msra.mxu0 0
        %2545 = vmatprep.subr.bf16.mxu0 0
        %2546 = vmatpush1.bf16.msra.mxu0 0
        %2547 = vmatprep.subr.bf16.mxu0 0
        %2548 = vmatpush1.bf16.msra.mxu0 0
        %2549 = vmatprep.subr.bf16.mxu0 0
        %2550 = vmatpush1.bf16.msra.mxu0 0
        %2551 = vmatprep.subr.bf16.mxu0 0
        %2552 = vmatpush1.bf16.msra.mxu0 0
        %2553 = vmatprep.subr.bf16.mxu0 0
        %2554 = vmatpush1.bf16.msra.mxu0 0
        %2555 = vmatprep.subr.bf16.mxu0 0
        %2556 = vmatpush1.bf16.msra.mxu0 0
        %2557 = vmatprep.subr.bf16.mxu0 0
        %2558 = vmatpush1.bf16.msra.mxu0 0
        %2559 = vmatprep.subr.bf16.mxu0 0
        %2560 = vmatpush1.bf16.msra.mxu0 0
        %2561 = vmatprep.subr.bf16.mxu0 0
        %2562 = vmatpush1.bf16.msra.mxu0 0
        %2563 = vmatprep.subr.bf16.mxu0 0
        %2564 = vmatpush1.bf16.msra.mxu0 0
        %2565 = vmatprep.subr.bf16.mxu0 0
        %2566 = vmatpush1.bf16.msra.mxu0 0
        %2567 = vmatprep.mubr.bf16.mxu0 0
        %2568 = vmatmul.mubr.bf16.gmra.mrb[0].mxu0 %v2483
        %v2569 = vpop.f32.mrb[0].mxu0
        %v2570 = vadd.f32 %v2465, %v2569
        %v2571 = vpop.f32.mrb[0].mxu0
        %v2572 = vpop.f32.mrb[0].mxu0
        %v2573 = vpop.f32.mrb[0].mxu0
        %2574 = vdwg.mxu0
        %s2575 = scalar_lea.vmem %s268, 2
        %v2576 = vld [vmem:[%s2575] sm:$0x1]
        %v2577 = vld [vmem:[%s261] sm:$0xff]
        %v2579 = vcombine.high %v2577, %v2577
        %v2581 = vunpack.c.l.s4 1983009808
        %v2582 = vunpack.c.0.s8 %v2581
        %v2583 = vlaneseq
        %v2584 = vshrl.u32 %v2583, 7
        %v2585 = vsub.s32 %v2582, %v2584
        %v2586 = vrot.slane %v2577, %v2585
        %v2588 = vunpack.c.l.s4 1983009808
        %v2589 = vunpack.c.0.s8 %v2588
        %v2590 = vlaneseq
        %v2591 = vshrl.u32 %v2590, 7
        %v2592 = vsub.s32 %v2589, %v2591
        %v2593 = vrot.slane %v2579, %v2592
        %v2594 = vcombine.high %v2586, %v2586
        %v2595 = vcombine.high %v2593, %v2593
        %2596 = vrot.lane.b32.xlu0 %v2586, 108
        %v2597 = vpop.permute.xlu0 %2596
        %2598 = vrot.lane.b32.xlu0 %v2594, 108
        %v2599 = vpop.permute.xlu0 %2598
        %2600 = vrot.lane.b32.xlu0 %v2593, 108
        %v2601 = vpop.permute.xlu0 %2600
        %2602 = vrot.lane.b32.xlu0 %v2595, 108
        %v2603 = vpop.permute.xlu0 %2602
        %vm2604 = vcmask 883712
        %v2605 = vsel %vm2604, %v2597, %v2599
        %v2606 = vsel %vm2604, %v2599, %v2601
        %v2607 = vsel %vm2604, %v2601, %v2603
        %v2609 = vsel %vm2375, %v2576, 0
        %v2612 = vsel %vm2379, %v2605, 0
        %v2615 = vsel %vm2379, %v2606, 0
        %v2618 = vsel %vm2379, %v2607, 0
        %2620 = vmatprep.subr.bf16.mxu0 %v2615
        %2621 = vmatpush1.bf16.msra.mxu0 %v2612
        %2622 = vmatprep.subr.bf16.mxu0 0
        %2623 = vmatpush1.bf16.msra.mxu0 0
        %2624 = vmatprep.subr.bf16.mxu0 0
        %2625 = vmatpush1.bf16.msra.mxu0 0
        %2626 = vmatprep.subr.bf16.mxu0 0
        %2627 = vmatpush1.bf16.msra.mxu0 0
        %2628 = vmatprep.subr.bf16.mxu0 0
        %2629 = vmatpush1.bf16.msra.mxu0 0
        %2630 = vmatprep.subr.bf16.mxu0 0
        %2631 = vmatpush1.bf16.msra.mxu0 0
        %2632 = vmatprep.subr.bf16.mxu0 0
        %2633 = vmatpush1.bf16.msra.mxu0 0
        %2634 = vmatprep.subr.bf16.mxu0 0
        %2635 = vmatpush1.bf16.msra.mxu0 0
        %2636 = vmatprep.subr.bf16.mxu0 0
        %2637 = vmatpush1.bf16.msra.mxu0 0
        %2638 = vmatprep.subr.bf16.mxu0 0
        %2639 = vmatpush1.bf16.msra.mxu0 0
        %2640 = vmatprep.subr.bf16.mxu0 0
        %2641 = vmatpush1.bf16.msra.mxu0 0
        %2642 = vmatprep.subr.bf16.mxu0 0
        %2643 = vmatpush1.bf16.msra.mxu0 0
        %2644 = vmatprep.subr.bf16.mxu0 0
        %2645 = vmatpush1.bf16.msra.mxu0 0
        %2646 = vmatprep.subr.bf16.mxu0 0
        %2647 = vmatpush1.bf16.msra.mxu0 0
        %2648 = vmatprep.subr.bf16.mxu0 0
        %2649 = vmatpush1.bf16.msra.mxu0 0
        %2650 = vmatprep.subr.bf16.mxu0 0
        %2651 = vmatpush1.bf16.msra.mxu0 0
        %2652 = vmatprep.mubr.bf16.mxu0 0
        %2653 = vmatmul.mubr.bf16.gmra.mrb[0].mxu0 %v2609
        %v2654 = vpop.f32.mrb[0].mxu0
        %v2655 = vadd.f32 0.0, %v2654
        %v2656 = vpop.f32.mrb[0].mxu0
        %v2657 = vadd.f32 0.0, %v2656
        %v2658 = vpop.f32.mrb[0].mxu0
        %v2659 = vpop.f32.mrb[0].mxu0
        %2660 = vdwg.mxu0
        %2661 = vmatprep.subr.bf16.mxu0 0
        %2662 = vmatpush1.bf16.msra.mxu0 %v2618
        %2663 = vmatprep.subr.bf16.mxu0 0
        %2664 = vmatpush1.bf16.msra.mxu0 0
        %2665 = vmatprep.subr.bf16.mxu0 0
        %2666 = vmatpush1.bf16.msra.mxu0 0
        %2667 = vmatprep.subr.bf16.mxu0 0
        %2668 = vmatpush1.bf16.msra.mxu0 0
        %2669 = vmatprep.subr.bf16.mxu0 0
        %2670 = vmatpush1.bf16.msra.mxu0 0
        %2671 = vmatprep.subr.bf16.mxu0 0
        %2672 = vmatpush1.bf16.msra.mxu0 0
        %2673 = vmatprep.subr.bf16.mxu0 0
        %2674 = vmatpush1.bf16.msra.mxu0 0
        %2675 = vmatprep.subr.bf16.mxu0 0
        %2676 = vmatpush1.bf16.msra.mxu0 0
        %2677 = vmatprep.subr.bf16.mxu0 0
        %2678 = vmatpush1.bf16.msra.mxu0 0
        %2679 = vmatprep.subr.bf16.mxu0 0
        %2680 = vmatpush1.bf16.msra.mxu0 0
        %2681 = vmatprep.subr.bf16.mxu0 0
        %2682 = vmatpush1.bf16.msra.mxu0 0
        %2683 = vmatprep.subr.bf16.mxu0 0
        %2684 = vmatpush1.bf16.msra.mxu0 0
        %2685 = vmatprep.subr.bf16.mxu0 0
        %2686 = vmatpush1.bf16.msra.mxu0 0
        %2687 = vmatprep.subr.bf16.mxu0 0
        %2688 = vmatpush1.bf16.msra.mxu0 0
        %2689 = vmatprep.subr.bf16.mxu0 0
        %2690 = vmatpush1.bf16.msra.mxu0 0
        %2691 = vmatprep.subr.bf16.mxu0 0
        %2692 = vmatpush1.bf16.msra.mxu0 0
        %2693 = vmatprep.mubr.bf16.mxu0 0
        %2694 = vmatmul.mubr.bf16.gmra.mrb[0].mxu0 %v2609
        %v2695 = vpop.f32.mrb[0].mxu0
        %v2696 = vadd.f32 0.0, %v2695
        %v2697 = vpop.f32.mrb[0].mxu0
        %v2698 = vpop.f32.mrb[0].mxu0
        %v2699 = vpop.f32.mrb[0].mxu0
        %2700 = vdwg.mxu0
        %v2701 = vadd.f32 %v2529, %v2655
        %v2702 = vadd.f32 %v2531, %v2657
        %v2703 = vadd.f32 %v2570, %v2696
        %s2704 = scalar_lea.vmem %s268, 3
        %v2705 = vld [vmem:[%s2704] sm:$0x1]
        %v2706 = vld [vmem:[%s261] sm:$0xff]
        %v2708 = vcombine.high %v2706, %v2706
        %v2710 = vunpack.c.l.s4 1983009808
        %v2711 = vunpack.c.0.s8 %v2710
        %v2712 = vlaneseq
        %v2713 = vshrl.u32 %v2712, 7
        %v2714 = vsub.s32 %v2711, %v2713
        %v2715 = vrot.slane %v2706, %v2714
        %v2717 = vunpack.c.l.s4 1983009808
        %v2718 = vunpack.c.0.s8 %v2717
        %v2719 = vlaneseq
        %v2720 = vshrl.u32 %v2719, 7
        %v2721 = vsub.s32 %v2718, %v2720
        %v2722 = vrot.slane %v2708, %v2721
        %v2723 = vcombine.high %v2715, %v2715
        %v2724 = vcombine.high %v2722, %v2722
        %2725 = vrot.lane.b32.xlu0 %v2715, 92
        %v2726 = vpop.permute.xlu0 %2725
        %2727 = vrot.lane.b32.xlu0 %v2723, 92
        %v2728 = vpop.permute.xlu0 %2727
        %2729 = vrot.lane.b32.xlu0 %v2722, 92
        %v2730 = vpop.permute.xlu0 %2729
        %2731 = vrot.lane.b32.xlu0 %v2724, 92
        %v2732 = vpop.permute.xlu0 %2731
        %vm2733 = vcmask 752640
        %v2734 = vsel %vm2733, %v2726, %v2728
        %v2735 = vsel %vm2733, %v2728, %v2730
        %v2736 = vsel %vm2733, %v2730, %v2732
        %v2738 = vsel %vm2375, %v2705, 0
        %v2741 = vsel %vm2379, %v2734, 0
        %v2744 = vsel %vm2379, %v2735, 0
        %v2747 = vsel %vm2379, %v2736, 0
        %2749 = vmatprep.subr.bf16.mxu0 %v2744
        %2750 = vmatpush1.bf16.msra.mxu0 %v2741
        %2751 = vmatprep.subr.bf16.mxu0 0
        %2752 = vmatpush1.bf16.msra.mxu0 0
        %2753 = vmatprep.subr.bf16.mxu0 0
        %2754 = vmatpush1.bf16.msra.mxu0 0
        %2755 = vmatprep.subr.bf16.mxu0 0
        %2756 = vmatpush1.bf16.msra.mxu0 0
        %2757 = vmatprep.subr.bf16.mxu0 0
        %2758 = vmatpush1.bf16.msra.mxu0 0
        %2759 = vmatprep.subr.bf16.mxu0 0
        %2760 = vmatpush1.bf16.msra.mxu0 0
        %2761 = vmatprep.subr.bf16.mxu0 0
        %2762 = vmatpush1.bf16.msra.mxu0 0
        %2763 = vmatprep.subr.bf16.mxu0 0
        %2764 = vmatpush1.bf16.msra.mxu0 0
        %2765 = vmatprep.subr.bf16.mxu0 0
        %2766 = vmatpush1.bf16.msra.mxu0 0
        %2767 = vmatprep.subr.bf16.mxu0 0
        %2768 = vmatpush1.bf16.msra.mxu0 0
        %2769 = vmatprep.subr.bf16.mxu0 0
        %2770 = vmatpush1.bf16.msra.mxu0 0
        %2771 = vmatprep.subr.bf16.mxu0 0
        %2772 = vmatpush1.bf16.msra.mxu0 0
        %2773 = vmatprep.subr.bf16.mxu0 0
        %2774 = vmatpush1.bf16.msra.mxu0 0
        %2775 = vmatprep.subr.bf16.mxu0 0
        %2776 = vmatpush1.bf16.msra.mxu0 0
        %2777 = vmatprep.subr.bf16.mxu0 0
        %2778 = vmatpush1.bf16.msra.mxu0 0
        %2779 = vmatprep.subr.bf16.mxu0 0
        %2780 = vmatpush1.bf16.msra.mxu0 0
        %2781 = vmatprep.mubr.bf16.mxu0 0
        %2782 = vmatmul.mubr.bf16.gmra.mrb[0].mxu0 %v2738
        %v2783 = vpop.f32.mrb[0].mxu0
        %v2784 = vadd.f32 0.0, %v2783
        %v2785 = vpop.f32.mrb[0].mxu0
        %v2786 = vadd.f32 0.0, %v2785
        %v2787 = vpop.f32.mrb[0].mxu0
        %v2788 = vpop.f32.mrb[0].mxu0
        %2789 = vdwg.mxu0
        %2790 = vmatprep.subr.bf16.mxu0 0
        %2791 = vmatpush1.bf16.msra.mxu0 %v2747
        %2792 = vmatprep.subr.bf16.mxu0 0
        %2793 = vmatpush1.bf16.msra.mxu0 0
        %2794 = vmatprep.subr.bf16.mxu0 0
        %2795 = vmatpush1.bf16.msra.mxu0 0
        %2796 = vmatprep.subr.bf16.mxu0 0
        %2797 = vmatpush1.bf16.msra.mxu0 0
        %2798 = vmatprep.subr.bf16.mxu0 0
        %2799 = vmatpush1.bf16.msra.mxu0 0
        %2800 = vmatprep.subr.bf16.mxu0 0
        %2801 = vmatpush1.bf16.msra.mxu0 0
        %2802 = vmatprep.subr.bf16.mxu0 0
        %2803 = vmatpush1.bf16.msra.mxu0 0
        %2804 = vmatprep.subr.bf16.mxu0 0
        %2805 = vmatpush1.bf16.msra.mxu0 0
        %2806 = vmatprep.subr.bf16.mxu0 0
        %2807 = vmatpush1.bf16.msra.mxu0 0
        %2808 = vmatprep.subr.bf16.mxu0 0
        %2809 = vmatpush1.bf16.msra.mxu0 0
        %2810 = vmatprep.subr.bf16.mxu0 0
        %2811 = vmatpush1.bf16.msra.mxu0 0
        %2812 = vmatprep.subr.bf16.mxu0 0
        %2813 = vmatpush1.bf16.msra.mxu0 0
        %2814 = vmatprep.subr.bf16.mxu0 0
        %2815 = vmatpush1.bf16.msra.mxu0 0
        %2816 = vmatprep.subr.bf16.mxu0 0
        %2817 = vmatpush1.bf16.msra.mxu0 0
        %2818 = vmatprep.subr.bf16.mxu0 0
        %2819 = vmatpush1.bf16.msra.mxu0 0
        %2820 = vmatprep.subr.bf16.mxu0 0
        %2821 = vmatpush1.bf16.msra.mxu0 0
        %2822 = vmatprep.mubr.bf16.mxu0 0
        %2823 = vmatmul.mubr.bf16.gmra.mrb[0].mxu0 %v2738
        %v2824 = vpop.f32.mrb[0].mxu0
        %v2825 = vadd.f32 0.0, %v2824
        %v2826 = vpop.f32.mrb[0].mxu0
        %v2827 = vpop.f32.mrb[0].mxu0
        %v2828 = vpop.f32.mrb[0].mxu0
        %2829 = vdwg.mxu0
        %v2830 = vadd.f32 %v2701, %v2784
        %v2831 = vadd.f32 %v2702, %v2786
        %v2832 = vadd.f32 %v2703, %v2825
        %s2833 = scalar_lea.vmem %s268, 4
        %v2834 = vld [vmem:[%s2833] sm:$0x1]
        %v2835 = vld [vmem:[%s261] sm:$0xff]
        %v2837 = vcombine.high %v2835, %v2835
        %v2839 = vunpack.c.l.s4 1983009808
        %v2840 = vunpack.c.0.s8 %v2839
        %v2841 = vlaneseq
        %v2842 = vshrl.u32 %v2841, 7
        %v2843 = vsub.s32 %v2840, %v2842
        %v2844 = vrot.slane %v2835, %v2843
        %v2846 = vunpack.c.l.s4 1983009808
        %v2847 = vunpack.c.0.s8 %v2846
        %v2848 = vlaneseq
        %v2849 = vshrl.u32 %v2848, 7
        %v2850 = vsub.s32 %v2847, %v2849
        %v2851 = vrot.slane %v2837, %v2850
        %v2852 = vcombine.high %v2844, %v2844
        %v2853 = vcombine.high %v2851, %v2851
        %2854 = vrot.lane.b32.xlu0 %v2844, 91
        %v2855 = vpop.permute.xlu0 %2854
        %2856 = vrot.lane.b32.xlu0 %v2852, 91
        %v2857 = vpop.permute.xlu0 %2856
        %2858 = vrot.lane.b32.xlu0 %v2851, 91
        %v2859 = vpop.permute.xlu0 %2858
        %2860 = vrot.lane.b32.xlu0 %v2853, 91
        %v2861 = vpop.permute.xlu0 %2860
        %vm2862 = vcmask 744448
        %v2863 = vsel %vm2862, %v2855, %v2857
        %v2864 = vsel %vm2862, %v2857, %v2859
        %v2865 = vsel %vm2862, %v2859, %v2861
        %v2867 = vsel %vm2375, %v2834, 0
        %v2870 = vsel %vm2379, %v2863, 0
        %v2873 = vsel %vm2379, %v2864, 0
        %v2876 = vsel %vm2379, %v2865, 0
        %2878 = vmatprep.subr.bf16.mxu0 %v2873
        %2879 = vmatpush1.bf16.msra.mxu0 %v2870
        %2880 = vmatprep.subr.bf16.mxu0 0
        %2881 = vmatpush1.bf16.msra.mxu0 0
        %2882 = vmatprep.subr.bf16.mxu0 0
        %2883 = vmatpush1.bf16.msra.mxu0 0
        %2884 = vmatprep.subr.bf16.mxu0 0
        %2885 = vmatpush1.bf16.msra.mxu0 0
        %2886 = vmatprep.subr.bf16.mxu0 0
        %2887 = vmatpush1.bf16.msra.mxu0 0
        %2888 = vmatprep.subr.bf16.mxu0 0
        %2889 = vmatpush1.bf16.msra.mxu0 0
        %2890 = vmatprep.subr.bf16.mxu0 0
        %2891 = vmatpush1.bf16.msra.mxu0 0
        %2892 = vmatprep.subr.bf16.mxu0 0
        %2893 = vmatpush1.bf16.msra.mxu0 0
        %2894 = vmatprep.subr.bf16.mxu0 0
        %2895 = vmatpush1.bf16.msra.mxu0 0
        %2896 = vmatprep.subr.bf16.mxu0 0
        %2897 = vmatpush1.bf16.msra.mxu0 0
        %2898 = vmatprep.subr.bf16.mxu0 0
        %2899 = vmatpush1.bf16.msra.mxu0 0
        %2900 = vmatprep.subr.bf16.mxu0 0
        %2901 = vmatpush1.bf16.msra.mxu0 0
        %2902 = vmatprep.subr.bf16.mxu0 0
        %2903 = vmatpush1.bf16.msra.mxu0 0
        %2904 = vmatprep.subr.bf16.mxu0 0
        %2905 = vmatpush1.bf16.msra.mxu0 0
        %2906 = vmatprep.subr.bf16.mxu0 0
        %2907 = vmatpush1.bf16.msra.mxu0 0
        %2908 = vmatprep.subr.bf16.mxu0 0
        %2909 = vmatpush1.bf16.msra.mxu0 0
        %2910 = vmatprep.mubr.bf16.mxu0 0
        %2911 = vmatmul.mubr.bf16.gmra.mrb[0].mxu0 %v2867
        %v2912 = vpop.f32.mrb[0].mxu0
        %v2913 = vadd.f32 0.0, %v2912
        %v2914 = vpop.f32.mrb[0].mxu0
        %v2915 = vadd.f32 0.0, %v2914
        %v2916 = vpop.f32.mrb[0].mxu0
        %v2917 = vpop.f32.mrb[0].mxu0
        %2918 = vdwg.mxu0
        %2919 = vmatprep.subr.bf16.mxu0 0
        %2920 = vmatpush1.bf16.msra.mxu0 %v2876
        %2921 = vmatprep.subr.bf16.mxu0 0
        %2922 = vmatpush1.bf16.msra.mxu0 0
        %2923 = vmatprep.subr.bf16.mxu0 0
        %2924 = vmatpush1.bf16.msra.mxu0 0
        %2925 = vmatprep.subr.bf16.mxu0 0
        %2926 = vmatpush1.bf16.msra.mxu0 0
        %2927 = vmatprep.subr.bf16.mxu0 0
        %2928 = vmatpush1.bf16.msra.mxu0 0
        %2929 = vmatprep.subr.bf16.mxu0 0
        %2930 = vmatpush1.bf16.msra.mxu0 0
        %2931 = vmatprep.subr.bf16.mxu0 0
        %2932 = vmatpush1.bf16.msra.mxu0 0
        %2933 = vmatprep.subr.bf16.mxu0 0
        %2934 = vmatpush1.bf16.msra.mxu0 0
        %2935 = vmatprep.subr.bf16.mxu0 0
        %2936 = vmatpush1.bf16.msra.mxu0 0
        %2937 = vmatprep.subr.bf16.mxu0 0
        %2938 = vmatpush1.bf16.msra.mxu0 0
        %2939 = vmatprep.subr.bf16.mxu0 0
        %2940 = vmatpush1.bf16.msra.mxu0 0
        %2941 = vmatprep.subr.bf16.mxu0 0
        %2942 = vmatpush1.bf16.msra.mxu0 0
        %2943 = vmatprep.subr.bf16.mxu0 0
        %2944 = vmatpush1.bf16.msra.mxu0 0
        %2945 = vmatprep.subr.bf16.mxu0 0
        %2946 = vmatpush1.bf16.msra.mxu0 0
        %2947 = vmatprep.subr.bf16.mxu0 0
        %2948 = vmatpush1.bf16.msra.mxu0 0
        %2949 = vmatprep.subr.bf16.mxu0 0
        %2950 = vmatpush1.bf16.msra.mxu0 0
        %2951 = vmatprep.mubr.bf16.mxu0 0
        %2952 = vmatmul.mubr.bf16.gmra.mrb[0].mxu0 %v2867
        %v2953 = vpop.f32.mrb[0].mxu0
        %v2954 = vadd.f32 0.0, %v2953
        %v2955 = vpop.f32.mrb[0].mxu0
        %v2956 = vpop.f32.mrb[0].mxu0
        %v2957 = vpop.f32.mrb[0].mxu0
        %2958 = vdwg.mxu0
        %v2959 = vadd.f32 %v2830, %v2913
        %v2960 = vadd.f32 %v2831, %v2915
        %v2961 = vadd.f32 %v2832, %v2954
        %s2962 = scalar_lea.vmem %s268, 5
        %v2963 = vld [vmem:[%s2962] sm:$0x1]
        %v2964 = vld [vmem:[%s261] sm:$0xff]
        %v2966 = vcombine.high %v2964, %v2964
        %v2968 = vunpack.c.l.s4 1983009808
        %v2969 = vunpack.c.0.s8 %v2968
        %v2970 = vlaneseq
        %v2971 = vshrl.u32 %v2970, 7
        %v2972 = vsub.s32 %v2969, %v2971
        %v2973 = vrot.slane %v2964, %v2972
        %v2975 = vunpack.c.l.s4 1983009808
        %v2976 = vunpack.c.0.s8 %v2975
        %v2977 = vlaneseq
        %v2978 = vshrl.u32 %v2977, 7
        %v2979 = vsub.s32 %v2976, %v2978
        %v2980 = vrot.slane %v2966, %v2979
        %v2981 = vcombine.high %v2973, %v2973
        %v2982 = vcombine.high %v2980, %v2980
        %2983 = vrot.lane.b32.xlu0 %v2973, 90
        %v2984 = vpop.permute.xlu0 %2983
        %2985 = vrot.lane.b32.xlu0 %v2981, 90
        %v2986 = vpop.permute.xlu0 %2985
        %2987 = vrot.lane.b32.xlu0 %v2980, 90
        %v2988 = vpop.permute.xlu0 %2987
        %2989 = vrot.lane.b32.xlu0 %v2982, 90
        %v2990 = vpop.permute.xlu0 %2989
        %vm2991 = vcmask 736256
        %v2992 = vsel %vm2991, %v2984, %v2986
        %v2993 = vsel %vm2991, %v2986, %v2988
        %v2994 = vsel %vm2991, %v2988, %v2990
        %v2996 = vsel %vm2375, %v2963, 0
        %v2999 = vsel %vm2379, %v2992, 0
        %v3002 = vsel %vm2379, %v2993, 0
        %v3005 = vsel %vm2379, %v2994, 0
        %3007 = vmatprep.subr.bf16.mxu0 %v3002
        %3008 = vmatpush1.bf16.msra.mxu0 %v2999
        %3009 = vmatprep.subr.bf16.mxu0 0
        %3010 = vmatpush1.bf16.msra.mxu0 0
        %3011 = vmatprep.subr.bf16.mxu0 0
        %3012 = vmatpush1.bf16.msra.mxu0 0
        %3013 = vmatprep.subr.bf16.mxu0 0
        %3014 = vmatpush1.bf16.msra.mxu0 0
        %3015 = vmatprep.subr.bf16.mxu0 0
        %3016 = vmatpush1.bf16.msra.mxu0 0
        %3017 = vmatprep.subr.bf16.mxu0 0
        %3018 = vmatpush1.bf16.msra.mxu0 0
        %3019 = vmatprep.subr.bf16.mxu0 0
        %3020 = vmatpush1.bf16.msra.mxu0 0
        %3021 = vmatprep.subr.bf16.mxu0 0
        %3022 = vmatpush1.bf16.msra.mxu0 0
        %3023 = vmatprep.subr.bf16.mxu0 0
        %3024 = vmatpush1.bf16.msra.mxu0 0
        %3025 = vmatprep.subr.bf16.mxu0 0
        %3026 = vmatpush1.bf16.msra.mxu0 0
        %3027 = vmatprep.subr.bf16.mxu0 0
        %3028 = vmatpush1.bf16.msra.mxu0 0
        %3029 = vmatprep.subr.bf16.mxu0 0
        %3030 = vmatpush1.bf16.msra.mxu0 0
        %3031 = vmatprep.subr.bf16.mxu0 0
        %3032 = vmatpush1.bf16.msra.mxu0 0
        %3033 = vmatprep.subr.bf16.mxu0 0
        %3034 = vmatpush1.bf16.msra.mxu0 0
        %3035 = vmatprep.subr.bf16.mxu0 0
        %3036 = vmatpush1.bf16.msra.mxu0 0
        %3037 = vmatprep.subr.bf16.mxu0 0
        %3038 = vmatpush1.bf16.msra.mxu0 0
        %3039 = vmatprep.mubr.bf16.mxu0 0
        %3040 = vmatmul.mubr.bf16.gmra.mrb[0].mxu0 %v2996
        %v3041 = vpop.f32.mrb[0].mxu0
        %v3042 = vadd.f32 0.0, %v3041
        %v3043 = vpop.f32.mrb[0].mxu0
        %v3044 = vadd.f32 0.0, %v3043
        %v3045 = vpop.f32.mrb[0].mxu0
        %v3046 = vpop.f32.mrb[0].mxu0
        %3047 = vdwg.mxu0
        %3048 = vmatprep.subr.bf16.mxu0 0
        %3049 = vmatpush1.bf16.msra.mxu0 %v3005
        %3050 = vmatprep.subr.bf16.mxu0 0
        %3051 = vmatpush1.bf16.msra.mxu0 0
        %3052 = vmatprep.subr.bf16.mxu0 0
        %3053 = vmatpush1.bf16.msra.mxu0 0
        %3054 = vmatprep.subr.bf16.mxu0 0
        %3055 = vmatpush1.bf16.msra.mxu0 0
        %3056 = vmatprep.subr.bf16.mxu0 0
        %3057 = vmatpush1.bf16.msra.mxu0 0
        %3058 = vmatprep.subr.bf16.mxu0 0
        %3059 = vmatpush1.bf16.msra.mxu0 0
        %3060 = vmatprep.subr.bf16.mxu0 0
        %3061 = vmatpush1.bf16.msra.mxu0 0
        %3062 = vmatprep.subr.bf16.mxu0 0
        %3063 = vmatpush1.bf16.msra.mxu0 0
        %3064 = vmatprep.subr.bf16.mxu0 0
        %3065 = vmatpush1.bf16.msra.mxu0 0
        %3066 = vmatprep.subr.bf16.mxu0 0
        %3067 = vmatpush1.bf16.msra.mxu0 0
        %3068 = vmatprep.subr.bf16.mxu0 0
        %3069 = vmatpush1.bf16.msra.mxu0 0
        %3070 = vmatprep.subr.bf16.mxu0 0
        %3071 = vmatpush1.bf16.msra.mxu0 0
        %3072 = vmatprep.subr.bf16.mxu0 0
        %3073 = vmatpush1.bf16.msra.mxu0 0
        %3074 = vmatprep.subr.bf16.mxu0 0
        %3075 = vmatpush1.bf16.msra.mxu0 0
        %3076 = vmatprep.subr.bf16.mxu0 0
        %3077 = vmatpush1.bf16.msra.mxu0 0
        %3078 = vmatprep.subr.bf16.mxu0 0
        %3079 = vmatpush1.bf16.msra.mxu0 0
        %3080 = vmatprep.mubr.bf16.mxu0 0
        %3081 = vmatmul.mubr.bf16.gmra.mrb[0].mxu0 %v2996
        %v3082 = vpop.f32.mrb[0].mxu0
        %v3083 = vadd.f32 0.0, %v3082
        %v3084 = vpop.f32.mrb[0].mxu0
        %v3085 = vpop.f32.mrb[0].mxu0
        %v3086 = vpop.f32.mrb[0].mxu0
        %3087 = vdwg.mxu0
        %v3088 = vadd.f32 %v2959, %v3042
        %v3089 = vadd.f32 %v2960, %v3044
        %v3090 = vadd.f32 %v2961, %v3083
        %v3091 = vpack.c.bf16 %v3088, %v3088
        %v3092 = vpack.c.bf16 %v3089, %v3089
        %v3093 = vpack.c.bf16 %v3090, %v3090
        %v3097 = vcombine.low %v3091, %v3092
        %v3099 = vunpack.c.l.s4 1966171168
        %v3100 = vunpack.c.0.s8 %v3099
        %v3101 = vlaneseq
        %v3102 = vshrl.u32 %v3101, 7
        %v3103 = vsub.s32 %v3100, %v3102
        %v3104 = vrot.slane %v3097, %v3103
        %v3106 = vunpack.c.l.s4 1966171168
        %v3107 = vunpack.c.0.s8 %v3106
        %v3108 = vlaneseq
        %v3109 = vshrl.u32 %v3108, 7
        %v3110 = vsub.s32 %v3107, %v3109
        %v3111 = vrot.slane %v3093, %v3110
        %v3112 = vcombine.low %v3104, %v3111
        %v3114 = vunpack.c.l.s4 1966171168
        %v3115 = vunpack.c.0.s8 %v3114
        %v3116 = vlaneseq
        %v3117 = vshrl.u32 %v3116, 7
        %v3118 = vsub.s32 %v3115, %v3117
        %v3119 = vrot.slane %v3112, %v3118
        %3121 = vst [vmem:[%s280] sm:$0x7] %v3119
        %v3123 = vlaneseq
        %v3124 = vshrl.u32 %v3123, 7
        %v3125 = vsub.s32 0, %v3124
        %v3126 = vrot.slane %v293, %v3125
        %v3127 = vlaneseq
        %v3128 = vshrl.u32 %v3127, 7
        %v3129 = vsub.s32 1, %v3128
        %v3130 = vrot.slane %v293, %v3129
        %v3131 = vlaneseq
        %v3132 = vshrl.u32 %v3131, 7
        %v3133 = vsub.s32 2, %v3132
        %v3134 = vrot.slane %v293, %v3133
        %v3138 = vmul.f32 %v3088, %v3126
        %v3139 = vmul.f32 %v3089, %v3130
        %v3140 = vmul.f32 %v3090, %v3134
        %v3141 = vsel %vm2379, %v3138, 0.0
        %v3142 = vsel %vm2379, %v3139, 0.0
        %v3143 = vadd.f32 %v3141, %v3142
        %v3144 = vsel %vm2379, %v3140, 0.0
        %v3145 = vadd.f32 %v3143, %v3144
        %3146 = vadd.xlane.f32.xlu0 %v3145
        %v3147 = vpop.xlane.xlu0 %3146
        %vm3148 = vcmask 1024
        %3149 = vst.msk [vmem:[%s291] sm:$0x3] %vm3148, %v3147
        %v3150 = vmul.f32 %v3138, %v3088
        %v3151 = vmul.f32 %v3139, %v3089
        %v3152 = vmul.f32 %v3140, %v3090
        %v3153 = vsel %vm2379, %v3150, 0.0
        %v3154 = vsel %vm2379, %v3151, 0.0
        %v3155 = vadd.f32 %v3153, %v3154
        %v3156 = vsel %vm2379, %v3152, 0.0
        %v3157 = vadd.f32 %v3155, %v3156
        %3158 = vadd.xlane.f32.xlu0 %v3157
        %v3159 = vpop.xlane.xlu0 %3158
        %vm3160 = vcmask 9224
        %3161 = vst.msk [vmem:[%s291] sm:$0x3] %vm3160, %v3159
      $region44: #{upconv_forward.1} parent=31 // pred_fallthru
        _
      %p3162 = scmp.eq.s32.totalorder %s23, 3
      // Predicated region
      $region45: #{upconv_forward.1} parent=31 // pred_check
        %p3163 = pneg %p3162
      $region46: #{upconv_forward.1} parent=31 // pred_check_branch
        %3165 = sbr.rel (%p3163) target = $region48
      $region47: #{upconv_forward.1} parent=31 // pred_region
        %v3166 = vld [vmem:[%s268] sm:$0x1]
        %v3167 = vld [vmem:[%s261] sm:$0xff]
        %s3168 = scalar_lea.vmem %s268, 1
        %v3169 = vld [vmem:[%s3168] sm:$0x1]
        %v3171 = vcombine.high %v3167, %v3167
        %v3173 = vunpack.c.l.s4 1983009808
        %v3174 = vunpack.c.0.s8 %v3173
        %v3175 = vlaneseq
        %v3176 = vshrl.u32 %v3175, 7
        %v3177 = vsub.s32 %v3174, %v3176
        %v3178 = vrot.slane %v3167, %v3177
        %v3180 = vunpack.c.l.s4 1983009808
        %v3181 = vunpack.c.0.s8 %v3180
        %v3182 = vlaneseq
        %v3183 = vshrl.u32 %v3182, 7
        %v3184 = vsub.s32 %v3181, %v3183
        %v3185 = vrot.slane %v3171, %v3184
        %v3186 = vcombine.high %v3178, %v3178
        %v3187 = vcombine.high %v3185, %v3185
        %3188 = vrot.lane.b32.xlu0 %v3178, 108
        %v3189 = vpop.permute.xlu0 %3188
        %3190 = vrot.lane.b32.xlu0 %v3186, 108
        %v3191 = vpop.permute.xlu0 %3190
        %3192 = vrot.lane.b32.xlu0 %v3185, 108
        %v3193 = vpop.permute.xlu0 %3192
        %3194 = vrot.lane.b32.xlu0 %v3187, 108
        %v3195 = vpop.permute.xlu0 %3194
        %vm3196 = vcmask 883712
        %v3197 = vsel %vm3196, %v3189, %v3191
        %v3198 = vsel %vm3196, %v3191, %v3193
        %v3199 = vsel %vm3196, %v3193, %v3195
        %vm3200 = vcmask 31744
        %v3202 = vsel %vm3200, %v3169, 0
        %vm3204 = vcmask 1041408
        %v3206 = vsel %vm3204, %v3197, 0
        %v3209 = vsel %vm3204, %v3198, 0
        %v3212 = vsel %vm3204, %v3199, 0
        %3214 = vmatprep.subr.bf16.mxu0 %v3209
        %3215 = vmatpush1.bf16.msra.mxu0 %v3206
        %3216 = vmatprep.subr.bf16.mxu0 0
        %3217 = vmatpush1.bf16.msra.mxu0 0
        %3218 = vmatprep.subr.bf16.mxu0 0
        %3219 = vmatpush1.bf16.msra.mxu0 0
        %3220 = vmatprep.subr.bf16.mxu0 0
        %3221 = vmatpush1.bf16.msra.mxu0 0
        %3222 = vmatprep.subr.bf16.mxu0 0
        %3223 = vmatpush1.bf16.msra.mxu0 0
        %3224 = vmatprep.subr.bf16.mxu0 0
        %3225 = vmatpush1.bf16.msra.mxu0 0
        %3226 = vmatprep.subr.bf16.mxu0 0
        %3227 = vmatpush1.bf16.msra.mxu0 0
        %3228 = vmatprep.subr.bf16.mxu0 0
        %3229 = vmatpush1.bf16.msra.mxu0 0
        %3230 = vmatprep.subr.bf16.mxu0 0
        %3231 = vmatpush1.bf16.msra.mxu0 0
        %3232 = vmatprep.subr.bf16.mxu0 0
        %3233 = vmatpush1.bf16.msra.mxu0 0
        %3234 = vmatprep.subr.bf16.mxu0 0
        %3235 = vmatpush1.bf16.msra.mxu0 0
        %3236 = vmatprep.subr.bf16.mxu0 0
        %3237 = vmatpush1.bf16.msra.mxu0 0
        %3238 = vmatprep.subr.bf16.mxu0 0
        %3239 = vmatpush1.bf16.msra.mxu0 0
        %3240 = vmatprep.subr.bf16.mxu0 0
        %3241 = vmatpush1.bf16.msra.mxu0 0
        %3242 = vmatprep.subr.bf16.mxu0 0
        %3243 = vmatpush1.bf16.msra.mxu0 0
        %3244 = vmatprep.subr.bf16.mxu0 0
        %3245 = vmatpush1.bf16.msra.mxu0 0
        %3246 = vmatprep.mubr.bf16.mxu0 0
        %3247 = vmatmul.mubr.bf16.gmra.mrb[0].mxu0 %v3202
        %v3248 = vpop.f32.mrb[0].mxu0
        %v3249 = vadd.f32 0.0, %v3248
        %v3250 = vpop.f32.mrb[0].mxu0
        %v3251 = vadd.f32 0.0, %v3250
        %v3252 = vpop.f32.mrb[0].mxu0
        %v3253 = vpop.f32.mrb[0].mxu0
        %3254 = vdwg.mxu0
        %3255 = vmatprep.subr.bf16.mxu0 0
        %3256 = vmatpush1.bf16.msra.mxu0 %v3212
        %3257 = vmatprep.subr.bf16.mxu0 0
        %3258 = vmatpush1.bf16.msra.mxu0 0
        %3259 = vmatprep.subr.bf16.mxu0 0
        %3260 = vmatpush1.bf16.msra.mxu0 0
        %3261 = vmatprep.subr.bf16.mxu0 0
        %3262 = vmatpush1.bf16.msra.mxu0 0
        %3263 = vmatprep.subr.bf16.mxu0 0
        %3264 = vmatpush1.bf16.msra.mxu0 0
        %3265 = vmatprep.subr.bf16.mxu0 0
        %3266 = vmatpush1.bf16.msra.mxu0 0
        %3267 = vmatprep.subr.bf16.mxu0 0
        %3268 = vmatpush1.bf16.msra.mxu0 0
        %3269 = vmatprep.subr.bf16.mxu0 0
        %3270 = vmatpush1.bf16.msra.mxu0 0
        %3271 = vmatprep.subr.bf16.mxu0 0
        %3272 = vmatpush1.bf16.msra.mxu0 0
        %3273 = vmatprep.subr.bf16.mxu0 0
        %3274 = vmatpush1.bf16.msra.mxu0 0
        %3275 = vmatprep.subr.bf16.mxu0 0
        %3276 = vmatpush1.bf16.msra.mxu0 0
        %3277 = vmatprep.subr.bf16.mxu0 0
        %3278 = vmatpush1.bf16.msra.mxu0 0
        %3279 = vmatprep.subr.bf16.mxu0 0
        %3280 = vmatpush1.bf16.msra.mxu0 0
        %3281 = vmatprep.subr.bf16.mxu0 0
        %3282 = vmatpush1.bf16.msra.mxu0 0
        %3283 = vmatprep.subr.bf16.mxu0 0
        %3284 = vmatpush1.bf16.msra.mxu0 0
        %3285 = vmatprep.subr.bf16.mxu0 0
        %3286 = vmatpush1.bf16.msra.mxu0 0
        %3287 = vmatprep.mubr.bf16.mxu0 0
        %3288 = vmatmul.mubr.bf16.gmra.mrb[0].mxu0 %v3202
        %v3289 = vpop.f32.mrb[0].mxu0
        %v3290 = vadd.f32 0.0, %v3289
        %v3291 = vpop.f32.mrb[0].mxu0
        %v3292 = vpop.f32.mrb[0].mxu0
        %v3293 = vpop.f32.mrb[0].mxu0
        %3294 = vdwg.mxu0
        %3295 = vrot.lane.b32.xlu0 %v3178, 109
        %v3296 = vpop.permute.xlu0 %3295
        %3297 = vrot.lane.b32.xlu0 %v3186, 109
        %v3298 = vpop.permute.xlu0 %3297
        %3299 = vrot.lane.b32.xlu0 %v3185, 109
        %v3300 = vpop.permute.xlu0 %3299
        %3301 = vrot.lane.b32.xlu0 %v3187, 109
        %v3302 = vpop.permute.xlu0 %3301
        %vm3303 = vcmask 891904
        %v3304 = vsel %vm3303, %v3296, %v3298
        %v3305 = vsel %vm3303, %v3298, %v3300
        %v3306 = vsel %vm3303, %v3300, %v3302
        %v3308 = vsel %vm3200, %v3166, 0
        %v3311 = vsel %vm3204, %v3304, 0
        %v3314 = vsel %vm3204, %v3305, 0
        %v3317 = vsel %vm3204, %v3306, 0
        %3319 = vmatprep.subr.bf16.mxu0 %v3314
        %3320 = vmatpush1.bf16.msra.mxu0 %v3311
        %3321 = vmatprep.subr.bf16.mxu0 0
        %3322 = vmatpush1.bf16.msra.mxu0 0
        %3323 = vmatprep.subr.bf16.mxu0 0
        %3324 = vmatpush1.bf16.msra.mxu0 0
        %3325 = vmatprep.subr.bf16.mxu0 0
        %3326 = vmatpush1.bf16.msra.mxu0 0
        %3327 = vmatprep.subr.bf16.mxu0 0
        %3328 = vmatpush1.bf16.msra.mxu0 0
        %3329 = vmatprep.subr.bf16.mxu0 0
        %3330 = vmatpush1.bf16.msra.mxu0 0
        %3331 = vmatprep.subr.bf16.mxu0 0
        %3332 = vmatpush1.bf16.msra.mxu0 0
        %3333 = vmatprep.subr.bf16.mxu0 0
        %3334 = vmatpush1.bf16.msra.mxu0 0
        %3335 = vmatprep.subr.bf16.mxu0 0
        %3336 = vmatpush1.bf16.msra.mxu0 0
        %3337 = vmatprep.subr.bf16.mxu0 0
        %3338 = vmatpush1.bf16.msra.mxu0 0
        %3339 = vmatprep.subr.bf16.mxu0 0
        %3340 = vmatpush1.bf16.msra.mxu0 0
        %3341 = vmatprep.subr.bf16.mxu0 0
        %3342 = vmatpush1.bf16.msra.mxu0 0
        %3343 = vmatprep.subr.bf16.mxu0 0
        %3344 = vmatpush1.bf16.msra.mxu0 0
        %3345 = vmatprep.subr.bf16.mxu0 0
        %3346 = vmatpush1.bf16.msra.mxu0 0
        %3347 = vmatprep.subr.bf16.mxu0 0
        %3348 = vmatpush1.bf16.msra.mxu0 0
        %3349 = vmatprep.subr.bf16.mxu0 0
        %3350 = vmatpush1.bf16.msra.mxu0 0
        %3351 = vmatprep.mubr.bf16.mxu0 0
        %3352 = vmatmul.mubr.bf16.gmra.mrb[0].mxu0 %v3308
        %v3353 = vpop.f32.mrb[0].mxu0
        %v3354 = vadd.f32 %v3249, %v3353
        %v3355 = vpop.f32.mrb[0].mxu0
        %v3356 = vadd.f32 %v3251, %v3355
        %v3357 = vpop.f32.mrb[0].mxu0
        %v3358 = vpop.f32.mrb[0].mxu0
        %3359 = vdwg.mxu0
        %3360 = vmatprep.subr.bf16.mxu0 0
        %3361 = vmatpush1.bf16.msra.mxu0 %v3317
        %3362 = vmatprep.subr.bf16.mxu0 0
        %3363 = vmatpush1.bf16.msra.mxu0 0
        %3364 = vmatprep.subr.bf16.mxu0 0
        %3365 = vmatpush1.bf16.msra.mxu0 0
        %3366 = vmatprep.subr.bf16.mxu0 0
        %3367 = vmatpush1.bf16.msra.mxu0 0
        %3368 = vmatprep.subr.bf16.mxu0 0
        %3369 = vmatpush1.bf16.msra.mxu0 0
        %3370 = vmatprep.subr.bf16.mxu0 0
        %3371 = vmatpush1.bf16.msra.mxu0 0
        %3372 = vmatprep.subr.bf16.mxu0 0
        %3373 = vmatpush1.bf16.msra.mxu0 0
        %3374 = vmatprep.subr.bf16.mxu0 0
        %3375 = vmatpush1.bf16.msra.mxu0 0
        %3376 = vmatprep.subr.bf16.mxu0 0
        %3377 = vmatpush1.bf16.msra.mxu0 0
        %3378 = vmatprep.subr.bf16.mxu0 0
        %3379 = vmatpush1.bf16.msra.mxu0 0
        %3380 = vmatprep.subr.bf16.mxu0 0
        %3381 = vmatpush1.bf16.msra.mxu0 0
        %3382 = vmatprep.subr.bf16.mxu0 0
        %3383 = vmatpush1.bf16.msra.mxu0 0
        %3384 = vmatprep.subr.bf16.mxu0 0
        %3385 = vmatpush1.bf16.msra.mxu0 0
        %3386 = vmatprep.subr.bf16.mxu0 0
        %3387 = vmatpush1.bf16.msra.mxu0 0
        %3388 = vmatprep.subr.bf16.mxu0 0
        %3389 = vmatpush1.bf16.msra.mxu0 0
        %3390 = vmatprep.subr.bf16.mxu0 0
        %3391 = vmatpush1.bf16.msra.mxu0 0
        %3392 = vmatprep.mubr.bf16.mxu0 0
        %3393 = vmatmul.mubr.bf16.gmra.mrb[0].mxu0 %v3308
        %v3394 = vpop.f32.mrb[0].mxu0
        %v3395 = vadd.f32 %v3290, %v3394
        %v3396 = vpop.f32.mrb[0].mxu0
        %v3397 = vpop.f32.mrb[0].mxu0
        %v3398 = vpop.f32.mrb[0].mxu0
        %3399 = vdwg.mxu0
        %s3400 = scalar_lea.vmem %s268, 2
        %v3401 = vld [vmem:[%s3400] sm:$0x1]
        %v3402 = vld [vmem:[%s261] sm:$0xff]
        %v3404 = vcombine.high %v3402, %v3402
        %v3406 = vunpack.c.l.s4 1983009808
        %v3407 = vunpack.c.0.s8 %v3406
        %v3408 = vlaneseq
        %v3409 = vshrl.u32 %v3408, 7
        %v3410 = vsub.s32 %v3407, %v3409
        %v3411 = vrot.slane %v3402, %v3410
        %v3413 = vunpack.c.l.s4 1983009808
        %v3414 = vunpack.c.0.s8 %v3413
        %v3415 = vlaneseq
        %v3416 = vshrl.u32 %v3415, 7
        %v3417 = vsub.s32 %v3414, %v3416
        %v3418 = vrot.slane %v3404, %v3417
        %v3419 = vcombine.high %v3411, %v3411
        %v3420 = vcombine.high %v3418, %v3418
        %3421 = vrot.lane.b32.xlu0 %v3411, 91
        %v3422 = vpop.permute.xlu0 %3421
        %3423 = vrot.lane.b32.xlu0 %v3419, 91
        %v3424 = vpop.permute.xlu0 %3423
        %3425 = vrot.lane.b32.xlu0 %v3418, 91
        %v3426 = vpop.permute.xlu0 %3425
        %3427 = vrot.lane.b32.xlu0 %v3420, 91
        %v3428 = vpop.permute.xlu0 %3427
        %vm3429 = vcmask 744448
        %v3430 = vsel %vm3429, %v3422, %v3424
        %v3431 = vsel %vm3429, %v3424, %v3426
        %v3432 = vsel %vm3429, %v3426, %v3428
        %v3434 = vsel %vm3200, %v3401, 0
        %v3437 = vsel %vm3204, %v3430, 0
        %v3440 = vsel %vm3204, %v3431, 0
        %v3443 = vsel %vm3204, %v3432, 0
        %3445 = vmatprep.subr.bf16.mxu0 %v3440
        %3446 = vmatpush1.bf16.msra.mxu0 %v3437
        %3447 = vmatprep.subr.bf16.mxu0 0
        %3448 = vmatpush1.bf16.msra.mxu0 0
        %3449 = vmatprep.subr.bf16.mxu0 0
        %3450 = vmatpush1.bf16.msra.mxu0 0
        %3451 = vmatprep.subr.bf16.mxu0 0
        %3452 = vmatpush1.bf16.msra.mxu0 0
        %3453 = vmatprep.subr.bf16.mxu0 0
        %3454 = vmatpush1.bf16.msra.mxu0 0
        %3455 = vmatprep.subr.bf16.mxu0 0
        %3456 = vmatpush1.bf16.msra.mxu0 0
        %3457 = vmatprep.subr.bf16.mxu0 0
        %3458 = vmatpush1.bf16.msra.mxu0 0
        %3459 = vmatprep.subr.bf16.mxu0 0
        %3460 = vmatpush1.bf16.msra.mxu0 0
        %3461 = vmatprep.subr.bf16.mxu0 0
        %3462 = vmatpush1.bf16.msra.mxu0 0
        %3463 = vmatprep.subr.bf16.mxu0 0
        %3464 = vmatpush1.bf16.msra.mxu0 0
        %3465 = vmatprep.subr.bf16.mxu0 0
        %3466 = vmatpush1.bf16.msra.mxu0 0
        %3467 = vmatprep.subr.bf16.mxu0 0
        %3468 = vmatpush1.bf16.msra.mxu0 0
        %3469 = vmatprep.subr.bf16.mxu0 0
        %3470 = vmatpush1.bf16.msra.mxu0 0
        %3471 = vmatprep.subr.bf16.mxu0 0
        %3472 = vmatpush1.bf16.msra.mxu0 0
        %3473 = vmatprep.subr.bf16.mxu0 0
        %3474 = vmatpush1.bf16.msra.mxu0 0
        %3475 = vmatprep.subr.bf16.mxu0 0
        %3476 = vmatpush1.bf16.msra.mxu0 0
        %3477 = vmatprep.mubr.bf16.mxu0 0
        %3478 = vmatmul.mubr.bf16.gmra.mrb[0].mxu0 %v3434
        %v3479 = vpop.f32.mrb[0].mxu0
        %v3480 = vadd.f32 0.0, %v3479
        %v3481 = vpop.f32.mrb[0].mxu0
        %v3482 = vadd.f32 0.0, %v3481
        %v3483 = vpop.f32.mrb[0].mxu0
        %v3484 = vpop.f32.mrb[0].mxu0
        %3485 = vdwg.mxu0
        %3486 = vmatprep.subr.bf16.mxu0 0
        %3487 = vmatpush1.bf16.msra.mxu0 %v3443
        %3488 = vmatprep.subr.bf16.mxu0 0
        %3489 = vmatpush1.bf16.msra.mxu0 0
        %3490 = vmatprep.subr.bf16.mxu0 0
        %3491 = vmatpush1.bf16.msra.mxu0 0
        %3492 = vmatprep.subr.bf16.mxu0 0
        %3493 = vmatpush1.bf16.msra.mxu0 0
        %3494 = vmatprep.subr.bf16.mxu0 0
        %3495 = vmatpush1.bf16.msra.mxu0 0
        %3496 = vmatprep.subr.bf16.mxu0 0
        %3497 = vmatpush1.bf16.msra.mxu0 0
        %3498 = vmatprep.subr.bf16.mxu0 0
        %3499 = vmatpush1.bf16.msra.mxu0 0
        %3500 = vmatprep.subr.bf16.mxu0 0
        %3501 = vmatpush1.bf16.msra.mxu0 0
        %3502 = vmatprep.subr.bf16.mxu0 0
        %3503 = vmatpush1.bf16.msra.mxu0 0
        %3504 = vmatprep.subr.bf16.mxu0 0
        %3505 = vmatpush1.bf16.msra.mxu0 0
        %3506 = vmatprep.subr.bf16.mxu0 0
        %3507 = vmatpush1.bf16.msra.mxu0 0
        %3508 = vmatprep.subr.bf16.mxu0 0
        %3509 = vmatpush1.bf16.msra.mxu0 0
        %3510 = vmatprep.subr.bf16.mxu0 0
        %3511 = vmatpush1.bf16.msra.mxu0 0
        %3512 = vmatprep.subr.bf16.mxu0 0
        %3513 = vmatpush1.bf16.msra.mxu0 0
        %3514 = vmatprep.subr.bf16.mxu0 0
        %3515 = vmatpush1.bf16.msra.mxu0 0
        %3516 = vmatprep.subr.bf16.mxu0 0
        %3517 = vmatpush1.bf16.msra.mxu0 0
        %3518 = vmatprep.mubr.bf16.mxu0 0
        %3519 = vmatmul.mubr.bf16.gmra.mrb[0].mxu0 %v3434
        %v3520 = vpop.f32.mrb[0].mxu0
        %v3521 = vadd.f32 0.0, %v3520
        %v3522 = vpop.f32.mrb[0].mxu0
        %v3523 = vpop.f32.mrb[0].mxu0
        %v3524 = vpop.f32.mrb[0].mxu0
        %3525 = vdwg.mxu0
        %v3526 = vadd.f32 %v3354, %v3480
        %v3527 = vadd.f32 %v3356, %v3482
        %v3528 = vadd.f32 %v3395, %v3521
        %s3529 = scalar_lea.vmem %s268, 3
        %v3530 = vld [vmem:[%s3529] sm:$0x1]
        %v3531 = vld [vmem:[%s261] sm:$0xff]
        %v3533 = vcombine.high %v3531, %v3531
        %v3535 = vunpack.c.l.s4 1983009808
        %v3536 = vunpack.c.0.s8 %v3535
        %v3537 = vlaneseq
        %v3538 = vshrl.u32 %v3537, 7
        %v3539 = vsub.s32 %v3536, %v3538
        %v3540 = vrot.slane %v3531, %v3539
        %v3542 = vunpack.c.l.s4 1983009808
        %v3543 = vunpack.c.0.s8 %v3542
        %v3544 = vlaneseq
        %v3545 = vshrl.u32 %v3544, 7
        %v3546 = vsub.s32 %v3543, %v3545
        %v3547 = vrot.slane %v3533, %v3546
        %v3548 = vcombine.high %v3540, %v3540
        %v3549 = vcombine.high %v3547, %v3547
        %3550 = vrot.lane.b32.xlu0 %v3540, 90
        %v3551 = vpop.permute.xlu0 %3550
        %3552 = vrot.lane.b32.xlu0 %v3548, 90
        %v3553 = vpop.permute.xlu0 %3552
        %3554 = vrot.lane.b32.xlu0 %v3547, 90
        %v3555 = vpop.permute.xlu0 %3554
        %3556 = vrot.lane.b32.xlu0 %v3549, 90
        %v3557 = vpop.permute.xlu0 %3556
        %vm3558 = vcmask 736256
        %v3559 = vsel %vm3558, %v3551, %v3553
        %v3560 = vsel %vm3558, %v3553, %v3555
        %v3561 = vsel %vm3558, %v3555, %v3557
        %v3563 = vsel %vm3200, %v3530, 0
        %v3566 = vsel %vm3204, %v3559, 0
        %v3569 = vsel %vm3204, %v3560, 0
        %v3572 = vsel %vm3204, %v3561, 0
        %3574 = vmatprep.subr.bf16.mxu0 %v3569
        %3575 = vmatpush1.bf16.msra.mxu0 %v3566
        %3576 = vmatprep.subr.bf16.mxu0 0
        %3577 = vmatpush1.bf16.msra.mxu0 0
        %3578 = vmatprep.subr.bf16.mxu0 0
        %3579 = vmatpush1.bf16.msra.mxu0 0
        %3580 = vmatprep.subr.bf16.mxu0 0
        %3581 = vmatpush1.bf16.msra.mxu0 0
        %3582 = vmatprep.subr.bf16.mxu0 0
        %3583 = vmatpush1.bf16.msra.mxu0 0
        %3584 = vmatprep.subr.bf16.mxu0 0
        %3585 = vmatpush1.bf16.msra.mxu0 0
        %3586 = vmatprep.subr.bf16.mxu0 0
        %3587 = vmatpush1.bf16.msra.mxu0 0
        %3588 = vmatprep.subr.bf16.mxu0 0
        %3589 = vmatpush1.bf16.msra.mxu0 0
        %3590 = vmatprep.subr.bf16.mxu0 0
        %3591 = vmatpush1.bf16.msra.mxu0 0
        %3592 = vmatprep.subr.bf16.mxu0 0
        %3593 = vmatpush1.bf16.msra.mxu0 0
        %3594 = vmatprep.subr.bf16.mxu0 0
        %3595 = vmatpush1.bf16.msra.mxu0 0
        %3596 = vmatprep.subr.bf16.mxu0 0
        %3597 = vmatpush1.bf16.msra.mxu0 0
        %3598 = vmatprep.subr.bf16.mxu0 0
        %3599 = vmatpush1.bf16.msra.mxu0 0
        %3600 = vmatprep.subr.bf16.mxu0 0
        %3601 = vmatpush1.bf16.msra.mxu0 0
        %3602 = vmatprep.subr.bf16.mxu0 0
        %3603 = vmatpush1.bf16.msra.mxu0 0
        %3604 = vmatprep.subr.bf16.mxu0 0
        %3605 = vmatpush1.bf16.msra.mxu0 0
        %3606 = vmatprep.mubr.bf16.mxu0 0
        %3607 = vmatmul.mubr.bf16.gmra.mrb[0].mxu0 %v3563
        %v3608 = vpop.f32.mrb[0].mxu0
        %v3609 = vadd.f32 0.0, %v3608
        %v3610 = vpop.f32.mrb[0].mxu0
        %v3611 = vadd.f32 0.0, %v3610
        %v3612 = vpop.f32.mrb[0].mxu0
        %v3613 = vpop.f32.mrb[0].mxu0
        %3614 = vdwg.mxu0
        %3615 = vmatprep.subr.bf16.mxu0 0
        %3616 = vmatpush1.bf16.msra.mxu0 %v3572
        %3617 = vmatprep.subr.bf16.mxu0 0
        %3618 = vmatpush1.bf16.msra.mxu0 0
        %3619 = vmatprep.subr.bf16.mxu0 0
        %3620 = vmatpush1.bf16.msra.mxu0 0
        %3621 = vmatprep.subr.bf16.mxu0 0
        %3622 = vmatpush1.bf16.msra.mxu0 0
        %3623 = vmatprep.subr.bf16.mxu0 0
        %3624 = vmatpush1.bf16.msra.mxu0 0
        %3625 = vmatprep.subr.bf16.mxu0 0
        %3626 = vmatpush1.bf16.msra.mxu0 0
        %3627 = vmatprep.subr.bf16.mxu0 0
        %3628 = vmatpush1.bf16.msra.mxu0 0
        %3629 = vmatprep.subr.bf16.mxu0 0
        %3630 = vmatpush1.bf16.msra.mxu0 0
        %3631 = vmatprep.subr.bf16.mxu0 0
        %3632 = vmatpush1.bf16.msra.mxu0 0
        %3633 = vmatprep.subr.bf16.mxu0 0
        %3634 = vmatpush1.bf16.msra.mxu0 0
        %3635 = vmatprep.subr.bf16.mxu0 0
        %3636 = vmatpush1.bf16.msra.mxu0 0
        %3637 = vmatprep.subr.bf16.mxu0 0
        %3638 = vmatpush1.bf16.msra.mxu0 0
        %3639 = vmatprep.subr.bf16.mxu0 0
        %3640 = vmatpush1.bf16.msra.mxu0 0
        %3641 = vmatprep.subr.bf16.mxu0 0
        %3642 = vmatpush1.bf16.msra.mxu0 0
        %3643 = vmatprep.subr.bf16.mxu0 0
        %3644 = vmatpush1.bf16.msra.mxu0 0
        %3645 = vmatprep.subr.bf16.mxu0 0
        %3646 = vmatpush1.bf16.msra.mxu0 0
        %3647 = vmatprep.mubr.bf16.mxu0 0
        %3648 = vmatmul.mubr.bf16.gmra.mrb[0].mxu0 %v3563
        %v3649 = vpop.f32.mrb[0].mxu0
        %v3650 = vadd.f32 0.0, %v3649
        %v3651 = vpop.f32.mrb[0].mxu0
        %v3652 = vpop.f32.mrb[0].mxu0
        %v3653 = vpop.f32.mrb[0].mxu0
        %3654 = vdwg.mxu0
        %v3655 = vadd.f32 %v3526, %v3609
        %v3656 = vadd.f32 %v3527, %v3611
        %v3657 = vadd.f32 %v3528, %v3650
        %v3658 = vpack.c.bf16 %v3655, %v3655
        %v3659 = vpack.c.bf16 %v3656, %v3656
        %v3660 = vpack.c.bf16 %v3657, %v3657
        %v3664 = vcombine.low %v3658, %v3659
        %v3666 = vunpack.c.l.s4 1966171168
        %v3667 = vunpack.c.0.s8 %v3666
        %v3668 = vlaneseq
        %v3669 = vshrl.u32 %v3668, 7
        %v3670 = vsub.s32 %v3667, %v3669
        %v3671 = vrot.slane %v3664, %v3670
        %v3673 = vunpack.c.l.s4 1966171168
        %v3674 = vunpack.c.0.s8 %v3673
        %v3675 = vlaneseq
        %v3676 = vshrl.u32 %v3675, 7
        %v3677 = vsub.s32 %v3674, %v3676
        %v3678 = vrot.slane %v3660, %v3677
        %v3679 = vcombine.low %v3671, %v3678
        %v3681 = vunpack.c.l.s4 1966171168
        %v3682 = vunpack.c.0.s8 %v3681
        %v3683 = vlaneseq
        %v3684 = vshrl.u32 %v3683, 7
        %v3685 = vsub.s32 %v3682, %v3684
        %v3686 = vrot.slane %v3679, %v3685
        %3688 = vst [vmem:[%s280] sm:$0x7] %v3686
        %v3690 = vlaneseq
        %v3691 = vshrl.u32 %v3690, 7
        %v3692 = vsub.s32 0, %v3691
        %v3693 = vrot.slane %v293, %v3692
        %v3694 = vlaneseq
        %v3695 = vshrl.u32 %v3694, 7
        %v3696 = vsub.s32 1, %v3695
        %v3697 = vrot.slane %v293, %v3696
        %v3698 = vlaneseq
        %v3699 = vshrl.u32 %v3698, 7
        %v3700 = vsub.s32 2, %v3699
        %v3701 = vrot.slane %v293, %v3700
        %v3705 = vmul.f32 %v3655, %v3693
        %v3706 = vmul.f32 %v3656, %v3697
        %v3707 = vmul.f32 %v3657, %v3701
        %v3708 = vsel %vm3204, %v3705, 0.0
        %v3709 = vsel %vm3204, %v3706, 0.0
        %v3710 = vadd.f32 %v3708, %v3709
        %v3711 = vsel %vm3204, %v3707, 0.0
        %v3712 = vadd.f32 %v3710, %v3711
        %3713 = vadd.xlane.f32.xlu0 %v3712
        %v3714 = vpop.xlane.xlu0 %3713
        %vm3715 = vcmask 1024
        %3716 = vst.msk [vmem:[%s291] sm:$0x3] %vm3715, %v3714
        %v3717 = vmul.f32 %v3705, %v3655
        %v3718 = vmul.f32 %v3706, %v3656
        %v3719 = vmul.f32 %v3707, %v3657
        %v3720 = vsel %vm3204, %v3717, 0.0
        %v3721 = vsel %vm3204, %v3718, 0.0
        %v3722 = vadd.f32 %v3720, %v3721
        %v3723 = vsel %vm3204, %v3719, 0.0
        %v3724 = vadd.f32 %v3722, %v3723
        %3725 = vadd.xlane.f32.xlu0 %v3724
        %v3726 = vpop.xlane.xlu0 %3725
        %vm3727 = vcmask 9224
        %3728 = vst.msk [vmem:[%s291] sm:$0x3] %vm3727, %v3726
      $region48: #{upconv_forward.1} parent=31 // pred_fallthru
        _
      %p3729 = scmp.lt.s32.totalorder %s21, 1
      %s3730 = scalar_select %p3729, %s21, 1
      %p3731 = scmp.lt.s32.totalorder %s23, 3
      %s3732 = scalar_select %p3731, %s23, 3
      %p3733 = scmp.lt.s32.totalorder %s22, 0
      %s3734 = scalar_select %p3733, %s22, 0
      %s3735 = smul.addr %s3734, 3
      %s3736 = smul.addr %s3732, 3
      %s3737 = sadd.s32 %s3735, %s3736
      %s3738 = smul.addr %s3730, 12
      %s3739 = sadd.s32 %s3737, %s3738
      %s3740 = scalar_lea.vmem %s3, %s3739
      %p3741 = scmp.lt.s32.totalorder %s21, 1
      %s3742 = scalar_select %p3741, %s21, 1
      %p3743 = scmp.lt.s32.totalorder %s23, 3
      %s3744 = scalar_select %p3743, %s23, 3
      %p3745 = scmp.lt.s32.totalorder %s22, 0
      %s3746 = scalar_select %p3745, %s22, 0
      %s3747 = sadd.s32 %s3746, %s3744
      %s3748 = smul.addr %s3742, 4
      %s3749 = sadd.s32 %s3747, %s3748
      %s3750 = smul.addr %s3749, 2
      %s3751 = scalar_lea.vmem %s4, %s3750
      // Predicated region
      $region49: #{upconv_forward.1} parent=31 // pred_check
        %p3752 = pneg %p132
      $region50: #{upconv_forward.1} parent=31 // pred_check_branch
        %3754 = sbr.rel (%p3752) target = $region52
      $region51: #{upconv_forward.1} parent=31 // pred_region
        _
      $region52: #{upconv_forward.1} parent=31 // pred_fallthru
        _
      // Predicated region
      $region53: #{upconv_forward.1} parent=31 // pred_check
        %p3755 = pneg %p162
      $region54: #{upconv_forward.1} parent=31 // pred_check_branch
        %3757 = sbr.rel (%p3755) target = $region56
      $region55: #{upconv_forward.1} parent=31 // pred_region
        _
      $region56: #{upconv_forward.1} parent=31 // pred_fallthru
        _
    $region32: #{upconv_forward.1} parent=5 // pred_fallthru
      _
    %p3758 = scmp.le.s32.totalorder 2, %s11
    // Predicated region
    $region57: #{upconv_forward.1} parent=5 // pred_check
      %p3759 = pneg %p3758
    $region58: #{upconv_forward.1} parent=5 // pred_check_branch
      %3761 = sbr.rel (%p3759) target = $region60
    $region59: #{upconv_forward.1} parent=5 // pred_region
      %s3762 = ssub.s32 %s11, 2
      // Predicated region
      $region61: #{upconv_forward.1} parent=59 // pred_check
        %p3763 = pneg %p138
      $region62: #{upconv_forward.1} parent=59 // pred_check_branch
        %3765 = sbr.rel (%p3763) target = $region64
      $region63: #{upconv_forward.1} parent=59 // pred_region
        %p3766 = scmp.lt.s32.totalorder %s24, 1
        %s3767 = scalar_select %p3766, %s24, 1
        %p3768 = scmp.lt.s32.totalorder %s26, 3
        %s3769 = scalar_select %p3768, %s26, 3
        %p3770 = scmp.lt.s32.totalorder %s25, 0
        %s3771 = scalar_select %p3770, %s25, 0
        %s3772 = smul.addr %s3771, 3
        %s3773 = smul.addr %s3769, 3
        %s3774 = sadd.s32 %s3772, %s3773
        %s3775 = smul.addr %s3767, 12
        %s3776 = sadd.s32 %s3774, %s3775
        %s3777 = scalar_lea.vmem %s3, %s3776
      $region64: #{upconv_forward.1} parent=59 // pred_fallthru
        _
      // Predicated region
      $region65: #{upconv_forward.1} parent=59 // pred_check
        %p3778 = pneg %p168
      $region66: #{upconv_forward.1} parent=59 // pred_check_branch
        %3780 = sbr.rel (%p3778) target = $region68
      $region67: #{upconv_forward.1} parent=59 // pred_region
        %p3781 = scmp.lt.s32.totalorder %s24, 1
        %s3782 = scalar_select %p3781, %s24, 1
        %p3783 = scmp.lt.s32.totalorder %s26, 3
        %s3784 = scalar_select %p3783, %s26, 3
        %p3785 = scmp.lt.s32.totalorder %s25, 0
        %s3786 = scalar_select %p3785, %s25, 0
        %s3787 = sadd.s32 %s3786, %s3784
        %s3788 = smul.addr %s3782, 4
        %s3789 = sadd.s32 %s3787, %s3788
        %s3790 = smul.addr %s3789, 2
        %s3791 = scalar_lea.vmem %s4, %s3790
      $region68: #{upconv_forward.1} parent=59 // pred_fallthru
        _
    $region60: #{upconv_forward.1} parent=5 // pred_fallthru
      _
  $region6: #{upconv_forward.1} parent=0 // loop_footer
    %s15 = sadd.s32 1, %s11
  $region7: #{upconv_forward.1} parent=0 // loop_footer_branch
    %10 = sbr.rel target = $region3
  $region8: #{upconv_forward.1} parent=0 // loop_exit
    _

</llo_original>
